<compile_context>
chip_gen: v7x
topology: tpu7x:2x2x1
jax: 0.10.0
libtpu: 0.0.40
codegen_flags: <defaults>
</compile_context>

<pallas_src>
import jax
import jax.numpy as jnp
from jax import lax
from jax.experimental import pallas as pl
from jax.experimental.pallas import tpu as pltpu

_LANE = 128


def _pick_tile(m, candidates, min_steps=1):
    """Largest tile in `candidates` that divides m with at least min_steps steps."""
    for t in candidates:
        if m % t == 0 and m // t >= min_steps:
            return t
    return m


def _vmem_limit_bytes():
    """Half of physical VMEM, clamped to [32, 96] MiB (re-derived per chip:
    64 MiB physical on v7x -> 32 MiB limit, 128 MiB on v5e/v6e -> 64 MiB)."""
    phys = 64 * 1024 * 1024
    try:
        info_fn = getattr(pltpu, "get_tpu_info", None)
        if info_fn is not None:
            phys = int(getattr(info_fn(), "vmem_capacity_bytes", phys) or phys)
    except Exception:
        pass
    return int(min(96 * 1024 * 1024, max(32 * 1024 * 1024, phys // 2)))


# ---------------------------------------------------------------------------
# Kernel 1: fused conv3x3 (im2col matmul) + bias + relu + L2-norm + 1x1 head
#           packed into lane 127 of a single lane-dense f32 output slab.
# ---------------------------------------------------------------------------
def _conv_head_kernel(p_ref, w1_ref, b1_ref, w2_ref, b2_ref, out_ref):
    # bf16 operands on the MXU, f32 accumulation.
    acc = jnp.dot(p_ref[...], w1_ref[...], preferred_element_type=jnp.float32)
    feat = jnp.maximum(acc + b1_ref[...], 0.0)                       # raw (tm, 128)
    # Fused 1x1 head on the *raw* features.  w2/b2 are non-zero only in lane
    # 127, so `head` is exactly zero on all other lanes.
    head = jnp.dot(feat.astype(jnp.bfloat16), w2_ref[...],
                   preferred_element_type=jnp.float32) + b2_ref[...]
    # Fused L2 normalization (padded lanes are zero, so the 128-lane norm
    # equals the C_feat norm); lane 127 of `fn` is exactly zero.
    fn = feat * lax.rsqrt(jnp.sum(feat * feat, axis=-1, keepdims=True) + 1e-12)
    # Pack: lanes [0, C_feat) = normalized features, lane 127 = head scalar.
    out_ref[...] = fn + head


def im2col_3x3(x_nhwc):
    n, h, w, c = x_nhwc.shape
    xp = jnp.pad(x_nhwc, ((0, 0), (1, 1), (1, 1), (0, 0)))
    cols = [xp[:, dh:dh + h, dw:dw + w, :] for dh in range(3) for dw in range(3)]
    return jnp.concatenate(cols, axis=-1)        # (n, h, w, 9c)


def model_forward_pallas(params, x_nchw):
    n, c, h, w = x_nchw.shape
    cf = params["w1"].shape[1]
    assert cf <= _LANE - 1, "lane 127 is reserved for the fused 1x1 head"
    m = n * h * w
    assert m % 8 == 0
    k = 9 * c

    x = jnp.transpose(x_nchw, (0, 2, 3, 1)).astype(jnp.bfloat16)   # NHWC, bf16 first
    # TODO(synk): build the 3x3 patches inside the kernel from a haloed input
    # block (manual DMA / 9 shifted matmuls) instead of this HBM im2col.
    patches = im2col_3x3(x).reshape(m, k)

    # Zero-pad channel dims to 128 lanes so the single kernel output is lane-dense.
    w1p = jnp.zeros((k, _LANE), jnp.bfloat16).at[:, :cf].set(
        params["w1"].astype(jnp.bfloat16))
    b1p = jnp.zeros((1, _LANE), jnp.float32).at[:, :cf].set(
        params["b1"].reshape(1, cf))
    w2p = jnp.zeros((_LANE, _LANE), jnp.bfloat16).at[:cf, _LANE - 1].set(
        params["w2"].reshape(cf).astype(jnp.bfloat16))
    b2p = jnp.zeros((1, _LANE), jnp.float32).at[0, _LANE - 1].set(
        params["b2"].reshape(()))

    tm = _pick_tile(m, (2048, 1024, 512, 256, 128, 64, 32, 16, 8), min_steps=2)

    slab = pl.pallas_call(
        _conv_head_kernel,
        out_shape=jax.ShapeDtypeStruct((m, _LANE), jnp.float32),
        grid=(m // tm,),
        in_specs=[
            pl.BlockSpec((tm, k), lambda i: (i, 0)),          # patches tile
            pl.BlockSpec((k, _LANE), lambda i: (0, 0)),       # w1 (resident)
            pl.BlockSpec((1, _LANE), lambda i: (0, 0)),       # b1
            pl.BlockSpec((_LANE, _LANE), lambda i: (0, 0)),   # w2 (resident)
            pl.BlockSpec((1, _LANE), lambda i: (0, 0)),       # b2
        ],
        out_specs=pl.BlockSpec((tm, _LANE), lambda i: (i, 0)),
        compiler_params=pltpu.CompilerParams(
            dimension_semantics=("parallel",),
            vmem_limit_bytes=_vmem_limit_bytes()),
    )(patches, w1p, b1p, w2p, b2p)

    out_flat = slab[:, _LANE - 1:]                                    # (m, 1) head
    fn128 = jnp.where(jnp.arange(_LANE) == _LANE - 1, 0.0, slab)      # zero head lane
    return fn128, out_flat


# ---------------------------------------------------------------------------
# Kernel 2 (forward): tiled pairwise ordinal-entropy partial sums
# ---------------------------------------------------------------------------
def _oe_tiles(m, vmem_limit):
    tq = _pick_tile(m, (2048, 1024, 512, 256, 128, 64, 32, 16, 8), min_steps=2)
    tk = _pick_tile(m, (512, 256, 128), min_steps=1)
    # Bound the handful of live f32 (tq, tk) intermediates per step by VMEM.
    while 8 * tq * tk * 4 > vmem_limit // 2 and tq >= 16 and m % (tq // 2) == 0:
        tq //= 2
    return tq, tk


def _oe_sums_kernel(fq_ref, fkt_ref, yq_ref, yk_ref, s1_ref, s2_ref):
    ki = pl.program_id(1)

    @pl.when(ki == 0)
    def _init():
        s1_ref[...] = jnp.zeros_like(s1_ref)
        s2_ref[...] = jnp.zeros_like(s2_ref)

    # Features are already L2-normalized (kernel 1 epilogue): d^2 = 2 - 2<f_i, f_j>.
    g = jnp.dot(fq_ref[...], fkt_ref[...], preferred_element_type=jnp.float32)
    d = jnp.sqrt(jnp.maximum(2.0 - 2.0 * g, 0.0))
    w = jnp.abs(yq_ref[...] - yk_ref[...])                            # (tq, tk)

    # Elementwise VPU fold into the resident (8, tk) accumulators: no per-step
    # cross-lane reduce and no diagonal masking (w is exactly 0 on the diagonal
    # and the diagonal contribution to S2 is removed O(M) in the wrapper).
    tq, tk = d.shape
    s1_ref[...] += jnp.sum((w * d).reshape(tq // 8, 8, tk), axis=0)
    s2_ref[...] += jnp.sum(d.reshape(tq // 8, 8, tk), axis=0)


def _oe_sums_pallas(fb, fbt, y_col, y_row):
    m, cp = fb.shape
    vlim = _vmem_limit_bytes()
    tq, tk = _oe_tiles(m, vlim)
    nq, nk = m // tq, m // tk

    s1, s2 = pl.pallas_call(
        _oe_sums_kernel,
        out_shape=(jax.ShapeDtypeStruct((nq * 8, tk), jnp.float32),
                   jax.ShapeDtypeStruct((nq * 8, tk), jnp.float32)),
        grid=(nq, nk),
        in_specs=[
            pl.BlockSpec((tq, cp), lambda qi, ki: (qi, 0)),   # f rows (bf16)
            pl.BlockSpec((cp, tk), lambda qi, ki: (0, ki)),   # f cols (bf16, pre-transposed)
            pl.BlockSpec((tq, 1), lambda qi, ki: (qi, 0)),
            pl.BlockSpec((1, tk), lambda qi, ki: (0, ki)),
        ],
        out_specs=(
            pl.BlockSpec((8, tk), lambda qi, ki: (qi, 0)),    # per-qi partials
            pl.BlockSpec((8, tk), lambda qi, ki: (qi, 0)),
        ),
        compiler_params=pltpu.CompilerParams(
            dimension_semantics=("parallel", "arbitrary"),
            vmem_limit_bytes=vlim),
    )(fb, fbt, y_col, y_row)
    return jnp.sum(s1), jnp.sum(s2)


# ---------------------------------------------------------------------------
# Kernel 3 (backward): tiled dL/dfn for the pairwise term (no M x M in HBM)
# ---------------------------------------------------------------------------
def _oe_grad_kernel(fq_ref, fkt_ref, fk_ref, yq_ref, yk_ref, wmin_ref, dq_ref):
    qi = pl.program_id(0)
    ki = pl.program_id(1)

    @pl.when(ki == 0)
    def _init():
        dq_ref[...] = jnp.zeros_like(dq_ref)

    g = jnp.dot(fq_ref[...], fkt_ref[...], preferred_element_type=jnp.float32)
    z = 2.0 - 2.0 * g
    w = jnp.abs(yq_ref[...] - yk_ref[...])

    tq, tk = z.shape
    rows = qi * tq + lax.broadcasted_iota(jnp.int32, (tq, tk), 0)
    cols = ki * tk + lax.broadcasted_iota(jnp.int32, (tq, tk), 1)
    valid = jnp.logical_and(z > 1e-12, rows != cols)
    b = jnp.where(valid,
                  (w - wmin_ref[0, 0]) * lax.rsqrt(jnp.maximum(z, 1e-12)),
                  0.0)
    dq_ref[...] += jnp.dot(b, fk_ref[...].astype(jnp.float32),
                           preferred_element_type=jnp.float32)


def _oe_grad_pallas(fb, fbt, y_col, y_row, wmin):
    m, cp = fb.shape
    vlim = _vmem_limit_bytes()
    tq, tk = _oe_tiles(m, vlim)
    nq, nk = m // tq, m // tk
    wmin_arr = jnp.asarray(wmin, jnp.float32).reshape(1, 1)

    return pl.pallas_call(
        _oe_grad_kernel,
        out_shape=jax.ShapeDtypeStruct((m, cp), jnp.float32),
        grid=(nq, nk),
        in_specs=[
            pl.BlockSpec((tq, cp), lambda qi, ki: (qi, 0)),           # fq
            pl.BlockSpec((cp, tk), lambda qi, ki: (0, ki)),           # f^T
            pl.BlockSpec((tk, cp), lambda qi, ki: (ki, 0)),           # fk rows
            pl.BlockSpec((tq, 1), lambda qi, ki: (qi, 0)),
            pl.BlockSpec((1, tk), lambda qi, ki: (0, ki)),
            pl.BlockSpec(memory_space=pltpu.MemorySpace.SMEM),        # wmin scalar
        ],
        out_specs=pl.BlockSpec((tq, cp), lambda qi, ki: (qi, 0)),
        compiler_params=pltpu.CompilerParams(
            dimension_semantics=("parallel", "arbitrary"),
            vmem_limit_bytes=vlim),
    )(fb, fbt, fb, y_col, y_row, wmin_arr)


# ---------------------------------------------------------------------------
# Ordinal-entropy loss with custom_vjp (forward = kernel 2, backward = kernel 3)
# ---------------------------------------------------------------------------
def _oe_forward(fn128, y):
    m = fn128.shape[0]
    assert m >= 2, "ordinal entropy needs at least 2 samples"
    fb = fn128.astype(jnp.bfloat16)       # bf16 MXU operands / repeated reads are bf16
    fbt = fb.T                            # single XLA transpose (lane-friendly RHS)
    yv = y.reshape(m).astype(jnp.float32)
    y_col = yv.reshape(m, 1)
    y_row = yv.reshape(1, m)

    # Ordinal-weight normalization constants via an O(M log M) sort prepass.
    ys = jnp.sort(yv)
    wmax = ys[-1] - ys[0]
    wmin = jnp.min(ys[1:] - ys[:-1])
    denom = wmax - wmin + 1e-12           # NOTE: degenerate (all-equal y) blows up, same as reference
    cnt = m * (m - 1) / 2.0

    s1, s2 = _oe_sums_pallas(fb, fbt, y_col, y_row)
    # Remove the diagonal contribution to S2 (O(M), bf16 rounding makes
    # <f_i, f_i> != 1 exactly); |y_i - y_i| = 0 so S1 needs no correction.
    diag = jnp.sum(jnp.sqrt(jnp.maximum(
        2.0 - 2.0 * jnp.sum(jnp.square(fb.astype(jnp.float32)), axis=-1), 0.0)))
    # sum_{i<j} (w - wmin) * d  ==  0.5 * (S1 - wmin * (S2 - diag))
    loss = -(s1 - wmin * (s2 - diag)) / (2.0 * denom * cnt)
    scale = (1.0 / (denom * cnt)).astype(jnp.float32)
    res = (fb, fbt, y_col, y_row, y, wmin, scale)
    return loss, res


@jax.custom_vjp
def ordinal_entropy(fn128, y):
    """-mean over i<j of (|y_i-y_j| - wmin)/(wmax - wmin + eps) * ||f_i - f_j||
    for L2-normalized features fn128 (padded lanes are zero)."""
    loss, _ = _oe_forward(fn128, y)
    return loss


def _oe_vjp_fwd(fn128, y):
    return _oe_forward(fn128, y)


def _oe_vjp_bwd(res, g):
    fb, fbt, y_col, y_row, y, wmin, scale = res
    # dL/dfn_i = (1/(cnt*denom)) * sum_{j != i} (w_ij - wmin)/d_ij * fn_j
    raw = _oe_grad_pallas(fb, fbt, y_col, y_row, wmin)        # (m, 128) f32
    d_fn = (g * scale) * raw
    d_y = jnp.zeros_like(y)               # y is detached upstream (outputs.detach())
    return d_fn, d_y


ordinal_entropy.defvjp(_oe_vjp_fwd, _oe_vjp_bwd)


# ---------------------------------------------------------------------------
# Model forward with custom_vjp: Pallas forward, plain-JAX mirror only for the
# (cheap) conv/normalization backward chain.
# ---------------------------------------------------------------------------
def _mirror_forward(params, x_nchw):
    n, c, h, w = x_nchw.shape
    cf = params["w1"].shape[1]
    x = jnp.transpose(x_nchw, (0, 2, 3, 1)).astype(jnp.bfloat16)
    patches = im2col_3x3(x).reshape(n * h * w, 9 * c)
    feat = jnp.maximum(
        jnp.dot(patches, params["w1"].astype(jnp.bfloat16),
                preferred_element_type=jnp.float32) + params["b1"], 0.0)
    fn = feat * lax.rsqrt(jnp.sum(feat * feat, axis=-1, keepdims=True) + 1e-12)
    fn128 = jnp.pad(fn, ((0, 0), (0, _LANE - cf)))
    out_flat = jnp.dot(feat.astype(jnp.bfloat16), params["w2"].astype(jnp.bfloat16),
                       preferred_element_type=jnp.float32) + params["b2"]
    return fn128, out_flat


@jax.custom_vjp
def model_apply(params, x_nchw):
    """model(x) -> (L2-normalized features padded to 128 lanes, flat head outputs)."""
    return model_forward_pallas(params, x_nchw)


def _model_vjp_fwd(params, x_nchw):
    return model_forward_pallas(params, x_nchw), (params, x_nchw)


def _model_vjp_bwd(res, cots):
    params, x_nchw = res
    _, vjp_fn = jax.vjp(lambda p: _mirror_forward(p, x_nchw), params)
    (d_params,) = vjp_fn(cots)
    return d_params, jnp.zeros_like(x_nchw)


model_apply.defvjp(_model_vjp_fwd, _model_vjp_bwd)


# ---------------------------------------------------------------------------
# Parameters
# ---------------------------------------------------------------------------
def init_params(key, c_in, c_feat):
    k1, k2 = jax.random.split(key)
    return {
        "w1": jax.random.normal(k1, (9 * c_in, c_feat), jnp.float32)
        * (1.0 / jnp.sqrt(9.0 * c_in)),
        "b1": jnp.zeros((c_feat,), jnp.float32),
        "w2": jax.random.normal(k2, (c_feat, 1), jnp.float32)
        * (1.0 / jnp.sqrt(float(c_feat))),
        "b2": jnp.zeros((1,), jnp.float32),
    }


# ---------------------------------------------------------------------------
# Dense reference of the pairwise loss (used only for a small sanity check)
# ---------------------------------------------------------------------------
def _oe_reference(fn128, y):
    m = fn128.shape[0]
    f = fn128.astype(jnp.bfloat16).astype(jnp.float32)
    g = f @ f.T
    d = jnp.sqrt(jnp.maximum(2.0 - 2.0 * g, 0.0))
    yv = y.reshape(m, 1).astype(jnp.float32)
    w = jnp.abs(yv - yv.T)
    row = lax.broadcasted_iota(jnp.int32, (m, m), 0)
    col = lax.broadcasted_iota(jnp.int32, (m, m), 1)
    mask = col > row
    wmin = jnp.min(jnp.where(mask, w, jnp.inf))
    wmax = jnp.max(jnp.where(mask, w, -jnp.inf))
    wn = (w - wmin) / (wmax - wmin + 1e-12)
    return -jnp.sum(jnp.where(mask, wn * d, 0.0)) / (m * (m - 1) / 2.0)


# ---------------------------------------------------------------------------
# OER wrapper (entropy-minimization-style test-time adaptation)
# ---------------------------------------------------------------------------
class OER:
    """Adapts the model by the ordinal-entropy loss on every forward."""

    def __init__(self, params, lr=1e-3, steps=1, episodic=False, verbose=False):
        assert steps > 0, "tent requires >= 1 step(s) to forward and update"
        self.params = params
        self.lr = lr
        self.steps = steps
        self.episodic = episodic
        self.verbose = verbose
        self.model_state = jax.tree_util.tree_map(jnp.copy, params)
        self.last_loss = None
        # Single jitted adapt step: Pallas forward + Pallas loss + Pallas
        # backward (via custom_vjp) + plain SGD.
        self._step = jax.jit(self._adapt_step)

    def _adapt_step(self, params, x):
        n, _, h, w = x.shape

        def loss_fn(p):
            fn128, out_flat = model_apply(p, x)
            gt = lax.stop_gradient(out_flat)          # outputs.detach()
            return ordinal_entropy(fn128, gt), out_flat

        (loss, out_flat), grads = jax.value_and_grad(loss_fn, has_aux=True)(params)
        outputs = out_flat.reshape(n, h, w, 1).transpose(0, 3, 1, 2)   # NCHW
        new_params = jax.tree_util.tree_map(lambda p, g: p - self.lr * g,
                                            params, grads)
        return outputs, loss, new_params

    def forward(self, x):
        if self.episodic:
            self.reset()
        outputs = None
        for _ in range(self.steps):
            outputs, loss, self.params = self._step(self.params, x)
            self.last_loss = loss
            if self.verbose:
                # NOTE: forces a device->host sync every step; off by default.
                print('loss: ', float(loss))
        return outputs

    __call__ = forward

    def reset(self):
        if self.model_state is None:
            raise Exception('cannot reset without saved model/optimizer state')
        self.params = jax.tree_util.tree_map(jnp.copy, self.model_state)


# ---------------------------------------------------------------------------
if __name__ == "__main__":
    key = jax.random.PRNGKey(0)
    kx, kp = jax.random.split(key)

    N, C_IN, H, W = 2, 4, 16, 16
    C_FEAT = 32

    x = jax.random.normal(kx, (N, C_IN, H, W), jnp.float32)   # NCHW like PyTorch
    params = init_params(kp, C_IN, C_FEAT)

    # TODO(synk): the pairwise ordinal-entropy term is O((N*H*W)^2); for
    # realistic image sizes the reference subsamples/pools features first.
    oer = OER(params, lr=1e-3, steps=1, episodic=False, verbose=False)
    outputs = oer(x)                                          # (N, 1, H, W)
    jax.block_until_ready(outputs)

    assert outputs.shape == (N, 1, H, W)
    assert bool(jnp.all(jnp.isfinite(outputs)))
    assert oer.last_loss is not None and bool(jnp.isfinite(oer.last_loss))
    assert all(bool(jnp.all(jnp.isfinite(v)))
               for v in jax.tree_util.tree_leaves(oer.params))

    # Tiled Pallas loss vs. dense reference on the same (pre-update) features.
    fn128, out_flat = model_forward_pallas(params, x)
    pal = float(ordinal_entropy(fn128, out_flat))
    ref = float(_oe_reference(fn128, out_flat))
    assert abs(pal - ref) <= 5e-2 * (1.0 + abs(ref)), (pal, ref)

    print('loss: ', float(jax.device_get(oer.last_loss)))     # single sync, after the step
    print("KERNEL_OK")
</pallas_src>

<mosaic_0001>
module attributes {stable_mosaic.version = 11 : i64} {
  func.func @_conv_head_kernel(%arg0: i32, %arg1: memref<256x36xbf16, #tpu.memory_space<vmem>>, %arg2: memref<36x128xbf16, #tpu.memory_space<vmem>>, %arg3: memref<1x128xf32, #tpu.memory_space<vmem>>, %arg4: memref<128x128xbf16, #tpu.memory_space<vmem>>, %arg5: memref<1x128xf32, #tpu.memory_space<vmem>>, %arg6: memref<256x128xf32, #tpu.memory_space<vmem>>) attributes {dimension_semantics = [#tpu.dimension_semantics<parallel>], iteration_bounds = array<i64: 2>, scalar_prefetch = 0 : i64, scratch_operands = 0 : i64, tpu.core_type = #tpu.core_type<tc>, window_params = [{transform_indices = @transform_0, window_bounds = array<i64: 256, 36>}, {pipeline_mode = #tpu.pipeline_mode<synchronous>, transform_indices = @transform_1, window_bounds = array<i64: 36, 128>}, {pipeline_mode = #tpu.pipeline_mode<synchronous>, transform_indices = @transform_2, window_bounds = array<i64: 1, 128>}, {pipeline_mode = #tpu.pipeline_mode<synchronous>, transform_indices = @transform_3, window_bounds = array<i64: 128, 128>}, {pipeline_mode = #tpu.pipeline_mode<synchronous>, transform_indices = @transform_4, window_bounds = array<i64: 1, 128>}, {transform_indices = @transform_5, window_bounds = array<i64: 256, 128>}]} {
    %c0 = arith.constant 0 : index
    %c0_0 = arith.constant 0 : index
    %0 = vector.load %arg1[%c0, %c0_0] : memref<256x36xbf16, #tpu.memory_space<vmem>>, vector<256x36xbf16>
    %c0_1 = arith.constant 0 : index
    %c0_2 = arith.constant 0 : index
    %1 = vector.load %arg2[%c0_1, %c0_2] : memref<36x128xbf16, #tpu.memory_space<vmem>>, vector<36x128xbf16>
    %cst = arith.constant dense<0.000000e+00> : vector<256x128xf32>
    %2 = tpu.matmul %0, %1, %cst {dimension_numbers = #tpu.dot_dimension_numbers<[1], [0], [0], [1], [0, 0, 1, 1], [], []>} : vector<256x36xbf16>, vector<36x128xbf16>, vector<256x128xf32> -> vector<256x128xf32>
    %c0_3 = arith.constant 0 : index
    %c0_4 = arith.constant 0 : index
    %3 = vector.load %arg3[%c0_3, %c0_4] : memref<1x128xf32, #tpu.memory_space<vmem>>, vector<1x128xf32>
    %4 = vector.broadcast %3 : vector<1x128xf32> to vector<256x128xf32>
    %5 = arith.addf %2, %4 : vector<256x128xf32>
    %cst_5 = arith.constant 0.000000e+00 : f32
    %6 = vector.broadcast %cst_5 : f32 to vector<256x128xf32>
    %7 = arith.maximumf %5, %6 : vector<256x128xf32>
    %8 = arith.truncf %7 : vector<256x128xf32> to vector<256x128xbf16>
    %c0_6 = arith.constant 0 : index
    %c0_7 = arith.constant 0 : index
    %9 = vector.load %arg4[%c0_6, %c0_7] : memref<128x128xbf16, #tpu.memory_space<vmem>>, vector<128x128xbf16>
    %cst_8 = arith.constant dense<0.000000e+00> : vector<256x128xf32>
    %10 = tpu.matmul %8, %9, %cst_8 {dimension_numbers = #tpu.dot_dimension_numbers<[1], [0], [0], [1], [0, 0, 1, 1], [], []>} : vector<256x128xbf16>, vector<128x128xbf16>, vector<256x128xf32> -> vector<256x128xf32>
    %c0_9 = arith.constant 0 : index
    %c0_10 = arith.constant 0 : index
    %11 = vector.load %arg5[%c0_9, %c0_10] : memref<1x128xf32, #tpu.memory_space<vmem>>, vector<1x128xf32>
    %12 = vector.broadcast %11 : vector<1x128xf32> to vector<256x128xf32>
    %13 = arith.addf %10, %12 : vector<256x128xf32>
    %14 = arith.mulf %7, %7 : vector<256x128xf32>
    %cst_11 = arith.constant dense<0.000000e+00> : vector<256xf32>
    %15 = vector.multi_reduction <add>, %14, %cst_11 [1] : vector<256x128xf32> to vector<256xf32>
    %16 = vector.shape_cast %15 : vector<256xf32> to vector<256x1xf32>
    %cst_12 = arith.constant 9.99999996E-13 : f32
    %17 = vector.broadcast %cst_12 : f32 to vector<256x1xf32>
    %18 = arith.addf %16, %17 : vector<256x1xf32>
    %19 = math.rsqrt %18 : vector<256x1xf32>
    %20 = vector.broadcast %19 : vector<256x1xf32> to vector<256x128xf32>
    %21 = arith.mulf %7, %20 : vector<256x128xf32>
    %22 = arith.addf %21, %13 : vector<256x128xf32>
    %c0_13 = arith.constant 0 : index
    %c0_14 = arith.constant 0 : index
    %23 = vector.load %arg6[%c0_13, %c0_14] : memref<256x128xf32, #tpu.memory_space<vmem>>, vector<256x128xf32>
    tpu.vector_store %arg6[%c0_13, %c0_14], %22 {strides = array<i32>} : memref<256x128xf32, #tpu.memory_space<vmem>>, vector<256x128xf32>,
    return
  }
  func.func @transform_0(%arg0: i32) -> (i32, i32) {
    %c0_i32 = arith.constant 0 : i32
    %c0_i32_0 = arith.constant 0 : i32
    return %arg0, %c0_i32 : i32, i32
  }
  func.func @transform_1(%arg0: i32) -> (i32, i32) {
    %c0_i32 = arith.constant 0 : i32
    %c0_i32_0 = arith.constant 0 : i32
    %c0_i32_1 = arith.constant 0 : i32
    return %c0_i32, %c0_i32_0 : i32, i32
  }
  func.func @transform_2(%arg0: i32) -> (i32, i32) {
    %c0_i32 = arith.constant 0 : i32
    %c0_i32_0 = arith.constant 0 : i32
    %c0_i32_1 = arith.constant 0 : i32
    return %c0_i32, %c0_i32_0 : i32, i32
  }
  func.func @transform_3(%arg0: i32) -> (i32, i32) {
    %c0_i32 = arith.constant 0 : i32
    %c0_i32_0 = arith.constant 0 : i32
    %c0_i32_1 = arith.constant 0 : i32
    return %c0_i32, %c0_i32_0 : i32, i32
  }
  func.func @transform_4(%arg0: i32) -> (i32, i32) {
    %c0_i32 = arith.constant 0 : i32
    %c0_i32_0 = arith.constant 0 : i32
    %c0_i32_1 = arith.constant 0 : i32
    return %c0_i32, %c0_i32_0 : i32, i32
  }
  func.func @transform_5(%arg0: i32) -> (i32, i32) {
    %c0_i32 = arith.constant 0 : i32
    %c0_i32_0 = arith.constant 0 : i32
    return %arg0, %c0_i32 : i32, i32
  }
}

module attributes {stable_mosaic.version = 11 : i64} {
  func.func @_oe_sums_kernel(%arg0: i32, %arg1: i32, %arg2: memref<256x128xbf16, #tpu.memory_space<vmem>>, %arg3: memref<128x512xbf16, #tpu.memory_space<vmem>>, %arg4: memref<256x1xf32, #tpu.memory_space<vmem>>, %arg5: memref<1x512xf32, #tpu.memory_space<vmem>>, %arg6: memref<8x512xf32, #tpu.memory_space<vmem>>, %arg7: memref<8x512xf32, #tpu.memory_space<vmem>>) attributes {dimension_semantics = [#tpu.dimension_semantics<parallel>, #tpu.dimension_semantics<arbitrary>], iteration_bounds = array<i64: 2, 1>, scalar_prefetch = 0 : i64, scratch_operands = 0 : i64, tpu.core_type = #tpu.core_type<tc>, window_params = [{transform_indices = @transform_0, window_bounds = array<i64: 256, 128>}, {transform_indices = @transform_1, window_bounds = array<i64: 128, 512>}, {transform_indices = @transform_2, window_bounds = array<i64: 256, 1>}, {transform_indices = @transform_3, window_bounds = array<i64: 1, 512>}, {transform_indices = @transform_4, window_bounds = array<i64: 8, 512>}, {transform_indices = @transform_5, window_bounds = array<i64: 8, 512>}]} {
    %c0_i32 = arith.constant 0 : i32
    %0 = arith.cmpi eq, %arg1, %c0_i32 : i32
    %1 = arith.extui %0 : i1 to i32
    %c0_i32_0 = arith.constant 0 : i32
    %2 = arith.cmpi ne, %1, %c0_i32_0 : i32
    scf.if %2 {
      %cst_21 = arith.constant 0.000000e+00 : f32
      %30 = vector.broadcast %cst_21 : f32 to vector<8x512xf32>
      %c0_22 = arith.constant 0 : index
      %c0_23 = arith.constant 0 : index
      %31 = vector.load %arg6[%c0_22, %c0_23] : memref<8x512xf32, #tpu.memory_space<vmem>>, vector<8x512xf32>
      tpu.vector_store %arg6[%c0_22, %c0_23], %30 {strides = array<i32>} : memref<8x512xf32, #tpu.memory_space<vmem>>, vector<8x512xf32>,
      %cst_24 = arith.constant 0.000000e+00 : f32
      %32 = vector.broadcast %cst_24 : f32 to vector<8x512xf32>
      %c0_25 = arith.constant 0 : index
      %c0_26 = arith.constant 0 : index
      %33 = vector.load %arg7[%c0_25, %c0_26] : memref<8x512xf32, #tpu.memory_space<vmem>>, vector<8x512xf32>
      tpu.vector_store %arg7[%c0_25, %c0_26], %32 {strides = array<i32>} : memref<8x512xf32, #tpu.memory_space<vmem>>, vector<8x512xf32>,
    } else {
    }
    %c0 = arith.constant 0 : index
    %c0_1 = arith.constant 0 : index
    %3 = vector.load %arg2[%c0, %c0_1] : memref<256x128xbf16, #tpu.memory_space<vmem>>, vector<256x128xbf16>
    %c0_2 = arith.constant 0 : index
    %c0_3 = arith.constant 0 : index
    %4 = vector.load %arg3[%c0_2, %c0_3] : memref<128x512xbf16, #tpu.memory_space<vmem>>, vector<128x512xbf16>
    %cst = arith.constant dense<0.000000e+00> : vector<256x512xf32>
    %5 = tpu.matmul %3, %4, %cst {dimension_numbers = #tpu.dot_dimension_numbers<[1], [0], [0], [1], [0, 0, 1, 1], [], []>} : vector<256x128xbf16>, vector<128x512xbf16>, vector<256x512xf32> -> vector<256x512xf32>
    %cst_4 = arith.constant 2.000000e+00 : f32
    %6 = vector.broadcast %cst_4 : f32 to vector<256x512xf32>
    %7 = arith.mulf %6, %5 : vector<256x512xf32>
    %cst_5 = arith.constant 2.000000e+00 : f32
    %8 = vector.broadcast %cst_5 : f32 to vector<256x512xf32>
    %9 = arith.subf %8, %7 : vector<256x512xf32>
    %cst_6 = arith.constant 0.000000e+00 : f32
    %10 = vector.broadcast %cst_6 : f32 to vector<256x512xf32>
    %11 = arith.maximumf %9, %10 : vector<256x512xf32>
    %12 = math.sqrt %11 : vector<256x512xf32>
    %c0_7 = arith.constant 0 : index
    %c0_8 = arith.constant 0 : index
    %13 = vector.load %arg4[%c0_7, %c0_8] : memref<256x1xf32, #tpu.memory_space<vmem>>, vector<256x1xf32>
    %c0_9 = arith.constant 0 : index
    %c0_10 = arith.constant 0 : index
    %14 = vector.load %arg5[%c0_9, %c0_10] : memref<1x512xf32, #tpu.memory_space<vmem>>, vector<1x512xf32>
    %15 = vector.broadcast %13 : vector<256x1xf32> to vector<256x512xf32>
    %16 = vector.broadcast %14 : vector<1x512xf32> to vector<256x512xf32>
    %17 = arith.subf %15, %16 : vector<256x512xf32>
    %18 = math.absf %17 : vector<256x512xf32>
    %c0_11 = arith.constant 0 : index
    %c0_12 = arith.constant 0 : index
    %19 = vector.load %arg6[%c0_11, %c0_12] : memref<8x512xf32, #tpu.memory_space<vmem>>, vector<8x512xf32>
    %20 = arith.mulf %18, %12 : vector<256x512xf32>
    %21 = vector.shape_cast %20 : vector<256x512xf32> to vector<32x8x512xf32>
    %cst_13 = arith.constant dense<0.000000e+00> : vector<8x512xf32>
    %22 = vector.multi_reduction <add>, %21, %cst_13 [0] : vector<32x8x512xf32> to vector<8x512xf32>
    %23 = arith.addf %19, %22 : vector<8x512xf32>
    %c0_14 = arith.constant 0 : index
    %c0_15 = arith.constant 0 : index
    %24 = vector.load %arg6[%c0_14, %c0_15] : memref<8x512xf32, #tpu.memory_space<vmem>>, vector<8x512xf32>
    tpu.vector_store %arg6[%c0_14, %c0_15], %23 {strides = array<i32>} : memref<8x512xf32, #tpu.memory_space<vmem>>, vector<8x512xf32>,
    %c0_16 = arith.constant 0 : index
    %c0_17 = arith.constant 0 : index
    %25 = vector.load %arg7[%c0_16, %c0_17] : memref<8x512xf32, #tpu.memory_space<vmem>>, vector<8x512xf32>
    %26 = vector.shape_cast %12 : vector<256x512xf32> to vector<32x8x512xf32>
    %cst_18 = arith.constant dense<0.000000e+00> : vector<8x512xf32>
    %27 = vector.multi_reduction <add>, %26, %cst_18 [0] : vector<32x8x512xf32> to vector<8x512xf32>
    %28 = arith.addf %25, %27 : vector<8x512xf32>
    %c0_19 = arith.constant 0 : index
    %c0_20 = arith.constant 0 : index
    %29 = vector.load %arg7[%c0_19, %c0_20] : memref<8x512xf32, #tpu.memory_space<vmem>>, vector<8x512xf32>
    tpu.vector_store %arg7[%c0_19, %c0_20], %28 {strides = array<i32>} : memref<8x512xf32, #tpu.memory_space<vmem>>, vector<8x512xf32>,
    return
  }
  func.func @transform_0(%arg0: i32, %arg1: i32) -> (i32, i32) {
    %c0_i32 = arith.constant 0 : i32
    %c0_i32_0 = arith.constant 0 : i32
    return %arg0, %c0_i32 : i32, i32
  }
  func.func @transform_1(%arg0: i32, %arg1: i32) -> (i32, i32) {
    %c0_i32 = arith.constant 0 : i32
    %c0_i32_0 = arith.constant 0 : i32
    return %c0_i32, %arg1 : i32, i32
  }
  func.func @transform_2(%arg0: i32, %arg1: i32) -> (i32, i32) {
    %c0_i32 = arith.constant 0 : i32
    %c0_i32_0 = arith.constant 0 : i32
    return %arg0, %c0_i32 : i32, i32
  }
  func.func @transform_3(%arg0: i32, %arg1: i32) -> (i32, i32) {
    %c0_i32 = arith.constant 0 : i32
    %c0_i32_0 = arith.constant 0 : i32
    return %c0_i32, %arg1 : i32, i32
  }
  func.func @transform_4(%arg0: i32, %arg1: i32) -> (i32, i32) {
    %c0_i32 = arith.constant 0 : i32
    %c0_i32_0 = arith.constant 0 : i32
    return %arg0, %c0_i32 : i32, i32
  }
  func.func @transform_5(%arg0: i32, %arg1: i32) -> (i32, i32) {
    %c0_i32 = arith.constant 0 : i32
    %c0_i32_0 = arith.constant 0 : i32
    return %arg0, %c0_i32 : i32, i32
  }
}

module attributes {stable_mosaic.version = 11 : i64} {
  func.func @_oe_grad_kernel(%arg0: i32, %arg1: i32, %arg2: memref<256x128xbf16, #tpu.memory_space<vmem>>, %arg3: memref<128x512xbf16, #tpu.memory_space<vmem>>, %arg4: memref<512x128xbf16, #tpu.memory_space<vmem>>, %arg5: memref<256x1xf32, #tpu.memory_space<vmem>>, %arg6: memref<1x512xf32, #tpu.memory_space<vmem>>, %arg7: memref<1x1xf32, #tpu.memory_space<smem>>, %arg8: memref<256x128xf32, #tpu.memory_space<vmem>>) attributes {dimension_semantics = [#tpu.dimension_semantics<parallel>, #tpu.dimension_semantics<arbitrary>], iteration_bounds = array<i64: 2, 1>, scalar_prefetch = 0 : i64, scratch_operands = 0 : i64, tpu.core_type = #tpu.core_type<tc>, window_params = [{transform_indices = @transform_0, window_bounds = array<i64: 256, 128>}, {transform_indices = @transform_1, window_bounds = array<i64: 128, 512>}, {transform_indices = @transform_2, window_bounds = array<i64: 512, 128>}, {transform_indices = @transform_3, window_bounds = array<i64: 256, 1>}, {transform_indices = @transform_4, window_bounds = array<i64: 1, 512>}, {transform_indices = @transform_5, window_bounds = array<i64: 1, 1>}, {transform_indices = @transform_6, window_bounds = array<i64: 256, 128>}]} {
    %c0_i32 = arith.constant 0 : i32
    %0 = arith.cmpi eq, %arg1, %c0_i32 : i32
    %1 = arith.extui %0 : i1 to i32
    %c0_i32_0 = arith.constant 0 : i32
    %2 = arith.cmpi ne, %1, %c0_i32_0 : i32
    scf.if %2 {
      %cst_22 = arith.constant 0.000000e+00 : f32
      %43 = vector.broadcast %cst_22 : f32 to vector<256x128xf32>
      %c0_23 = arith.constant 0 : index
      %c0_24 = arith.constant 0 : index
      %44 = vector.load %arg8[%c0_23, %c0_24] : memref<256x128xf32, #tpu.memory_space<vmem>>, vector<256x128xf32>
      tpu.vector_store %arg8[%c0_23, %c0_24], %43 {strides = array<i32>} : memref<256x128xf32, #tpu.memory_space<vmem>>, vector<256x128xf32>,
    } else {
    }
    %c0 = arith.constant 0 : index
    %c0_1 = arith.constant 0 : index
    %3 = vector.load %arg2[%c0, %c0_1] : memref<256x128xbf16, #tpu.memory_space<vmem>>, vector<256x128xbf16>
    %c0_2 = arith.constant 0 : index
    %c0_3 = arith.constant 0 : index
    %4 = vector.load %arg3[%c0_2, %c0_3] : memref<128x512xbf16, #tpu.memory_space<vmem>>, vector<128x512xbf16>
    %cst = arith.constant dense<0.000000e+00> : vector<256x512xf32>
    %5 = tpu.matmul %3, %4, %cst {dimension_numbers = #tpu.dot_dimension_numbers<[1], [0], [0], [1], [0, 0, 1, 1], [], []>} : vector<256x128xbf16>, vector<128x512xbf16>, vector<256x512xf32> -> vector<256x512xf32>
    %cst_4 = arith.constant 2.000000e+00 : f32
    %6 = vector.broadcast %cst_4 : f32 to vector<256x512xf32>
    %7 = arith.mulf %6, %5 : vector<256x512xf32>
    %cst_5 = arith.constant 2.000000e+00 : f32
    %8 = vector.broadcast %cst_5 : f32 to vector<256x512xf32>
    %9 = arith.subf %8, %7 : vector<256x512xf32>
    %c0_6 = arith.constant 0 : index
    %c0_7 = arith.constant 0 : index
    %10 = vector.load %arg5[%c0_6, %c0_7] : memref<256x1xf32, #tpu.memory_space<vmem>>, vector<256x1xf32>
    %c0_8 = arith.constant 0 : index
    %c0_9 = arith.constant 0 : index
    %11 = vector.load %arg6[%c0_8, %c0_9] : memref<1x512xf32, #tpu.memory_space<vmem>>, vector<1x512xf32>
    %12 = vector.broadcast %10 : vector<256x1xf32> to vector<256x512xf32>
    %13 = vector.broadcast %11 : vector<1x512xf32> to vector<256x512xf32>
    %14 = arith.subf %12, %13 : vector<256x512xf32>
    %15 = math.absf %14 : vector<256x512xf32>
    %c256_i32 = arith.constant 256 : i32
    %16 = arith.muli %arg0, %c256_i32 : i32
    %17 = tpu.iota {dimensions = array<i32: 0>} : vector<256x512xi32>
    %18 = vector.broadcast %16 : i32 to vector<256x512xi32>
    %19 = arith.addi %18, %17 : vector<256x512xi32>
    %c512_i32 = arith.constant 512 : i32
    %20 = arith.muli %arg1, %c512_i32 : i32
    %21 = tpu.iota {dimensions = array<i32: 1>} : vector<256x512xi32>
    %22 = vector.broadcast %20 : i32 to vector<256x512xi32>
    %23 = arith.addi %22, %21 : vector<256x512xi32>
    %cst_10 = arith.constant 9.99999996E-13 : f32
    %24 = vector.broadcast %cst_10 : f32 to vector<256x512xf32>
    %25 = arith.cmpf ogt, %9, %24 : vector<256x512xf32>
    %26 = arith.cmpi ne, %19, %23 : vector<256x512xi32>
    %27 = arith.andi %25, %26 : vector<256x512xi1>
    %c0_11 = arith.constant 0 : index
    %c0_12 = arith.constant 0 : index
    %28 = memref.load %arg7[%c0_11, %c0_12] : memref<1x1xf32, #tpu.memory_space<smem>>
    %29 = vector.broadcast %28 : f32 to vector<256x512xf32>
    %30 = arith.subf %15, %29 : vector<256x512xf32>
    %cst_13 = arith.constant 9.99999996E-13 : f32
    %31 = vector.broadcast %cst_13 : f32 to vector<256x512xf32>
    %32 = arith.maximumf %9, %31 : vector<256x512xf32>
    %33 = math.rsqrt %32 : vector<256x512xf32>
    %34 = arith.mulf %30, %33 : vector<256x512xf32>
    %cst_14 = arith.constant 0.000000e+00 : f32
    %35 = vector.broadcast %cst_14 : f32 to vector<256x512xf32>
    %36 = arith.select %27, %34, %35 : vector<256x512xi1>, vector<256x512xf32>
    %c0_15 = arith.constant 0 : index
    %c0_16 = arith.constant 0 : index
    %37 = vector.load %arg8[%c0_15, %c0_16] : memref<256x128xf32, #tpu.memory_space<vmem>>, vector<256x128xf32>
    %c0_17 = arith.constant 0 : index
    %c0_18 = arith.constant 0 : index
    %38 = vector.load %arg4[%c0_17, %c0_18] : memref<512x128xbf16, #tpu.memory_space<vmem>>, vector<512x128xbf16>
    %39 = arith.extf %38 : vector<512x128xbf16> to vector<512x128xf32>
    %cst_19 = arith.constant dense<0.000000e+00> : vector<256x128xf32>
    %40 = tpu.matmul %36, %39, %cst_19 {dimension_numbers = #tpu.dot_dimension_numbers<[1], [0], [0], [1], [0, 0, 1, 1], [], []>} : vector<256x512xf32>, vector<512x128xf32>, vector<256x128xf32> -> vector<256x128xf32>
    %41 = arith.addf %37, %40 : vector<256x128xf32>
    %c0_20 = arith.constant 0 : index
    %c0_21 = arith.constant 0 : index
    %42 = vector.load %arg8[%c0_20, %c0_21] : memref<256x128xf32, #tpu.memory_space<vmem>>, vector<256x128xf32>
    tpu.vector_store %arg8[%c0_20, %c0_21], %41 {strides = array<i32>} : memref<256x128xf32, #tpu.memory_space<vmem>>, vector<256x128xf32>,
    return
  }
  func.func @transform_0(%arg0: i32, %arg1: i32) -> (i32, i32) {
    %c0_i32 = arith.constant 0 : i32
    %c0_i32_0 = arith.constant 0 : i32
    return %arg0, %c0_i32 : i32, i32
  }
  func.func @transform_1(%arg0: i32, %arg1: i32) -> (i32, i32) {
    %c0_i32 = arith.constant 0 : i32
    %c0_i32_0 = arith.constant 0 : i32
    return %c0_i32, %arg1 : i32, i32
  }
  func.func @transform_2(%arg0: i32, %arg1: i32) -> (i32, i32) {
    %c0_i32 = arith.constant 0 : i32
    %c0_i32_0 = arith.constant 0 : i32
    return %arg1, %c0_i32 : i32, i32
  }
  func.func @transform_3(%arg0: i32, %arg1: i32) -> (i32, i32) {
    %c0_i32 = arith.constant 0 : i32
    %c0_i32_0 = arith.constant 0 : i32
    return %arg0, %c0_i32 : i32, i32
  }
  func.func @transform_4(%arg0: i32, %arg1: i32) -> (i32, i32) {
    %c0_i32 = arith.constant 0 : i32
    %c0_i32_0 = arith.constant 0 : i32
    return %c0_i32, %arg1 : i32, i32
  }
  func.func @transform_5(%arg0: i32, %arg1: i32) -> (i32, i32) {
    %c0_i32 = arith.constant 0 : i32
    %c0_i32_0 = arith.constant 0 : i32
    %c0_i32_1 = arith.constant 0 : i32
    return %c0_i32, %c0_i32_0 : i32, i32
  }
  func.func @transform_6(%arg0: i32, %arg1: i32) -> (i32, i32) {
    %c0_i32 = arith.constant 0 : i32
    %c0_i32_0 = arith.constant 0 : i32
    return %arg0, %c0_i32 : i32, i32
  }
}

</mosaic_0001>

<llo_original>
// kernel: jvp__.2
$region0: #{jvp__.2}
  #allocation0 [shape = 'u32[]', space=smem, size = 0x4, offset = 0x4, fixed_abs, tag = 'smem constant byte address 0x4 - core index']
  #allocation1 [shape = 'u32[144,128]{1,0:T(1,128)}', space=vmem, size = 0x12000, scoped, tag = 'internal scratch']
  %s0 = inlined_call_operand.vmem [shape: bf16[512,36], index: 0, kind: input, shape index: {}]
  %s1 = inlined_call_operand.vmem [shape: bf16[36,128], index: 1, kind: input, shape index: {}]
  %s2 = inlined_call_operand.vmem [shape: f32[1,128], index: 2, kind: input, shape index: {}]
  %s3 = inlined_call_operand.vmem [shape: bf16[128,128], index: 3, kind: input, shape index: {}]
  %s4 = inlined_call_operand.vmem [shape: f32[1,128], index: 4, kind: input, shape index: {}]
  %s5 = inlined_call_operand.vmem [shape: f32[512,128], index: 5, kind: output, shape index: {}]
  %s6 = sld [smem:[#allocation0]]
  $region53: #{jvp__.2} parent=0
    _
  %s8 = ssub.s32 1, %s6
  %s9 = scalar_select 0, %s8, %s6
  loop: start=0, step=1, limit=4
  $region2: #{jvp__.2} parent=0 // loop_pre_header
    _
  $region3: #{jvp__.2} parent=0 // loop_header
    %s11 = sphi 0, %s15
    %p12 = scmp.ge.s32.totalorder %s11, 4
    %s21 = sphi 0, %s23
    %s24 = sphi 0, %s21
    %s25 = sphi 0, %s24
    %s41 = sphi 0, %s25
    %s45 = sphi 0, %s45
    %s47 = sphi 0, %s45
    %s48 = sphi 0, %s47
    %s62 = sphi 0, %s48
    %s66 = sphi 0, %s66
    %s68 = sphi 0, %s66
    %s69 = sphi 0, %s68
    %s83 = sphi 0, %s69
    %s87 = sphi 0, %s87
    %s89 = sphi 0, %s87
    %s90 = sphi 0, %s89
    %s104 = sphi 0, %s90
    %s108 = sphi 0, %s108
    %s110 = sphi 0, %s108
    %s111 = sphi 0, %s110
    %s125 = sphi 0, %s111
    %s131 = sphi 0, %s133
    %s134 = sphi 0, %s131
    %s135 = sphi 0, %s134
    %s151 = sphi 0, %s135
  $region4: #{jvp__.2} parent=0 // loop_header_branch
    %14 = sbr.rel (%p12) target = $region8
  $region5: #{jvp__.2} parent=0 // loop_body
    %s16 = ssub.s32 %s11, 1
    %s17 = ssub.s32 %s11, 2
    %s18 = sadd.s32 %s11, 1
    %s19 = ssub.s32 %s11, %s18
    %p20 = scmp.eq.s32.totalorder %s19, 0
    %s22 = sadd.s32 %s21, 1
    %s23 = scalar_select %p20, %s21, %s22
    %p26 = pneg %p20
    %p27 = scmp.eq.s32.totalorder %s11, 1
    %p28 = por %p26, %p27
    %p29 = scmp.ne.s32.totalorder %s21, %s24
    %p30 = scmp.eq.s32.totalorder %s11, 0
    %p31 = por %p29, %p30
    %p32 = scmp.ne.s32.totalorder %s21, %s24
    %p33 = scmp.eq.s32.totalorder %s16, 1
    %p34 = por %p32, %p33
    %p35 = scmp.ne.s32.totalorder %s24, %s25
    %p36 = scmp.eq.s32.totalorder %s16, 0
    %p37 = por %p35, %p36
    %p38 = scmp.ne.s32.totalorder %s24, %s25
    %p39 = scmp.eq.s32.totalorder %s17, 1
    %p40 = por %p38, %p39
    %p42 = scmp.ne.s32.totalorder %s25, %s41
    %p43 = scmp.eq.s32.totalorder %s17, 0
    %p44 = por %p42, %p43
    %s46 = sadd.s32 %s45, 1
    %p49 = scmp.eq.s32.totalorder %s11, 1
    %p50 = scmp.ne.s32.totalorder %s45, %s47
    %p51 = scmp.eq.s32.totalorder %s11, 0
    %p52 = por %p50, %p51
    %p53 = scmp.ne.s32.totalorder %s45, %s47
    %p54 = scmp.eq.s32.totalorder %s16, 1
    %p55 = por %p53, %p54
    %p56 = scmp.ne.s32.totalorder %s47, %s48
    %p57 = scmp.eq.s32.totalorder %s16, 0
    %p58 = por %p56, %p57
    %p59 = scmp.ne.s32.totalorder %s47, %s48
    %p60 = scmp.eq.s32.totalorder %s17, 1
    %p61 = por %p59, %p60
    %p63 = scmp.ne.s32.totalorder %s48, %s62
    %p64 = scmp.eq.s32.totalorder %s17, 0
    %p65 = por %p63, %p64
    %s67 = sadd.s32 %s66, 1
    %p70 = scmp.eq.s32.totalorder %s11, 1
    %p71 = scmp.ne.s32.totalorder %s66, %s68
    %p72 = scmp.eq.s32.totalorder %s11, 0
    %p73 = por %p71, %p72
    %p74 = scmp.ne.s32.totalorder %s66, %s68
    %p75 = scmp.eq.s32.totalorder %s16, 1
    %p76 = por %p74, %p75
    %p77 = scmp.ne.s32.totalorder %s68, %s69
    %p78 = scmp.eq.s32.totalorder %s16, 0
    %p79 = por %p77, %p78
    %p80 = scmp.ne.s32.totalorder %s68, %s69
    %p81 = scmp.eq.s32.totalorder %s17, 1
    %p82 = por %p80, %p81
    %p84 = scmp.ne.s32.totalorder %s69, %s83
    %p85 = scmp.eq.s32.totalorder %s17, 0
    %p86 = por %p84, %p85
    %s88 = sadd.s32 %s87, 1
    %p91 = scmp.eq.s32.totalorder %s11, 1
    %p92 = scmp.ne.s32.totalorder %s87, %s89
    %p93 = scmp.eq.s32.totalorder %s11, 0
    %p94 = por %p92, %p93
    %p95 = scmp.ne.s32.totalorder %s87, %s89
    %p96 = scmp.eq.s32.totalorder %s16, 1
    %p97 = por %p95, %p96
    %p98 = scmp.ne.s32.totalorder %s89, %s90
    %p99 = scmp.eq.s32.totalorder %s16, 0
    %p100 = por %p98, %p99
    %p101 = scmp.ne.s32.totalorder %s89, %s90
    %p102 = scmp.eq.s32.totalorder %s17, 1
    %p103 = por %p101, %p102
    %p105 = scmp.ne.s32.totalorder %s90, %s104
    %p106 = scmp.eq.s32.totalorder %s17, 0
    %p107 = por %p105, %p106
    %s109 = sadd.s32 %s108, 1
    %p112 = scmp.eq.s32.totalorder %s11, 1
    %p113 = scmp.ne.s32.totalorder %s108, %s110
    %p114 = scmp.eq.s32.totalorder %s11, 0
    %p115 = por %p113, %p114
    %p116 = scmp.ne.s32.totalorder %s108, %s110
    %p117 = scmp.eq.s32.totalorder %s16, 1
    %p118 = por %p116, %p117
    %p119 = scmp.ne.s32.totalorder %s110, %s111
    %p120 = scmp.eq.s32.totalorder %s16, 0
    %p121 = por %p119, %p120
    %p122 = scmp.ne.s32.totalorder %s110, %s111
    %p123 = scmp.eq.s32.totalorder %s17, 1
    %p124 = por %p122, %p123
    %p126 = scmp.ne.s32.totalorder %s111, %s125
    %p127 = scmp.eq.s32.totalorder %s17, 0
    %p128 = por %p126, %p127
    %s129 = ssub.s32 %s11, %s18
    %p130 = scmp.eq.s32.totalorder %s129, 0
    %s132 = sadd.s32 %s131, 1
    %s133 = scalar_select %p130, %s131, %s132
    %p136 = pneg %p130
    %p137 = scmp.eq.s32.totalorder %s11, 1
    %p138 = por %p136, %p137
    %p139 = scmp.ne.s32.totalorder %s131, %s134
    %p140 = scmp.eq.s32.totalorder %s11, 0
    %p141 = por %p139, %p140
    %p142 = scmp.ne.s32.totalorder %s131, %s134
    %p143 = scmp.eq.s32.totalorder %s16, 1
    %p144 = por %p142, %p143
    %p145 = scmp.ne.s32.totalorder %s134, %s135
    %p146 = scmp.eq.s32.totalorder %s16, 0
    %p147 = por %p145, %p146
    %p148 = scmp.ne.s32.totalorder %s134, %s135
    %p149 = scmp.eq.s32.totalorder %s17, 1
    %p150 = por %p148, %p149
    %p152 = scmp.ne.s32.totalorder %s135, %s151
    %p153 = scmp.eq.s32.totalorder %s17, 0
    %p154 = por %p152, %p153
    %p155 = scmp.le.s32.totalorder 1, %s11
    %p156 = scmp.lt.s32.totalorder %s11, 3
    %p157 = pnand %p155, %p156
    %p158 = pneg %p157
    // Predicated region
    $region9: #{jvp__.2} parent=5 // pred_check
      _
    $region10: #{jvp__.2} parent=5 // pred_check_branch
      %160 = sbr.rel (%p157) target = $region12
    $region11: #{jvp__.2} parent=5 // pred_region
      %s161 = ssub.s32 %s11, 1
      // Predicated region
      $region13: #{jvp__.2} parent=11 // pred_check
        %p162 = pneg %p58
      $region14: #{jvp__.2} parent=11 // pred_check_branch
        %164 = sbr.rel (%p162) target = $region16
      $region15: #{jvp__.2} parent=11 // pred_region
        _
      $region16: #{jvp__.2} parent=11 // pred_fallthru
        _
      // Predicated region
      $region17: #{jvp__.2} parent=11 // pred_check
        %p165 = pneg %p79
      $region18: #{jvp__.2} parent=11 // pred_check_branch
        %167 = sbr.rel (%p165) target = $region20
      $region19: #{jvp__.2} parent=11 // pred_region
        _
      $region20: #{jvp__.2} parent=11 // pred_fallthru
        _
      // Predicated region
      $region21: #{jvp__.2} parent=11 // pred_check
        %p168 = pneg %p100
      $region22: #{jvp__.2} parent=11 // pred_check_branch
        %170 = sbr.rel (%p168) target = $region24
      $region23: #{jvp__.2} parent=11 // pred_region
        _
      $region24: #{jvp__.2} parent=11 // pred_fallthru
        _
      // Predicated region
      $region25: #{jvp__.2} parent=11 // pred_check
        %p171 = pneg %p121
      $region26: #{jvp__.2} parent=11 // pred_check_branch
        %173 = sbr.rel (%p171) target = $region28
      $region27: #{jvp__.2} parent=11 // pred_region
        _
      $region28: #{jvp__.2} parent=11 // pred_fallthru
        _
    $region12: #{jvp__.2} parent=5 // pred_fallthru
      _
    %p174 = scmp.lt.s32.totalorder %s11, 2
    // Predicated region
    $region29: #{jvp__.2} parent=5 // pred_check
      %p175 = pneg %p174
    $region30: #{jvp__.2} parent=5 // pred_check_branch
      %177 = sbr.rel (%p175) target = $region32
    $region31: #{jvp__.2} parent=5 // pred_region
      // Predicated region
      $region33: #{jvp__.2} parent=31 // pred_check
        %p178 = pneg %p31
      $region34: #{jvp__.2} parent=31 // pred_check_branch
        %180 = sbr.rel (%p178) target = $region36
      $region35: #{jvp__.2} parent=31 // pred_region
        %s181 = smul.u32 32, %s11
        %p182 = scmp.lt.s32.totalorder %s181, 63
        %s183 = scalar_select %p182, %s181, 63
        %s184 = smul.addr %s183, 4
        %s185 = scalar_lea.vmem %s0, %s184
        %s186 = smul.u32 32, %s11
      $region36: #{jvp__.2} parent=31 // pred_fallthru
        _
    $region32: #{jvp__.2} parent=5 // pred_fallthru
      _
    %p187 = scmp.le.s32.totalorder 1, %s11
    %p188 = scmp.lt.s32.totalorder %s11, 3
    %p189 = pnand %p187, %p188
    %p190 = pneg %p189
    // Predicated region
    $region37: #{jvp__.2} parent=5 // pred_check
      _
    $region38: #{jvp__.2} parent=5 // pred_check_branch
      %192 = sbr.rel (%p189) target = $region40
    $region39: #{jvp__.2} parent=5 // pred_region
      %s193 = ssub.s32 %s11, 1
      %s194 = smul.u32 32, %s16
      %p195 = scmp.lt.s32.totalorder %s194, 63
      %s196 = scalar_select %p195, %s194, 63
      %s197 = smul.addr %s196, 4
      %s198 = scalar_lea.vmem %s0, %s197
      %p199 = pneg %p37
      %p200 = pneg %p34
      %p201 = pneg %p58
      %p202 = pneg %p55
      %p203 = pneg %p79
      %p204 = pneg %p76
      %p205 = pneg %p100
      %p206 = pneg %p97
      %p207 = pneg %p121
      %p208 = pneg %p118
      %p209 = pneg %p147
      %p210 = pneg %p144
      %s211 = smul.u32 32, %s16
      %p212 = scmp.lt.s32.totalorder %s211, 63
      %s213 = scalar_select %p212, %s211, 63
      %s214 = smul.addr %s213, 8
      %s215 = scalar_lea.vmem %s5, %s214
      %s216 = smul.u32 32, %s16
      %p217 = scmp.lt.s32.totalorder %s216, 63
      %s218 = scalar_select %p217, %s216, 63
      %s219 = smul.addr %s218, 4
      %s220 = scalar_lea.vmem %s0, %s219
      %s221 = smul.u32 32, %s16
      %s222 = smul.u32 32, %s16
      %p223 = scmp.lt.s32.totalorder %s222, 63
      %s224 = scalar_select %p223, %s222, 63
      %s225 = smul.addr %s224, 8
      %s226 = scalar_lea.vmem %s5, %s225
      %s227 = smul.u32 32, %s16
      %v229 = vld [vmem:[%s220] sm:$0xf]
      %v230 = vld [vmem:[%s220 + $0x4] sm:$0xf]
      %v231 = vld [vmem:[%s220 + $0x8] sm:$0xf]
      %v232 = vld [vmem:[%s220 + $0xc] sm:$0xf]
      %v233 = vld [vmem:[%s220 + $0x10] sm:$0xf]
      %v234 = vld [vmem:[%s220 + $0x14] sm:$0xf]
      %v235 = vld [vmem:[%s220 + $0x18] sm:$0xf]
      %v236 = vld [vmem:[%s220 + $0x1c] sm:$0xf]
      %v237 = vld [vmem:[%s220 + $0x20] sm:$0xf]
      %v238 = vld [vmem:[%s220 + $0x24] sm:$0xf]
      %v239 = vld [vmem:[%s220 + $0x28] sm:$0xf]
      %v240 = vld [vmem:[%s220 + $0x2c] sm:$0xf]
      %v241 = vld [vmem:[%s220 + $0x30] sm:$0xf]
      %v242 = vld [vmem:[%s220 + $0x34] sm:$0xf]
      %v243 = vld [vmem:[%s220 + $0x38] sm:$0xf]
      %v244 = vld [vmem:[%s220 + $0x3c] sm:$0xf]
      %v245 = vld [vmem:[%s220 + $0x40] sm:$0xf]
      %v246 = vld [vmem:[%s220 + $0x44] sm:$0xf]
      %v247 = vld [vmem:[%s220 + $0x48] sm:$0xf]
      %v248 = vld [vmem:[%s220 + $0x4c] sm:$0xf]
      %v249 = vld [vmem:[%s220 + $0x50] sm:$0xf]
      %v250 = vld [vmem:[%s220 + $0x54] sm:$0xf]
      %v251 = vld [vmem:[%s220 + $0x58] sm:$0xf]
      %v252 = vld [vmem:[%s220 + $0x5c] sm:$0xf]
      %v253 = vld [vmem:[%s220 + $0x60] sm:$0xf]
      %v254 = vld [vmem:[%s220 + $0x64] sm:$0xf]
      %v255 = vld [vmem:[%s220 + $0x68] sm:$0xf]
      %v256 = vld [vmem:[%s220 + $0x6c] sm:$0xf]
      %v257 = vld [vmem:[%s220 + $0x70] sm:$0xf]
      %v258 = vld [vmem:[%s220 + $0x74] sm:$0xf]
      %v259 = vld [vmem:[%s220 + $0x78] sm:$0xf]
      %v260 = vld [vmem:[%s220 + $0x7c] sm:$0xf]
      %v261 = vld [vmem:[%s1] sm:$0xf]
      %v262 = vld [vmem:[%s1 + $0x4] sm:$0xf]
      %v263 = vld [vmem:[%s1 + $0x8] sm:$0xf]
      %v264 = vld [vmem:[%s1 + $0xc] sm:$0xf]
      %v265 = vld [vmem:[%s1 + $0x10] sm:$0x3]
      %v266 = vld [vmem:[%s2] sm:$0x1]
      %v268 = vlaneseq
      %v269 = vshrl.u32 %v268, 7
      %v270 = vsub.s32 0, %v269
      %v271 = vrot.slane %v266, %v270
      %v305 = vunpack.c.l.b16 %v229
      %v306 = vunpack.c.l.b16 %v230
      %v307 = vunpack.c.l.b16 %v231
      %v308 = vunpack.c.l.b16 %v232
      %v309 = vunpack.c.l.b16 %v233
      %v310 = vunpack.c.l.b16 %v234
      %v311 = vunpack.c.l.b16 %v235
      %v312 = vunpack.c.l.b16 %v236
      %v313 = vunpack.c.l.b16 %v237
      %v314 = vunpack.c.l.b16 %v238
      %v315 = vunpack.c.l.b16 %v239
      %v316 = vunpack.c.l.b16 %v240
      %v317 = vunpack.c.l.b16 %v241
      %v318 = vunpack.c.l.b16 %v242
      %v319 = vunpack.c.l.b16 %v243
      %v320 = vunpack.c.l.b16 %v244
      %v321 = vunpack.c.l.b16 %v245
      %v322 = vunpack.c.l.b16 %v246
      %v323 = vunpack.c.l.b16 %v247
      %v324 = vunpack.c.l.b16 %v248
      %v325 = vunpack.c.l.b16 %v249
      %v326 = vunpack.c.l.b16 %v250
      %v327 = vunpack.c.l.b16 %v251
      %v328 = vunpack.c.l.b16 %v252
      %v329 = vunpack.c.l.b16 %v253
      %v330 = vunpack.c.l.b16 %v254
      %v331 = vunpack.c.l.b16 %v255
      %v332 = vunpack.c.l.b16 %v256
      %v333 = vunpack.c.l.b16 %v257
      %v334 = vunpack.c.l.b16 %v258
      %v335 = vunpack.c.l.b16 %v259
      %v336 = vunpack.c.l.b16 %v260
      %v337 = vpack.c.b16 %v306, %v305
      %v338 = vpack.c.b16 %v308, %v307
      %v339 = vpack.c.b16 %v310, %v309
      %v340 = vpack.c.b16 %v312, %v311
      %v341 = vpack.c.b16 %v314, %v313
      %v342 = vpack.c.b16 %v316, %v315
      %v343 = vpack.c.b16 %v318, %v317
      %v344 = vpack.c.b16 %v320, %v319
      %v345 = vpack.c.b16 %v322, %v321
      %v346 = vpack.c.b16 %v324, %v323
      %v347 = vpack.c.b16 %v326, %v325
      %v348 = vpack.c.b16 %v328, %v327
      %v349 = vpack.c.b16 %v330, %v329
      %v350 = vpack.c.b16 %v332, %v331
      %v351 = vpack.c.b16 %v334, %v333
      %v352 = vpack.c.b16 %v336, %v335
      %v358 = vunpack.c.l.b16 %v261
      %v359 = vunpack.c.l.b16 %v262
      %v360 = vunpack.c.l.b16 %v263
      %v361 = vunpack.c.l.b16 %v264
      %v362 = vunpack.c.l.b16 %v265
      %v363 = vpack.c.b16 %v359, %v358
      %v364 = vpack.c.b16 %v361, %v360
      %v365 = vpack.c.b16 %v362, %v362
      %vm368 = vcmask 293888
      %v370 = vsel %vm368, %v337, 0
      %v373 = vsel %vm368, %v338, 0
      %v376 = vsel %vm368, %v339, 0
      %v379 = vsel %vm368, %v340, 0
      %v382 = vsel %vm368, %v341, 0
      %v385 = vsel %vm368, %v342, 0
      %v388 = vsel %vm368, %v343, 0
      %v391 = vsel %vm368, %v344, 0
      %v394 = vsel %vm368, %v345, 0
      %v397 = vsel %vm368, %v346, 0
      %v400 = vsel %vm368, %v347, 0
      %v403 = vsel %vm368, %v348, 0
      %v406 = vsel %vm368, %v349, 0
      %v409 = vsel %vm368, %v350, 0
      %v412 = vsel %vm368, %v351, 0
      %v415 = vsel %vm368, %v352, 0
      %vm417 = vcmask 1041408
      %v419 = vsel %vm417, %v365, 0
      %421 = vmatprep.subr.bf16.mxu0 0
      %422 = vmatpush1.bf16.msra.mxu0 %v363
      %423 = vmatprep.subr.bf16.mxu0 0
      %424 = vmatpush1.bf16.msra.mxu0 %v364
      %425 = vmatprep.subr.bf16.mxu0 0
      %426 = vmatpush1.bf16.msra.mxu0 %v419
      %427 = vmatprep.subr.bf16.mxu0 0
      %428 = vmatpush1.bf16.msra.mxu0 0
      %429 = vmatprep.subr.bf16.mxu0 0
      %430 = vmatpush1.bf16.msra.mxu0 0
      %431 = vmatprep.subr.bf16.mxu0 0
      %432 = vmatpush1.bf16.msra.mxu0 0
      %433 = vmatprep.subr.bf16.mxu0 0
      %434 = vmatpush1.bf16.msra.mxu0 0
      %435 = vmatprep.subr.bf16.mxu0 0
      %436 = vmatpush1.bf16.msra.mxu0 0
      %437 = vmatprep.subr.bf16.mxu0 0
      %438 = vmatpush1.bf16.msra.mxu0 0
      %439 = vmatprep.subr.bf16.mxu0 0
      %440 = vmatpush1.bf16.msra.mxu0 0
      %441 = vmatprep.subr.bf16.mxu0 0
      %442 = vmatpush1.bf16.msra.mxu0 0
      %443 = vmatprep.subr.bf16.mxu0 0
      %444 = vmatpush1.bf16.msra.mxu0 0
      %445 = vmatprep.subr.bf16.mxu0 0
      %446 = vmatpush1.bf16.msra.mxu0 0
      %447 = vmatprep.subr.bf16.mxu0 0
      %448 = vmatpush1.bf16.msra.mxu0 0
      %449 = vmatprep.subr.bf16.mxu0 0
      %450 = vmatpush1.bf16.msra.mxu0 0
      %451 = vmatprep.subr.bf16.mxu0 0
      %452 = vmatpush1.bf16.msra.mxu0 0
      %453 = vmatprep.mubr.bf16.mxu0 0
      %454 = vmatmul.mubr.bf16.gmra.mrb[0].mxu0 %v370
      %v455 = vpop.f32.mrb[0].mxu0
      %v456 = vadd.f32 %v271, %v455
      %v457 = vpop.f32.mrb[0].mxu0
      %v458 = vpop.f32.mrb[0].mxu0
      %v459 = vadd.f32 %v271, %v458
      %v460 = vpop.f32.mrb[0].mxu0
      %461 = vmatprep.mubr.bf16.mxu0 0
      %462 = vmatmul.mubr.bf16.gmra.mrb[0].mxu0 %v373
      %v463 = vpop.f32.mrb[0].mxu0
      %v464 = vadd.f32 %v271, %v463
      %v465 = vpop.f32.mrb[0].mxu0
      %v466 = vpop.f32.mrb[0].mxu0
      %v467 = vadd.f32 %v271, %v466
      %v468 = vpop.f32.mrb[0].mxu0
      %469 = vmatprep.mubr.bf16.mxu0 0
      %470 = vmatmul.mubr.bf16.gmra.mrb[0].mxu0 %v376
      %v471 = vpop.f32.mrb[0].mxu0
      %v472 = vadd.f32 %v271, %v471
      %v473 = vpop.f32.mrb[0].mxu0
      %v474 = vpop.f32.mrb[0].mxu0
      %v475 = vadd.f32 %v271, %v474
      %v476 = vpop.f32.mrb[0].mxu0
      %477 = vmatprep.mubr.bf16.mxu0 0
      %478 = vmatmul.mubr.bf16.gmra.mrb[0].mxu0 %v379
      %v479 = vpop.f32.mrb[0].mxu0
      %v480 = vadd.f32 %v271, %v479
      %v481 = vpop.f32.mrb[0].mxu0
      %v482 = vpop.f32.mrb[0].mxu0
      %v483 = vadd.f32 %v271, %v482
      %v484 = vpop.f32.mrb[0].mxu0
      %485 = vmatprep.mubr.bf16.mxu0 0
      %486 = vmatmul.mubr.bf16.gmra.mrb[0].mxu0 %v382
      %v487 = vpop.f32.mrb[0].mxu0
      %v488 = vadd.f32 %v271, %v487
      %v489 = vpop.f32.mrb[0].mxu0
      %v490 = vpop.f32.mrb[0].mxu0
      %v491 = vadd.f32 %v271, %v490
      %v492 = vpop.f32.mrb[0].mxu0
      %493 = vmatprep.mubr.bf16.mxu0 0
      %494 = vmatmul.mubr.bf16.gmra.mrb[0].mxu0 %v385
      %v495 = vpop.f32.mrb[0].mxu0
      %v496 = vadd.f32 %v271, %v495
      %v497 = vpop.f32.mrb[0].mxu0
      %v498 = vpop.f32.mrb[0].mxu0
      %v499 = vadd.f32 %v271, %v498
      %v500 = vpop.f32.mrb[0].mxu0
      %501 = vmatprep.mubr.bf16.mxu0 0
      %502 = vmatmul.mubr.bf16.gmra.mrb[0].mxu0 %v388
      %v503 = vpop.f32.mrb[0].mxu0
      %v504 = vadd.f32 %v271, %v503
      %v505 = vpop.f32.mrb[0].mxu0
      %v506 = vpop.f32.mrb[0].mxu0
      %v507 = vadd.f32 %v271, %v506
      %v508 = vpop.f32.mrb[0].mxu0
      %509 = vmatprep.mubr.bf16.mxu0 0
      %510 = vmatmul.mubr.bf16.gmra.mrb[0].mxu0 %v391
      %v511 = vpop.f32.mrb[0].mxu0
      %v512 = vadd.f32 %v271, %v511
      %v513 = vpop.f32.mrb[0].mxu0
      %v514 = vpop.f32.mrb[0].mxu0
      %v515 = vadd.f32 %v271, %v514
      %v516 = vpop.f32.mrb[0].mxu0
      %517 = vmatprep.mubr.bf16.mxu0 0
      %518 = vmatmul.mubr.bf16.gmra.mrb[0].mxu0 %v394
      %v519 = vpop.f32.mrb[0].mxu0
      %v520 = vadd.f32 %v271, %v519
      %v521 = vpop.f32.mrb[0].mxu0
      %v522 = vpop.f32.mrb[0].mxu0
      %v523 = vadd.f32 %v271, %v522
      %v524 = vpop.f32.mrb[0].mxu0
      %525 = vmatprep.mubr.bf16.mxu0 0
      %526 = vmatmul.mubr.bf16.gmra.mrb[0].mxu0 %v397
      %v527 = vpop.f32.mrb[0].mxu0
      %v528 = vadd.f32 %v271, %v527
      %v529 = vpop.f32.mrb[0].mxu0
      %v530 = vpop.f32.mrb[0].mxu0
      %v531 = vadd.f32 %v271, %v530
      %v532 = vpop.f32.mrb[0].mxu0
      %533 = vmatprep.mubr.bf16.mxu0 0
      %534 = vmatmul.mubr.bf16.gmra.mrb[0].mxu0 %v400
      %v535 = vpop.f32.mrb[0].mxu0
      %v536 = vadd.f32 %v271, %v535
      %v537 = vpop.f32.mrb[0].mxu0
      %v538 = vpop.f32.mrb[0].mxu0
      %v539 = vadd.f32 %v271, %v538
      %v540 = vpop.f32.mrb[0].mxu0
      %541 = vmatprep.mubr.bf16.mxu0 0
      %542 = vmatmul.mubr.bf16.gmra.mrb[0].mxu0 %v403
      %v543 = vpop.f32.mrb[0].mxu0
      %v544 = vadd.f32 %v271, %v543
      %v545 = vpop.f32.mrb[0].mxu0
      %v546 = vpop.f32.mrb[0].mxu0
      %v547 = vadd.f32 %v271, %v546
      %v548 = vpop.f32.mrb[0].mxu0
      %549 = vmatprep.mubr.bf16.mxu0 0
      %550 = vmatmul.mubr.bf16.gmra.mrb[0].mxu0 %v406
      %v551 = vpop.f32.mrb[0].mxu0
      %v552 = vadd.f32 %v271, %v551
      %v553 = vpop.f32.mrb[0].mxu0
      %v554 = vpop.f32.mrb[0].mxu0
      %v555 = vadd.f32 %v271, %v554
      %v556 = vpop.f32.mrb[0].mxu0
      %557 = vmatprep.mubr.bf16.mxu0 0
      %558 = vmatmul.mubr.bf16.gmra.mrb[0].mxu0 %v409
      %v559 = vpop.f32.mrb[0].mxu0
      %v560 = vadd.f32 %v271, %v559
      %v561 = vpop.f32.mrb[0].mxu0
      %v562 = vpop.f32.mrb[0].mxu0
      %v563 = vadd.f32 %v271, %v562
      %v564 = vpop.f32.mrb[0].mxu0
      %565 = vmatprep.mubr.bf16.mxu0 0
      %566 = vmatmul.mubr.bf16.gmra.mrb[0].mxu0 %v412
      %v567 = vpop.f32.mrb[0].mxu0
      %v568 = vadd.f32 %v271, %v567
      %v569 = vpop.f32.mrb[0].mxu0
      %v570 = vpop.f32.mrb[0].mxu0
      %v571 = vadd.f32 %v271, %v570
      %v572 = vpop.f32.mrb[0].mxu0
      %573 = vmatprep.mubr.bf16.mxu0 0
      %574 = vmatmul.mubr.bf16.gmra.mrb[0].mxu0 %v415
      %v575 = vpop.f32.mrb[0].mxu0
      %v576 = vadd.f32 %v271, %v575
      %v577 = vpop.f32.mrb[0].mxu0
      %v578 = vpop.f32.mrb[0].mxu0
      %v579 = vadd.f32 %v271, %v578
      %v580 = vpop.f32.mrb[0].mxu0
      %581 = vdwg.mxu0
      %v582 = vmax.f32 %v456, 0.0
      %v583 = vmax.f32 %v459, 0.0
      %v584 = vmax.f32 %v464, 0.0
      %v585 = vmax.f32 %v467, 0.0
      %v586 = vmax.f32 %v472, 0.0
      %v587 = vmax.f32 %v475, 0.0
      %v588 = vmax.f32 %v480, 0.0
      %v589 = vmax.f32 %v483, 0.0
      %v590 = vmax.f32 %v488, 0.0
      %v591 = vmax.f32 %v491, 0.0
      %v592 = vmax.f32 %v496, 0.0
      %v593 = vmax.f32 %v499, 0.0
      %v594 = vmax.f32 %v504, 0.0
      %v595 = vmax.f32 %v507, 0.0
      %v596 = vmax.f32 %v512, 0.0
      %v597 = vmax.f32 %v515, 0.0
      %v598 = vmax.f32 %v520, 0.0
      %v599 = vmax.f32 %v523, 0.0
      %v600 = vmax.f32 %v528, 0.0
      %v601 = vmax.f32 %v531, 0.0
      %v602 = vmax.f32 %v536, 0.0
      %v603 = vmax.f32 %v539, 0.0
      %v604 = vmax.f32 %v544, 0.0
      %v605 = vmax.f32 %v547, 0.0
      %v606 = vmax.f32 %v552, 0.0
      %v607 = vmax.f32 %v555, 0.0
      %v608 = vmax.f32 %v560, 0.0
      %v609 = vmax.f32 %v563, 0.0
      %v610 = vmax.f32 %v568, 0.0
      %v611 = vmax.f32 %v571, 0.0
      %v612 = vmax.f32 %v576, 0.0
      %v613 = vmax.f32 %v579, 0.0
      %v614 = vpack.c.bf16 %v583, %v582
      %v615 = vpack.c.bf16 %v585, %v584
      %v616 = vpack.c.bf16 %v587, %v586
      %v617 = vpack.c.bf16 %v589, %v588
      %v618 = vpack.c.bf16 %v591, %v590
      %v619 = vpack.c.bf16 %v593, %v592
      %v620 = vpack.c.bf16 %v595, %v594
      %v621 = vpack.c.bf16 %v597, %v596
      %v622 = vpack.c.bf16 %v599, %v598
      %v623 = vpack.c.bf16 %v601, %v600
      %v624 = vpack.c.bf16 %v603, %v602
      %v625 = vpack.c.bf16 %v605, %v604
      %v626 = vpack.c.bf16 %v607, %v606
      %v627 = vpack.c.bf16 %v609, %v608
      %v628 = vpack.c.bf16 %v611, %v610
      %v629 = vpack.c.bf16 %v613, %v612
      %v630 = vld [vmem:[%s3] sm:$0xf]
      %v631 = vld [vmem:[%s3 + $0x4] sm:$0xf]
      %v632 = vld [vmem:[%s3 + $0x8] sm:$0xf]
      %v633 = vld [vmem:[%s3 + $0xc] sm:$0xf]
      %v634 = vld [vmem:[%s3 + $0x10] sm:$0xf]
      %v635 = vld [vmem:[%s3 + $0x14] sm:$0xf]
      %v636 = vld [vmem:[%s3 + $0x18] sm:$0xf]
      %v637 = vld [vmem:[%s3 + $0x1c] sm:$0xf]
      %v638 = vld [vmem:[%s3 + $0x20] sm:$0xf]
      %v639 = vld [vmem:[%s3 + $0x24] sm:$0xf]
      %v640 = vld [vmem:[%s3 + $0x28] sm:$0xf]
      %v641 = vld [vmem:[%s3 + $0x2c] sm:$0xf]
      %v642 = vld [vmem:[%s3 + $0x30] sm:$0xf]
      %v643 = vld [vmem:[%s3 + $0x34] sm:$0xf]
      %v644 = vld [vmem:[%s3 + $0x38] sm:$0xf]
      %v645 = vld [vmem:[%s3 + $0x3c] sm:$0xf]
      %v646 = vld [vmem:[%s4] sm:$0x1]
      %v648 = vlaneseq
      %v649 = vshrl.u32 %v648, 7
      %v650 = vsub.s32 0, %v649
      %v651 = vrot.slane %v646, %v650
      %v669 = vunpack.c.l.b16 %v630
      %v670 = vunpack.c.l.b16 %v631
      %v671 = vunpack.c.l.b16 %v632
      %v672 = vunpack.c.l.b16 %v633
      %v673 = vunpack.c.l.b16 %v634
      %v674 = vunpack.c.l.b16 %v635
      %v675 = vunpack.c.l.b16 %v636
      %v676 = vunpack.c.l.b16 %v637
      %v677 = vunpack.c.l.b16 %v638
      %v678 = vunpack.c.l.b16 %v639
      %v679 = vunpack.c.l.b16 %v640
      %v680 = vunpack.c.l.b16 %v641
      %v681 = vunpack.c.l.b16 %v642
      %v682 = vunpack.c.l.b16 %v643
      %v683 = vunpack.c.l.b16 %v644
      %v684 = vunpack.c.l.b16 %v645
      %v685 = vpack.c.b16 %v670, %v669
      %v686 = vpack.c.b16 %v672, %v671
      %v687 = vpack.c.b16 %v674, %v673
      %v688 = vpack.c.b16 %v676, %v675
      %v689 = vpack.c.b16 %v678, %v677
      %v690 = vpack.c.b16 %v680, %v679
      %v691 = vpack.c.b16 %v682, %v681
      %v692 = vpack.c.b16 %v684, %v683
      %701 = vmatprep.subr.bf16.mxu0 0
      %702 = vmatpush1.bf16.msra.mxu0 %v685
      %703 = vmatprep.subr.bf16.mxu0 0
      %704 = vmatpush1.bf16.msra.mxu0 %v686
      %705 = vmatprep.subr.bf16.mxu0 0
      %706 = vmatpush1.bf16.msra.mxu0 %v687
      %707 = vmatprep.subr.bf16.mxu0 0
      %708 = vmatpush1.bf16.msra.mxu0 %v688
      %709 = vmatprep.subr.bf16.mxu0 0
      %710 = vmatpush1.bf16.msra.mxu0 %v689
      %711 = vmatprep.subr.bf16.mxu0 0
      %712 = vmatpush1.bf16.msra.mxu0 %v690
      %713 = vmatprep.subr.bf16.mxu0 0
      %714 = vmatpush1.bf16.msra.mxu0 %v691
      %715 = vmatprep.subr.bf16.mxu0 0
      %716 = vmatpush1.bf16.msra.mxu0 %v692
      %717 = vmatprep.subr.bf16.mxu0 0
      %718 = vmatpush1.bf16.msra.mxu0 0
      %719 = vmatprep.subr.bf16.mxu0 0
      %720 = vmatpush1.bf16.msra.mxu0 0
      %721 = vmatprep.subr.bf16.mxu0 0
      %722 = vmatpush1.bf16.msra.mxu0 0
      %723 = vmatprep.subr.bf16.mxu0 0
      %724 = vmatpush1.bf16.msra.mxu0 0
      %725 = vmatprep.subr.bf16.mxu0 0
      %726 = vmatpush1.bf16.msra.mxu0 0
      %727 = vmatprep.subr.bf16.mxu0 0
      %728 = vmatpush1.bf16.msra.mxu0 0
      %729 = vmatprep.subr.bf16.mxu0 0
      %730 = vmatpush1.bf16.msra.mxu0 0
      %731 = vmatprep.subr.bf16.mxu0 0
      %732 = vmatpush1.bf16.msra.mxu0 0
      %733 = vmatprep.mubr.bf16.mxu0 0
      %734 = vmatmul.mubr.bf16.gmra.mrb[0].mxu0 %v614
      %v735 = vpop.f32.mrb[0].mxu0
      %v736 = vadd.f32 %v651, %v735
      %v737 = vpop.f32.mrb[0].mxu0
      %v738 = vpop.f32.mrb[0].mxu0
      %v739 = vadd.f32 %v651, %v738
      %v740 = vpop.f32.mrb[0].mxu0
      %741 = vmatprep.mubr.bf16.mxu0 0
      %742 = vmatmul.mubr.bf16.gmra.mrb[0].mxu0 %v615
      %v743 = vpop.f32.mrb[0].mxu0
      %v744 = vadd.f32 %v651, %v743
      %v745 = vpop.f32.mrb[0].mxu0
      %v746 = vpop.f32.mrb[0].mxu0
      %v747 = vadd.f32 %v651, %v746
      %v748 = vpop.f32.mrb[0].mxu0
      %749 = vmatprep.mubr.bf16.mxu0 0
      %750 = vmatmul.mubr.bf16.gmra.mrb[0].mxu0 %v616
      %v751 = vpop.f32.mrb[0].mxu0
      %v752 = vadd.f32 %v651, %v751
      %v753 = vpop.f32.mrb[0].mxu0
      %v754 = vpop.f32.mrb[0].mxu0
      %v755 = vadd.f32 %v651, %v754
      %v756 = vpop.f32.mrb[0].mxu0
      %757 = vmatprep.mubr.bf16.mxu0 0
      %758 = vmatmul.mubr.bf16.gmra.mrb[0].mxu0 %v617
      %v759 = vpop.f32.mrb[0].mxu0
      %v760 = vadd.f32 %v651, %v759
      %v761 = vpop.f32.mrb[0].mxu0
      %v762 = vpop.f32.mrb[0].mxu0
      %v763 = vadd.f32 %v651, %v762
      %v764 = vpop.f32.mrb[0].mxu0
      %765 = vmatprep.mubr.bf16.mxu0 0
      %766 = vmatmul.mubr.bf16.gmra.mrb[0].mxu0 %v618
      %v767 = vpop.f32.mrb[0].mxu0
      %v768 = vadd.f32 %v651, %v767
      %v769 = vpop.f32.mrb[0].mxu0
      %v770 = vpop.f32.mrb[0].mxu0
      %v771 = vadd.f32 %v651, %v770
      %v772 = vpop.f32.mrb[0].mxu0
      %773 = vmatprep.mubr.bf16.mxu0 0
      %774 = vmatmul.mubr.bf16.gmra.mrb[0].mxu0 %v619
      %v775 = vpop.f32.mrb[0].mxu0
      %v776 = vadd.f32 %v651, %v775
      %v777 = vpop.f32.mrb[0].mxu0
      %v778 = vpop.f32.mrb[0].mxu0
      %v779 = vadd.f32 %v651, %v778
      %v780 = vpop.f32.mrb[0].mxu0
      %781 = vmatprep.mubr.bf16.mxu0 0
      %782 = vmatmul.mubr.bf16.gmra.mrb[0].mxu0 %v620
      %v783 = vpop.f32.mrb[0].mxu0
      %v784 = vadd.f32 %v651, %v783
      %v785 = vpop.f32.mrb[0].mxu0
      %v786 = vpop.f32.mrb[0].mxu0
      %v787 = vadd.f32 %v651, %v786
      %v788 = vpop.f32.mrb[0].mxu0
      %789 = vmatprep.mubr.bf16.mxu0 0
      %790 = vmatmul.mubr.bf16.gmra.mrb[0].mxu0 %v621
      %v791 = vpop.f32.mrb[0].mxu0
      %v792 = vadd.f32 %v651, %v791
      %v793 = vpop.f32.mrb[0].mxu0
      %v794 = vpop.f32.mrb[0].mxu0
      %v795 = vadd.f32 %v651, %v794
      %v796 = vpop.f32.mrb[0].mxu0
      %797 = vmatprep.mubr.bf16.mxu0 0
      %798 = vmatmul.mubr.bf16.gmra.mrb[0].mxu0 %v622
      %v799 = vpop.f32.mrb[0].mxu0
      %v800 = vadd.f32 %v651, %v799
      %v801 = vpop.f32.mrb[0].mxu0
      %v802 = vpop.f32.mrb[0].mxu0
      %v803 = vadd.f32 %v651, %v802
      %v804 = vpop.f32.mrb[0].mxu0
      %805 = vmatprep.mubr.bf16.mxu0 0
      %806 = vmatmul.mubr.bf16.gmra.mrb[0].mxu0 %v623
      %v807 = vpop.f32.mrb[0].mxu0
      %v808 = vadd.f32 %v651, %v807
      %v809 = vpop.f32.mrb[0].mxu0
      %v810 = vpop.f32.mrb[0].mxu0
      %v811 = vadd.f32 %v651, %v810
      %v812 = vpop.f32.mrb[0].mxu0
      %813 = vmatprep.mubr.bf16.mxu0 0
      %814 = vmatmul.mubr.bf16.gmra.mrb[0].mxu0 %v624
      %v815 = vpop.f32.mrb[0].mxu0
      %v816 = vadd.f32 %v651, %v815
      %v817 = vpop.f32.mrb[0].mxu0
      %v818 = vpop.f32.mrb[0].mxu0
      %v819 = vadd.f32 %v651, %v818
      %v820 = vpop.f32.mrb[0].mxu0
      %821 = vmatprep.mubr.bf16.mxu0 0
      %822 = vmatmul.mubr.bf16.gmra.mrb[0].mxu0 %v625
      %v823 = vpop.f32.mrb[0].mxu0
      %v824 = vadd.f32 %v651, %v823
      %v825 = vpop.f32.mrb[0].mxu0
      %v826 = vpop.f32.mrb[0].mxu0
      %v827 = vadd.f32 %v651, %v826
      %v828 = vpop.f32.mrb[0].mxu0
      %829 = vmatprep.mubr.bf16.mxu0 0
      %830 = vmatmul.mubr.bf16.gmra.mrb[0].mxu0 %v626
      %v831 = vpop.f32.mrb[0].mxu0
      %v832 = vadd.f32 %v651, %v831
      %v833 = vpop.f32.mrb[0].mxu0
      %v834 = vpop.f32.mrb[0].mxu0
      %v835 = vadd.f32 %v651, %v834
      %v836 = vpop.f32.mrb[0].mxu0
      %837 = vmatprep.mubr.bf16.mxu0 0
      %838 = vmatmul.mubr.bf16.gmra.mrb[0].mxu0 %v627
      %v839 = vpop.f32.mrb[0].mxu0
      %v840 = vadd.f32 %v651, %v839
      %v841 = vpop.f32.mrb[0].mxu0
      %v842 = vpop.f32.mrb[0].mxu0
      %v843 = vadd.f32 %v651, %v842
      %v844 = vpop.f32.mrb[0].mxu0
      %845 = vmatprep.mubr.bf16.mxu0 0
      %846 = vmatmul.mubr.bf16.gmra.mrb[0].mxu0 %v628
      %v847 = vpop.f32.mrb[0].mxu0
      %v848 = vadd.f32 %v651, %v847
      %v849 = vpop.f32.mrb[0].mxu0
      %v850 = vpop.f32.mrb[0].mxu0
      %v851 = vadd.f32 %v651, %v850
      %v852 = vpop.f32.mrb[0].mxu0
      %853 = vmatprep.mubr.bf16.mxu0 0
      %854 = vmatmul.mubr.bf16.gmra.mrb[0].mxu0 %v629
      %v855 = vpop.f32.mrb[0].mxu0
      %v856 = vadd.f32 %v651, %v855
      %v857 = vpop.f32.mrb[0].mxu0
      %v858 = vpop.f32.mrb[0].mxu0
      %v859 = vadd.f32 %v651, %v858
      %v860 = vpop.f32.mrb[0].mxu0
      %861 = vdwg.mxu0
      %v862 = vmul.f32 %v582, %v582
      %v863 = vmul.f32 %v583, %v583
      %v864 = vmul.f32 %v584, %v584
      %v865 = vmul.f32 %v585, %v585
      %v866 = vmul.f32 %v586, %v586
      %v867 = vmul.f32 %v587, %v587
      %v868 = vmul.f32 %v588, %v588
      %v869 = vmul.f32 %v589, %v589
      %v870 = vmul.f32 %v590, %v590
      %v871 = vmul.f32 %v591, %v591
      %v872 = vmul.f32 %v592, %v592
      %v873 = vmul.f32 %v593, %v593
      %v874 = vmul.f32 %v594, %v594
      %v875 = vmul.f32 %v595, %v595
      %v876 = vmul.f32 %v596, %v596
      %v877 = vmul.f32 %v597, %v597
      %v878 = vmul.f32 %v598, %v598
      %v879 = vmul.f32 %v599, %v599
      %v880 = vmul.f32 %v600, %v600
      %v881 = vmul.f32 %v601, %v601
      %v882 = vmul.f32 %v602, %v602
      %v883 = vmul.f32 %v603, %v603
      %v884 = vmul.f32 %v604, %v604
      %v885 = vmul.f32 %v605, %v605
      %v886 = vmul.f32 %v606, %v606
      %v887 = vmul.f32 %v607, %v607
      %v888 = vmul.f32 %v608, %v608
      %v889 = vmul.f32 %v609, %v609
      %v890 = vmul.f32 %v610, %v610
      %v891 = vmul.f32 %v611, %v611
      %v892 = vmul.f32 %v612, %v612
      %v893 = vmul.f32 %v613, %v613
      %894 = vadd.xlane.f32.xlu0 %v862
      %v895 = vpop.xlane.xlu0 %894
      %896 = vadd.xlane.f32.xlu0 %v863
      %v897 = vpop.xlane.xlu0 %896
      %898 = vadd.xlane.f32.xlu0 %v864
      %v899 = vpop.xlane.xlu0 %898
      %900 = vadd.xlane.f32.xlu0 %v865
      %v901 = vpop.xlane.xlu0 %900
      %902 = vadd.xlane.f32.xlu0 %v866
      %v903 = vpop.xlane.xlu0 %902
      %904 = vadd.xlane.f32.xlu0 %v867
      %v905 = vpop.xlane.xlu0 %904
      %906 = vadd.xlane.f32.xlu0 %v868
      %v907 = vpop.xlane.xlu0 %906
      %908 = vadd.xlane.f32.xlu0 %v869
      %v909 = vpop.xlane.xlu0 %908
      %910 = vadd.xlane.f32.xlu0 %v870
      %v911 = vpop.xlane.xlu0 %910
      %912 = vadd.xlane.f32.xlu0 %v871
      %v913 = vpop.xlane.xlu0 %912
      %914 = vadd.xlane.f32.xlu0 %v872
      %v915 = vpop.xlane.xlu0 %914
      %916 = vadd.xlane.f32.xlu0 %v873
      %v917 = vpop.xlane.xlu0 %916
      %918 = vadd.xlane.f32.xlu0 %v874
      %v919 = vpop.xlane.xlu0 %918
      %920 = vadd.xlane.f32.xlu0 %v875
      %v921 = vpop.xlane.xlu0 %920
      %922 = vadd.xlane.f32.xlu0 %v876
      %v923 = vpop.xlane.xlu0 %922
      %924 = vadd.xlane.f32.xlu0 %v877
      %v925 = vpop.xlane.xlu0 %924
      %926 = vadd.xlane.f32.xlu0 %v878
      %v927 = vpop.xlane.xlu0 %926
      %928 = vadd.xlane.f32.xlu0 %v879
      %v929 = vpop.xlane.xlu0 %928
      %930 = vadd.xlane.f32.xlu0 %v880
      %v931 = vpop.xlane.xlu0 %930
      %932 = vadd.xlane.f32.xlu0 %v881
      %v933 = vpop.xlane.xlu0 %932
      %934 = vadd.xlane.f32.xlu0 %v882
      %v935 = vpop.xlane.xlu0 %934
      %936 = vadd.xlane.f32.xlu0 %v883
      %v937 = vpop.xlane.xlu0 %936
      %938 = vadd.xlane.f32.xlu0 %v884
      %v939 = vpop.xlane.xlu0 %938
      %940 = vadd.xlane.f32.xlu0 %v885
      %v941 = vpop.xlane.xlu0 %940
      %942 = vadd.xlane.f32.xlu0 %v886
      %v943 = vpop.xlane.xlu0 %942
      %944 = vadd.xlane.f32.xlu0 %v887
      %v945 = vpop.xlane.xlu0 %944
      %946 = vadd.xlane.f32.xlu0 %v888
      %v947 = vpop.xlane.xlu0 %946
      %948 = vadd.xlane.f32.xlu0 %v889
      %v949 = vpop.xlane.xlu0 %948
      %950 = vadd.xlane.f32.xlu0 %v890
      %v951 = vpop.xlane.xlu0 %950
      %952 = vadd.xlane.f32.xlu0 %v891
      %v953 = vpop.xlane.xlu0 %952
      %954 = vadd.xlane.f32.xlu0 %v892
      %v955 = vpop.xlane.xlu0 %954
      %956 = vadd.xlane.f32.xlu0 %v893
      %v957 = vpop.xlane.xlu0 %956
      %v958 = vadd.f32 %v895, 1e-12
      %v959 = vadd.f32 %v897, 1e-12
      %v960 = vadd.f32 %v899, 1e-12
      %v961 = vadd.f32 %v901, 1e-12
      %v962 = vadd.f32 %v903, 1e-12
      %v963 = vadd.f32 %v905, 1e-12
      %v964 = vadd.f32 %v907, 1e-12
      %v965 = vadd.f32 %v909, 1e-12
      %v966 = vadd.f32 %v911, 1e-12
      %v967 = vadd.f32 %v913, 1e-12
      %v968 = vadd.f32 %v915, 1e-12
      %v969 = vadd.f32 %v917, 1e-12
      %v970 = vadd.f32 %v919, 1e-12
      %v971 = vadd.f32 %v921, 1e-12
      %v972 = vadd.f32 %v923, 1e-12
      %v973 = vadd.f32 %v925, 1e-12
      %v974 = vadd.f32 %v927, 1e-12
      %v975 = vadd.f32 %v929, 1e-12
      %v976 = vadd.f32 %v931, 1e-12
      %v977 = vadd.f32 %v933, 1e-12
      %v978 = vadd.f32 %v935, 1e-12
      %v979 = vadd.f32 %v937, 1e-12
      %v980 = vadd.f32 %v939, 1e-12
      %v981 = vadd.f32 %v941, 1e-12
      %v982 = vadd.f32 %v943, 1e-12
      %v983 = vadd.f32 %v945, 1e-12
      %v984 = vadd.f32 %v947, 1e-12
      %v985 = vadd.f32 %v949, 1e-12
      %v986 = vadd.f32 %v951, 1e-12
      %v987 = vadd.f32 %v953, 1e-12
      %v988 = vadd.f32 %v955, 1e-12
      %v989 = vadd.f32 %v957, 1e-12
      %v990 = vrsqrt.pop %v958
      %v991 = vrsqrt.pop %v959
      %v992 = vrsqrt.pop %v960
      %v993 = vrsqrt.pop %v961
      %v994 = vrsqrt.pop %v962
      %v995 = vrsqrt.pop %v963
      %v996 = vrsqrt.pop %v964
      %v997 = vrsqrt.pop %v965
      %v998 = vrsqrt.pop %v966
      %v999 = vrsqrt.pop %v967
      %v1000 = vrsqrt.pop %v968
      %v1001 = vrsqrt.pop %v969
      %v1002 = vrsqrt.pop %v970
      %v1003 = vrsqrt.pop %v971
      %v1004 = vrsqrt.pop %v972
      %v1005 = vrsqrt.pop %v973
      %v1006 = vrsqrt.pop %v974
      %v1007 = vrsqrt.pop %v975
      %v1008 = vrsqrt.pop %v976
      %v1009 = vrsqrt.pop %v977
      %v1010 = vrsqrt.pop %v978
      %v1011 = vrsqrt.pop %v979
      %v1012 = vrsqrt.pop %v980
      %v1013 = vrsqrt.pop %v981
      %v1014 = vrsqrt.pop %v982
      %v1015 = vrsqrt.pop %v983
      %v1016 = vrsqrt.pop %v984
      %v1017 = vrsqrt.pop %v985
      %v1018 = vrsqrt.pop %v986
      %v1019 = vrsqrt.pop %v987
      %v1020 = vrsqrt.pop %v988
      %v1021 = vrsqrt.pop %v989
      %v1022 = vmul.f32 %v582, %v990
      %v1023 = vmul.f32 %v583, %v991
      %v1024 = vmul.f32 %v584, %v992
      %v1025 = vmul.f32 %v585, %v993
      %v1026 = vmul.f32 %v586, %v994
      %v1027 = vmul.f32 %v587, %v995
      %v1028 = vmul.f32 %v588, %v996
      %v1029 = vmul.f32 %v589, %v997
      %v1030 = vmul.f32 %v590, %v998
      %v1031 = vmul.f32 %v591, %v999
      %v1032 = vmul.f32 %v592, %v1000
      %v1033 = vmul.f32 %v593, %v1001
      %v1034 = vmul.f32 %v594, %v1002
      %v1035 = vmul.f32 %v595, %v1003
      %v1036 = vmul.f32 %v596, %v1004
      %v1037 = vmul.f32 %v597, %v1005
      %v1038 = vmul.f32 %v598, %v1006
      %v1039 = vmul.f32 %v599, %v1007
      %v1040 = vmul.f32 %v600, %v1008
      %v1041 = vmul.f32 %v601, %v1009
      %v1042 = vmul.f32 %v602, %v1010
      %v1043 = vmul.f32 %v603, %v1011
      %v1044 = vmul.f32 %v604, %v1012
      %v1045 = vmul.f32 %v605, %v1013
      %v1046 = vmul.f32 %v606, %v1014
      %v1047 = vmul.f32 %v607, %v1015
      %v1048 = vmul.f32 %v608, %v1016
      %v1049 = vmul.f32 %v609, %v1017
      %v1050 = vmul.f32 %v610, %v1018
      %v1051 = vmul.f32 %v611, %v1019
      %v1052 = vmul.f32 %v612, %v1020
      %v1053 = vmul.f32 %v613, %v1021
      %v1054 = vadd.f32 %v1022, %v736
      %v1055 = vadd.f32 %v1023, %v739
      %v1056 = vadd.f32 %v1024, %v744
      %v1057 = vadd.f32 %v1025, %v747
      %v1058 = vadd.f32 %v1026, %v752
      %v1059 = vadd.f32 %v1027, %v755
      %v1060 = vadd.f32 %v1028, %v760
      %v1061 = vadd.f32 %v1029, %v763
      %v1062 = vadd.f32 %v1030, %v768
      %v1063 = vadd.f32 %v1031, %v771
      %v1064 = vadd.f32 %v1032, %v776
      %v1065 = vadd.f32 %v1033, %v779
      %v1066 = vadd.f32 %v1034, %v784
      %v1067 = vadd.f32 %v1035, %v787
      %v1068 = vadd.f32 %v1036, %v792
      %v1069 = vadd.f32 %v1037, %v795
      %v1070 = vadd.f32 %v1038, %v800
      %v1071 = vadd.f32 %v1039, %v803
      %v1072 = vadd.f32 %v1040, %v808
      %v1073 = vadd.f32 %v1041, %v811
      %v1074 = vadd.f32 %v1042, %v816
      %v1075 = vadd.f32 %v1043, %v819
      %v1076 = vadd.f32 %v1044, %v824
      %v1077 = vadd.f32 %v1045, %v827
      %v1078 = vadd.f32 %v1046, %v832
      %v1079 = vadd.f32 %v1047, %v835
      %v1080 = vadd.f32 %v1048, %v840
      %v1081 = vadd.f32 %v1049, %v843
      %v1082 = vadd.f32 %v1050, %v848
      %v1083 = vadd.f32 %v1051, %v851
      %v1084 = vadd.f32 %v1052, %v856
      %v1085 = vadd.f32 %v1053, %v859
      %1086 = vst [vmem:[%s226] sm:$0xff] %v1054
      %1087 = vst [vmem:[%s226 + $0x8] sm:$0xff] %v1055
      %1088 = vst [vmem:[%s226 + $0x10] sm:$0xff] %v1056
      %1089 = vst [vmem:[%s226 + $0x18] sm:$0xff] %v1057
      %1090 = vst [vmem:[%s226 + $0x20] sm:$0xff] %v1058
      %1091 = vst [vmem:[%s226 + $0x28] sm:$0xff] %v1059
      %1092 = vst [vmem:[%s226 + $0x30] sm:$0xff] %v1060
      %1093 = vst [vmem:[%s226 + $0x38] sm:$0xff] %v1061
      %1094 = vst [vmem:[%s226 + $0x40] sm:$0xff] %v1062
      %1095 = vst [vmem:[%s226 + $0x48] sm:$0xff] %v1063
      %1096 = vst [vmem:[%s226 + $0x50] sm:$0xff] %v1064
      %1097 = vst [vmem:[%s226 + $0x58] sm:$0xff] %v1065
      %1098 = vst [vmem:[%s226 + $0x60] sm:$0xff] %v1066
      %1099 = vst [vmem:[%s226 + $0x68] sm:$0xff] %v1067
      %1100 = vst [vmem:[%s226 + $0x70] sm:$0xff] %v1068
      %1101 = vst [vmem:[%s226 + $0x78] sm:$0xff] %v1069
      %1102 = vst [vmem:[%s226 + $0x80] sm:$0xff] %v1070
      %1103 = vst [vmem:[%s226 + $0x88] sm:$0xff] %v1071
      %1104 = vst [vmem:[%s226 + $0x90] sm:$0xff] %v1072
      %1105 = vst [vmem:[%s226 + $0x98] sm:$0xff] %v1073
      %1106 = vst [vmem:[%s226 + $0xa0] sm:$0xff] %v1074
      %1107 = vst [vmem:[%s226 + $0xa8] sm:$0xff] %v1075
      %1108 = vst [vmem:[%s226 + $0xb0] sm:$0xff] %v1076
      %1109 = vst [vmem:[%s226 + $0xb8] sm:$0xff] %v1077
      %1110 = vst [vmem:[%s226 + $0xc0] sm:$0xff] %v1078
      %1111 = vst [vmem:[%s226 + $0xc8] sm:$0xff] %v1079
      %1112 = vst [vmem:[%s226 + $0xd0] sm:$0xff] %v1080
      %1113 = vst [vmem:[%s226 + $0xd8] sm:$0xff] %v1081
      %1114 = vst [vmem:[%s226 + $0xe0] sm:$0xff] %v1082
      %1115 = vst [vmem:[%s226 + $0xe8] sm:$0xff] %v1083
      %1116 = vst [vmem:[%s226 + $0xf0] sm:$0xff] %v1084
      %1117 = vst [vmem:[%s226 + $0xf8] sm:$0xff] %v1085
      %s1118 = smul.u32 32, %s16
      %p1119 = scmp.lt.s32.totalorder %s1118, 63
      %s1120 = scalar_select %p1119, %s1118, 63
      %s1121 = smul.addr %s1120, 8
      %s1122 = scalar_lea.vmem %s5, %s1121
      // Predicated region
      $region41: #{jvp__.2} parent=39 // pred_check
        %p1123 = pneg %p144
      $region42: #{jvp__.2} parent=39 // pred_check_branch
        %1125 = sbr.rel (%p1123) target = $region44
      $region43: #{jvp__.2} parent=39 // pred_region
        %s1126 = smul.u32 32, %s16
      $region44: #{jvp__.2} parent=39 // pred_fallthru
        _
    $region40: #{jvp__.2} parent=5 // pred_fallthru
      _
    %p1127 = scmp.le.s32.totalorder 2, %s11
    // Predicated region
    $region45: #{jvp__.2} parent=5 // pred_check
      %p1128 = pneg %p1127
    $region46: #{jvp__.2} parent=5 // pred_check_branch
      %1130 = sbr.rel (%p1128) target = $region48
    $region47: #{jvp__.2} parent=5 // pred_region
      %s1131 = ssub.s32 %s11, 2
      // Predicated region
      $region49: #{jvp__.2} parent=47 // pred_check
        %p1132 = pneg %p150
      $region50: #{jvp__.2} parent=47 // pred_check_branch
        %1134 = sbr.rel (%p1132) target = $region52
      $region51: #{jvp__.2} parent=47 // pred_region
        %s1135 = smul.u32 32, %s17
        %p1136 = scmp.lt.s32.totalorder %s1135, 63
        %s1137 = scalar_select %p1136, %s1135, 63
        %s1138 = smul.addr %s1137, 8
        %s1139 = scalar_lea.vmem %s5, %s1138
      $region52: #{jvp__.2} parent=47 // pred_fallthru
        _
    $region48: #{jvp__.2} parent=5 // pred_fallthru
      _
  $region6: #{jvp__.2} parent=0 // loop_footer
    %s15 = sadd.s32 1, %s11
  $region7: #{jvp__.2} parent=0 // loop_footer_branch
    %10 = sbr.rel target = $region3
  $region8: #{jvp__.2} parent=0 // loop_exit
    _

// kernel: jvp__.3
$region0: #{jvp__.3}
  #allocation0 [shape = 'u32[]', space=smem, size = 0x4, offset = 0x4, fixed_abs, tag = 'smem constant byte address 0x4 - core index']
  #allocation1 [shape = 'u32[144,128]{1,0:T(1,128)}', space=vmem, size = 0x12000, scoped, tag = 'internal scratch']
  %s0 = inlined_call_operand.vmem [shape: bf16[512,128], index: 0, kind: input, shape index: {}]
  %s1 = inlined_call_operand.vmem [shape: bf16[128,512], index: 1, kind: input, shape index: {}]
  %s2 = inlined_call_operand.vmem [shape: f32[512,1], index: 2, kind: input, shape index: {}]
  %s3 = inlined_call_operand.vmem [shape: f32[1,512], index: 3, kind: input, shape index: {}]
  %s4 = inlined_call_operand.vmem [shape: f32[16,512], index: 4, kind: output, shape index: {0}]
  %s5 = inlined_call_operand.vmem [shape: f32[16,512], index: 5, kind: output, shape index: {1}]
  %6 = xla_tuple %s4, %s5
  %s7 = sld [smem:[#allocation0]]
  $region61: #{jvp__.3} parent=0
    _
  %s9 = ssub.s32 1, %s7
  %s10 = scalar_select 0, %s9, %s7
  loop: start=0, step=1, limit=4
  $region2: #{jvp__.3} parent=0 // loop_pre_header
    _
  $region3: #{jvp__.3} parent=0 // loop_header
    %s12 = sphi 0, %s16
    %p13 = scmp.ge.s32.totalorder %s12, 4
    %s19 = sphi 0, %s31
    %s20 = sphi 0, %s27
    %s21 = sphi 0, %s19
    %s22 = sphi 0, %s20
    %s23 = sphi 0, %s21
    %s24 = sphi 0, %s22
    %s34 = sphi 0, %s36
    %s37 = sphi 0, %s34
    %s38 = sphi 0, %s37
    %s54 = sphi 0, %s38
    %s60 = sphi 0, %s62
    %s63 = sphi 0, %s60
    %s64 = sphi 0, %s63
    %s80 = sphi 0, %s64
    %s86 = sphi 0, %s88
    %s89 = sphi 0, %s86
    %s90 = sphi 0, %s89
    %s106 = sphi 0, %s90
    %s112 = sphi 0, %s114
    %s115 = sphi 0, %s112
    %s116 = sphi 0, %s115
    %s132 = sphi 0, %s116
    %s138 = sphi 0, %s140
    %s141 = sphi 0, %s138
    %s142 = sphi 0, %s141
    %s158 = sphi 0, %s142
    %s164 = sphi 0, %s166
    %s167 = sphi 0, %s164
    %s168 = sphi 0, %s167
    %s184 = sphi 0, %s168
  $region4: #{jvp__.3} parent=0 // loop_header_branch
    %15 = sbr.rel (%p13) target = $region8
  $region5: #{jvp__.3} parent=0 // loop_body
    %s17 = ssub.s32 %s12, 1
    %s18 = ssub.s32 %s12, 2
    %s25 = sadd.s32 1, %s20
    %p26 = scmp.ge.s32.totalorder %s25, 1
    %s27 = scalar_select %p26, 0, %s25
    %s28 = sadd.s32 1, %s19
    %s29 = scalar_select %p26, %s28, %s19
    %p30 = scmp.ge.s32.totalorder %s29, 2
    %s31 = scalar_select %p30, 0, %s29
    %s32 = ssub.s32 %s19, %s31
    %p33 = scmp.eq.s32.totalorder %s32, 0
    %s35 = sadd.s32 %s34, 1
    %s36 = scalar_select %p33, %s34, %s35
    %p39 = pneg %p33
    %p40 = scmp.eq.s32.totalorder %s12, 1
    %p41 = por %p39, %p40
    %p42 = scmp.ne.s32.totalorder %s34, %s37
    %p43 = scmp.eq.s32.totalorder %s12, 0
    %p44 = por %p42, %p43
    %p45 = scmp.ne.s32.totalorder %s34, %s37
    %p46 = scmp.eq.s32.totalorder %s17, 1
    %p47 = por %p45, %p46
    %p48 = scmp.ne.s32.totalorder %s37, %s38
    %p49 = scmp.eq.s32.totalorder %s17, 0
    %p50 = por %p48, %p49
    %p51 = scmp.ne.s32.totalorder %s37, %s38
    %p52 = scmp.eq.s32.totalorder %s18, 1
    %p53 = por %p51, %p52
    %p55 = scmp.ne.s32.totalorder %s38, %s54
    %p56 = scmp.eq.s32.totalorder %s18, 0
    %p57 = por %p55, %p56
    %s58 = ssub.s32 %s20, %s27
    %p59 = scmp.eq.s32.totalorder %s58, 0
    %s61 = sadd.s32 %s60, 1
    %s62 = scalar_select %p59, %s60, %s61
    %p65 = pneg %p59
    %p66 = scmp.eq.s32.totalorder %s12, 1
    %p67 = por %p65, %p66
    %p68 = scmp.ne.s32.totalorder %s60, %s63
    %p69 = scmp.eq.s32.totalorder %s12, 0
    %p70 = por %p68, %p69
    %p71 = scmp.ne.s32.totalorder %s60, %s63
    %p72 = scmp.eq.s32.totalorder %s17, 1
    %p73 = por %p71, %p72
    %p74 = scmp.ne.s32.totalorder %s63, %s64
    %p75 = scmp.eq.s32.totalorder %s17, 0
    %p76 = por %p74, %p75
    %p77 = scmp.ne.s32.totalorder %s63, %s64
    %p78 = scmp.eq.s32.totalorder %s18, 1
    %p79 = por %p77, %p78
    %p81 = scmp.ne.s32.totalorder %s64, %s80
    %p82 = scmp.eq.s32.totalorder %s18, 0
    %p83 = por %p81, %p82
    %s84 = ssub.s32 %s19, %s31
    %p85 = scmp.eq.s32.totalorder %s84, 0
    %s87 = sadd.s32 %s86, 1
    %s88 = scalar_select %p85, %s86, %s87
    %p91 = pneg %p85
    %p92 = scmp.eq.s32.totalorder %s12, 1
    %p93 = por %p91, %p92
    %p94 = scmp.ne.s32.totalorder %s86, %s89
    %p95 = scmp.eq.s32.totalorder %s12, 0
    %p96 = por %p94, %p95
    %p97 = scmp.ne.s32.totalorder %s86, %s89
    %p98 = scmp.eq.s32.totalorder %s17, 1
    %p99 = por %p97, %p98
    %p100 = scmp.ne.s32.totalorder %s89, %s90
    %p101 = scmp.eq.s32.totalorder %s17, 0
    %p102 = por %p100, %p101
    %p103 = scmp.ne.s32.totalorder %s89, %s90
    %p104 = scmp.eq.s32.totalorder %s18, 1
    %p105 = por %p103, %p104
    %p107 = scmp.ne.s32.totalorder %s90, %s106
    %p108 = scmp.eq.s32.totalorder %s18, 0
    %p109 = por %p107, %p108
    %s110 = ssub.s32 %s20, %s27
    %p111 = scmp.eq.s32.totalorder %s110, 0
    %s113 = sadd.s32 %s112, 1
    %s114 = scalar_select %p111, %s112, %s113
    %p117 = pneg %p111
    %p118 = scmp.eq.s32.totalorder %s12, 1
    %p119 = por %p117, %p118
    %p120 = scmp.ne.s32.totalorder %s112, %s115
    %p121 = scmp.eq.s32.totalorder %s12, 0
    %p122 = por %p120, %p121
    %p123 = scmp.ne.s32.totalorder %s112, %s115
    %p124 = scmp.eq.s32.totalorder %s17, 1
    %p125 = por %p123, %p124
    %p126 = scmp.ne.s32.totalorder %s115, %s116
    %p127 = scmp.eq.s32.totalorder %s17, 0
    %p128 = por %p126, %p127
    %p129 = scmp.ne.s32.totalorder %s115, %s116
    %p130 = scmp.eq.s32.totalorder %s18, 1
    %p131 = por %p129, %p130
    %p133 = scmp.ne.s32.totalorder %s116, %s132
    %p134 = scmp.eq.s32.totalorder %s18, 0
    %p135 = por %p133, %p134
    %s136 = ssub.s32 %s19, %s31
    %p137 = scmp.eq.s32.totalorder %s136, 0
    %s139 = sadd.s32 %s138, 1
    %s140 = scalar_select %p137, %s138, %s139
    %p143 = pneg %p137
    %p144 = scmp.eq.s32.totalorder %s12, 1
    %p145 = por %p143, %p144
    %p146 = scmp.ne.s32.totalorder %s138, %s141
    %p147 = scmp.eq.s32.totalorder %s12, 0
    %p148 = por %p146, %p147
    %p149 = scmp.ne.s32.totalorder %s138, %s141
    %p150 = scmp.eq.s32.totalorder %s17, 1
    %p151 = por %p149, %p150
    %p152 = scmp.ne.s32.totalorder %s141, %s142
    %p153 = scmp.eq.s32.totalorder %s17, 0
    %p154 = por %p152, %p153
    %p155 = scmp.ne.s32.totalorder %s141, %s142
    %p156 = scmp.eq.s32.totalorder %s18, 1
    %p157 = por %p155, %p156
    %p159 = scmp.ne.s32.totalorder %s142, %s158
    %p160 = scmp.eq.s32.totalorder %s18, 0
    %p161 = por %p159, %p160
    %s162 = ssub.s32 %s19, %s31
    %p163 = scmp.eq.s32.totalorder %s162, 0
    %s165 = sadd.s32 %s164, 1
    %s166 = scalar_select %p163, %s164, %s165
    %p169 = pneg %p163
    %p170 = scmp.eq.s32.totalorder %s12, 1
    %p171 = por %p169, %p170
    %p172 = scmp.ne.s32.totalorder %s164, %s167
    %p173 = scmp.eq.s32.totalorder %s12, 0
    %p174 = por %p172, %p173
    %p175 = scmp.ne.s32.totalorder %s164, %s167
    %p176 = scmp.eq.s32.totalorder %s17, 1
    %p177 = por %p175, %p176
    %p178 = scmp.ne.s32.totalorder %s167, %s168
    %p179 = scmp.eq.s32.totalorder %s17, 0
    %p180 = por %p178, %p179
    %p181 = scmp.ne.s32.totalorder %s167, %s168
    %p182 = scmp.eq.s32.totalorder %s18, 1
    %p183 = por %p181, %p182
    %p185 = scmp.ne.s32.totalorder %s168, %s184
    %p186 = scmp.eq.s32.totalorder %s18, 0
    %p187 = por %p185, %p186
    %p188 = scmp.le.s32.totalorder 1, %s12
    %p189 = scmp.lt.s32.totalorder %s12, 3
    %p190 = pnand %p188, %p189
    %p191 = pneg %p190
    // Predicated region
    $region9: #{jvp__.3} parent=5 // pred_check
      _
    $region10: #{jvp__.3} parent=5 // pred_check_branch
      %193 = sbr.rel (%p190) target = $region12
    $region11: #{jvp__.3} parent=5 // pred_region
      %s194 = ssub.s32 %s12, 1
      // Predicated region
      $region13: #{jvp__.3} parent=11 // pred_check
        %p195 = pneg %p76
      $region14: #{jvp__.3} parent=11 // pred_check_branch
        %197 = sbr.rel (%p195) target = $region16
      $region15: #{jvp__.3} parent=11 // pred_region
        %s198 = smul.u32 4, %s22
        %p199 = scmp.lt.s32.totalorder %s198, 3
        %s200 = scalar_select %p199, %s198, 3
        %s201 = smul.addr %s200, 4
        %s202 = scalar_lea.vmem %s1, %s201
        %s203 = smul.u32 4, %s22
      $region16: #{jvp__.3} parent=11 // pred_fallthru
        _
      // Predicated region
      $region17: #{jvp__.3} parent=11 // pred_check
        %p204 = pneg %p128
      $region18: #{jvp__.3} parent=11 // pred_check_branch
        %206 = sbr.rel (%p204) target = $region20
      $region19: #{jvp__.3} parent=11 // pred_region
        %s207 = smul.u32 4, %s22
        %p208 = scmp.lt.s32.totalorder %s207, 3
        %s209 = scalar_select %p208, %s207, 3
        %s210 = scalar_lea.vmem %s3, %s209
        %s211 = smul.u32 4, %s22
      $region20: #{jvp__.3} parent=11 // pred_fallthru
        _
    $region12: #{jvp__.3} parent=5 // pred_fallthru
      _
    %p212 = scmp.lt.s32.totalorder %s12, 2
    // Predicated region
    $region21: #{jvp__.3} parent=5 // pred_check
      %p213 = pneg %p212
    $region22: #{jvp__.3} parent=5 // pred_check_branch
      %215 = sbr.rel (%p213) target = $region24
    $region23: #{jvp__.3} parent=5 // pred_region
      // Predicated region
      $region25: #{jvp__.3} parent=23 // pred_check
        %p216 = pneg %p44
      $region26: #{jvp__.3} parent=23 // pred_check_branch
        %218 = sbr.rel (%p216) target = $region28
      $region27: #{jvp__.3} parent=23 // pred_region
        %s219 = smul.u32 32, %s19
        %p220 = scmp.lt.s32.totalorder %s219, 63
        %s221 = scalar_select %p220, %s219, 63
        %s222 = smul.addr %s221, 4
        %s223 = scalar_lea.vmem %s0, %s222
        %s224 = smul.u32 32, %s19
      $region28: #{jvp__.3} parent=23 // pred_fallthru
        _
      // Predicated region
      $region29: #{jvp__.3} parent=23 // pred_check
        %p225 = pneg %p96
      $region30: #{jvp__.3} parent=23 // pred_check_branch
        %227 = sbr.rel (%p225) target = $region32
      $region31: #{jvp__.3} parent=23 // pred_region
        %s228 = smul.u32 32, %s19
        %p229 = scmp.lt.s32.totalorder %s228, 63
        %s230 = scalar_select %p229, %s228, 63
        %s231 = smul.addr %s230, 8
        %s232 = scalar_lea.vmem %s2, %s231
        %s233 = smul.u32 32, %s19
      $region32: #{jvp__.3} parent=23 // pred_fallthru
        _
    $region24: #{jvp__.3} parent=5 // pred_fallthru
      _
    %p234 = scmp.le.s32.totalorder 1, %s12
    %p235 = scmp.lt.s32.totalorder %s12, 3
    %p236 = pnand %p234, %p235
    %p237 = pneg %p236
    // Predicated region
    $region33: #{jvp__.3} parent=5 // pred_check
      _
    $region34: #{jvp__.3} parent=5 // pred_check_branch
      %239 = sbr.rel (%p236) target = $region36
    $region35: #{jvp__.3} parent=5 // pred_region
      %s240 = ssub.s32 %s12, 1
      %s241 = smul.u32 32, %s21
      %p242 = scmp.lt.s32.totalorder %s241, 63
      %s243 = scalar_select %p242, %s241, 63
      %s244 = smul.addr %s243, 4
      %s245 = scalar_lea.vmem %s0, %s244
      %p246 = pneg %p50
      %p247 = pneg %p47
      %s248 = smul.u32 4, %s22
      %p249 = scmp.lt.s32.totalorder %s248, 3
      %s250 = scalar_select %p249, %s248, 3
      %s251 = smul.addr %s250, 4
      %s252 = scalar_lea.vmem %s1, %s251
      %p253 = pneg %p76
      %p254 = pneg %p73
      %s255 = smul.u32 32, %s21
      %p256 = scmp.lt.s32.totalorder %s255, 63
      %s257 = scalar_select %p256, %s255, 63
      %s258 = smul.addr %s257, 8
      %s259 = scalar_lea.vmem %s2, %s258
      %p260 = pneg %p102
      %p261 = pneg %p99
      %s262 = smul.u32 4, %s22
      %p263 = scmp.lt.s32.totalorder %s262, 3
      %s264 = scalar_select %p263, %s262, 3
      %s265 = scalar_lea.vmem %s3, %s264
      %p266 = pneg %p128
      %p267 = pneg %p125
      %p268 = pneg %p154
      %p269 = pneg %p151
      %p270 = scmp.lt.s32.totalorder %s21, 1
      %s271 = scalar_select %p270, %s21, 1
      %s272 = smul.addr %s271, 4
      %s273 = smul.addr %s272, 8
      %s274 = scalar_lea.vmem %s4, %s273
      %p275 = pneg %p180
      %p276 = pneg %p177
      %p277 = scmp.lt.s32.totalorder %s21, 1
      %s278 = scalar_select %p277, %s21, 1
      %s279 = smul.addr %s278, 4
      %s280 = smul.addr %s279, 8
      %s281 = scalar_lea.vmem %s5, %s280
      %s282 = smul.u32 32, %s21
      %p283 = scmp.lt.s32.totalorder %s282, 63
      %s284 = scalar_select %p283, %s282, 63
      %s285 = smul.addr %s284, 4
      %s286 = scalar_lea.vmem %s0, %s285
      %s287 = smul.u32 32, %s21
      %s288 = smul.u32 4, %s22
      %p289 = scmp.lt.s32.totalorder %s288, 3
      %s290 = scalar_select %p289, %s288, 3
      %s291 = smul.addr %s290, 4
      %s292 = scalar_lea.vmem %s1, %s291
      %s293 = smul.u32 4, %s22
      %s294 = smul.u32 32, %s21
      %p295 = scmp.lt.s32.totalorder %s294, 63
      %s296 = scalar_select %p295, %s294, 63
      %s297 = smul.addr %s296, 8
      %s298 = scalar_lea.vmem %s2, %s297
      %s299 = smul.u32 32, %s21
      %s300 = smul.u32 4, %s22
      %p301 = scmp.lt.s32.totalorder %s300, 3
      %s302 = scalar_select %p301, %s300, 3
      %s303 = scalar_lea.vmem %s3, %s302
      %s304 = smul.u32 4, %s22
      %p305 = scmp.lt.s32.totalorder %s21, 1
      %s306 = scalar_select %p305, %s21, 1
      %s307 = smul.addr %s306, 4
      %s308 = smul.addr %s307, 8
      %s309 = scalar_lea.vmem %s4, %s308
      %p310 = scmp.lt.s32.totalorder %s21, 1
      %s311 = scalar_select %p310, %s21, 1
      %s312 = smul.addr %s311, 4
      %s313 = smul.addr %s312, 8
      %s314 = scalar_lea.vmem %s5, %s313
      %p316 = scmp.eq.s32.totalorder %s22, 0
      // Predicated region
      $region37: #{jvp__.3} parent=35 // pred_check
        %p317 = pneg %p316
      $region38: #{jvp__.3} parent=35 // pred_check_branch
        %319 = sbr.rel (%p317) target = $region40
      $region39: #{jvp__.3} parent=35 // pred_region
        %320 = vst [vmem:[%s309] sm:$0xff] 0.0
        %321 = vst [vmem:[%s309 + $0x8] sm:$0xff] 0.0
        %322 = vst [vmem:[%s309 + $0x10] sm:$0xff] 0.0
        %323 = vst [vmem:[%s309 + $0x18] sm:$0xff] 0.0
        %324 = vst [vmem:[%s314] sm:$0xff] 0.0
        %325 = vst [vmem:[%s314 + $0x8] sm:$0xff] 0.0
        %326 = vst [vmem:[%s314 + $0x10] sm:$0xff] 0.0
        %327 = vst [vmem:[%s314 + $0x18] sm:$0xff] 0.0
      $region40: #{jvp__.3} parent=35 // pred_fallthru
        _
      %v328 = vld [vmem:[%s286] sm:$0xf]
      %v329 = vld [vmem:[%s286 + $0x4] sm:$0xf]
      %v330 = vld [vmem:[%s286 + $0x8] sm:$0xf]
      %v331 = vld [vmem:[%s286 + $0xc] sm:$0xf]
      %v332 = vld [vmem:[%s286 + $0x10] sm:$0xf]
      %v333 = vld [vmem:[%s286 + $0x14] sm:$0xf]
      %v334 = vld [vmem:[%s286 + $0x18] sm:$0xf]
      %v335 = vld [vmem:[%s286 + $0x1c] sm:$0xf]
      %v336 = vld [vmem:[%s286 + $0x20] sm:$0xf]
      %v337 = vld [vmem:[%s286 + $0x24] sm:$0xf]
      %v338 = vld [vmem:[%s286 + $0x28] sm:$0xf]
      %v339 = vld [vmem:[%s286 + $0x2c] sm:$0xf]
      %v340 = vld [vmem:[%s286 + $0x30] sm:$0xf]
      %v341 = vld [vmem:[%s286 + $0x34] sm:$0xf]
      %v342 = vld [vmem:[%s286 + $0x38] sm:$0xf]
      %v343 = vld [vmem:[%s286 + $0x3c] sm:$0xf]
      %v344 = vld [vmem:[%s286 + $0x40] sm:$0xf]
      %v345 = vld [vmem:[%s286 + $0x44] sm:$0xf]
      %v346 = vld [vmem:[%s286 + $0x48] sm:$0xf]
      %v347 = vld [vmem:[%s286 + $0x4c] sm:$0xf]
      %v348 = vld [vmem:[%s286 + $0x50] sm:$0xf]
      %v349 = vld [vmem:[%s286 + $0x54] sm:$0xf]
      %v350 = vld [vmem:[%s286 + $0x58] sm:$0xf]
      %v351 = vld [vmem:[%s286 + $0x5c] sm:$0xf]
      %v352 = vld [vmem:[%s286 + $0x60] sm:$0xf]
      %v353 = vld [vmem:[%s286 + $0x64] sm:$0xf]
      %v354 = vld [vmem:[%s286 + $0x68] sm:$0xf]
      %v355 = vld [vmem:[%s286 + $0x6c] sm:$0xf]
      %v356 = vld [vmem:[%s286 + $0x70] sm:$0xf]
      %v357 = vld [vmem:[%s286 + $0x74] sm:$0xf]
      %v358 = vld [vmem:[%s286 + $0x78] sm:$0xf]
      %v359 = vld [vmem:[%s286 + $0x7c] sm:$0xf]
      %v360 = vld [vmem:[%s292] sm:$0xff]
      %v361 = vld [vmem:[%s292 + $0x8] sm:$0xff]
      %v362 = vld [vmem:[%s292 + $0x10] sm:$0xff]
      %v363 = vld [vmem:[%s292 + $0x18] sm:$0xff]
      %v364 = vld [vmem:[%s292 + $0x20] sm:$0xff]
      %v365 = vld [vmem:[%s292 + $0x28] sm:$0xff]
      %v366 = vld [vmem:[%s292 + $0x30] sm:$0xff]
      %v367 = vld [vmem:[%s292 + $0x38] sm:$0xff]
      %v368 = vld [vmem:[%s292 + $0x40] sm:$0xff]
      %v369 = vld [vmem:[%s292 + $0x48] sm:$0xff]
      %v370 = vld [vmem:[%s292 + $0x50] sm:$0xff]
      %v371 = vld [vmem:[%s292 + $0x58] sm:$0xff]
      %v372 = vld [vmem:[%s292 + $0x60] sm:$0xff]
      %v373 = vld [vmem:[%s292 + $0x68] sm:$0xff]
      %v374 = vld [vmem:[%s292 + $0x70] sm:$0xff]
      %v375 = vld [vmem:[%s292 + $0x78] sm:$0xff]
      %v376 = vld [vmem:[%s292 + $0x80] sm:$0xff]
      %v377 = vld [vmem:[%s292 + $0x88] sm:$0xff]
      %v378 = vld [vmem:[%s292 + $0x90] sm:$0xff]
      %v379 = vld [vmem:[%s292 + $0x98] sm:$0xff]
      %v380 = vld [vmem:[%s292 + $0xa0] sm:$0xff]
      %v381 = vld [vmem:[%s292 + $0xa8] sm:$0xff]
      %v382 = vld [vmem:[%s292 + $0xb0] sm:$0xff]
      %v383 = vld [vmem:[%s292 + $0xb8] sm:$0xff]
      %v384 = vld [vmem:[%s292 + $0xc0] sm:$0xff]
      %v385 = vld [vmem:[%s292 + $0xc8] sm:$0xff]
      %v386 = vld [vmem:[%s292 + $0xd0] sm:$0xff]
      %v387 = vld [vmem:[%s292 + $0xd8] sm:$0xff]
      %v388 = vld [vmem:[%s292 + $0xe0] sm:$0xff]
      %v389 = vld [vmem:[%s292 + $0xe8] sm:$0xff]
      %v390 = vld [vmem:[%s292 + $0xf0] sm:$0xff]
      %v391 = vld [vmem:[%s292 + $0xf8] sm:$0xff]
      %v424 = vunpack.c.l.b16 %v328
      %v425 = vunpack.c.l.b16 %v329
      %v426 = vunpack.c.l.b16 %v330
      %v427 = vunpack.c.l.b16 %v331
      %v428 = vunpack.c.l.b16 %v332
      %v429 = vunpack.c.l.b16 %v333
      %v430 = vunpack.c.l.b16 %v334
      %v431 = vunpack.c.l.b16 %v335
      %v432 = vunpack.c.l.b16 %v336
      %v433 = vunpack.c.l.b16 %v337
      %v434 = vunpack.c.l.b16 %v338
      %v435 = vunpack.c.l.b16 %v339
      %v436 = vunpack.c.l.b16 %v340
      %v437 = vunpack.c.l.b16 %v341
      %v438 = vunpack.c.l.b16 %v342
      %v439 = vunpack.c.l.b16 %v343
      %v440 = vunpack.c.l.b16 %v344
      %v441 = vunpack.c.l.b16 %v345
      %v442 = vunpack.c.l.b16 %v346
      %v443 = vunpack.c.l.b16 %v347
      %v444 = vunpack.c.l.b16 %v348
      %v445 = vunpack.c.l.b16 %v349
      %v446 = vunpack.c.l.b16 %v350
      %v447 = vunpack.c.l.b16 %v351
      %v448 = vunpack.c.l.b16 %v352
      %v449 = vunpack.c.l.b16 %v353
      %v450 = vunpack.c.l.b16 %v354
      %v451 = vunpack.c.l.b16 %v355
      %v452 = vunpack.c.l.b16 %v356
      %v453 = vunpack.c.l.b16 %v357
      %v454 = vunpack.c.l.b16 %v358
      %v455 = vunpack.c.l.b16 %v359
      %v456 = vpack.c.b16 %v425, %v424
      %v457 = vpack.c.b16 %v427, %v426
      %v458 = vpack.c.b16 %v429, %v428
      %v459 = vpack.c.b16 %v431, %v430
      %v460 = vpack.c.b16 %v433, %v432
      %v461 = vpack.c.b16 %v435, %v434
      %v462 = vpack.c.b16 %v437, %v436
      %v463 = vpack.c.b16 %v439, %v438
      %v464 = vpack.c.b16 %v441, %v440
      %v465 = vpack.c.b16 %v443, %v442
      %v466 = vpack.c.b16 %v445, %v444
      %v467 = vpack.c.b16 %v447, %v446
      %v468 = vpack.c.b16 %v449, %v448
      %v469 = vpack.c.b16 %v451, %v450
      %v470 = vpack.c.b16 %v453, %v452
      %v471 = vpack.c.b16 %v455, %v454
      %v520 = vunpack.c.l.b16 %v360
      %v521 = vunpack.c.h.b16 %v360
      %v522 = vunpack.c.l.b16 %v361
      %v523 = vunpack.c.h.b16 %v361
      %v524 = vunpack.c.l.b16 %v362
      %v525 = vunpack.c.h.b16 %v362
      %v526 = vunpack.c.l.b16 %v363
      %v527 = vunpack.c.h.b16 %v363
      %v528 = vunpack.c.l.b16 %v364
      %v529 = vunpack.c.h.b16 %v364
      %v530 = vunpack.c.l.b16 %v365
      %v531 = vunpack.c.h.b16 %v365
      %v532 = vunpack.c.l.b16 %v366
      %v533 = vunpack.c.h.b16 %v366
      %v534 = vunpack.c.l.b16 %v367
      %v535 = vunpack.c.h.b16 %v367
      %v536 = vunpack.c.l.b16 %v368
      %v537 = vunpack.c.h.b16 %v368
      %v538 = vunpack.c.l.b16 %v369
      %v539 = vunpack.c.h.b16 %v369
      %v540 = vunpack.c.l.b16 %v370
      %v541 = vunpack.c.h.b16 %v370
      %v542 = vunpack.c.l.b16 %v371
      %v543 = vunpack.c.h.b16 %v371
      %v544 = vunpack.c.l.b16 %v372
      %v545 = vunpack.c.h.b16 %v372
      %v546 = vunpack.c.l.b16 %v373
      %v547 = vunpack.c.h.b16 %v373
      %v548 = vunpack.c.l.b16 %v374
      %v549 = vunpack.c.h.b16 %v374
      %v550 = vunpack.c.l.b16 %v375
      %v551 = vunpack.c.h.b16 %v375
      %v552 = vunpack.c.l.b16 %v376
      %v553 = vunpack.c.h.b16 %v376
      %v554 = vunpack.c.l.b16 %v377
      %v555 = vunpack.c.h.b16 %v377
      %v556 = vunpack.c.l.b16 %v378
      %v557 = vunpack.c.h.b16 %v378
      %v558 = vunpack.c.l.b16 %v379
      %v559 = vunpack.c.h.b16 %v379
      %v560 = vunpack.c.l.b16 %v380
      %v561 = vunpack.c.h.b16 %v380
      %v562 = vunpack.c.l.b16 %v381
      %v563 = vunpack.c.h.b16 %v381
      %v564 = vunpack.c.l.b16 %v382
      %v565 = vunpack.c.h.b16 %v382
      %v566 = vunpack.c.l.b16 %v383
      %v567 = vunpack.c.h.b16 %v383
      %v568 = vunpack.c.l.b16 %v384
      %v569 = vunpack.c.h.b16 %v384
      %v570 = vunpack.c.l.b16 %v385
      %v571 = vunpack.c.h.b16 %v385
      %v572 = vunpack.c.l.b16 %v386
      %v573 = vunpack.c.h.b16 %v386
      %v574 = vunpack.c.l.b16 %v387
      %v575 = vunpack.c.h.b16 %v387
      %v576 = vunpack.c.l.b16 %v388
      %v577 = vunpack.c.h.b16 %v388
      %v578 = vunpack.c.l.b16 %v389
      %v579 = vunpack.c.h.b16 %v389
      %v580 = vunpack.c.l.b16 %v390
      %v581 = vunpack.c.h.b16 %v390
      %v582 = vunpack.c.l.b16 %v391
      %v583 = vunpack.c.h.b16 %v391
      %v584 = vpack.c.b16 %v524, %v520
      %v585 = vpack.c.b16 %v525, %v521
      %v586 = vpack.c.b16 %v526, %v522
      %v587 = vpack.c.b16 %v527, %v523
      %v588 = vpack.c.b16 %v532, %v528
      %v589 = vpack.c.b16 %v533, %v529
      %v590 = vpack.c.b16 %v534, %v530
      %v591 = vpack.c.b16 %v535, %v531
      %v592 = vpack.c.b16 %v540, %v536
      %v593 = vpack.c.b16 %v541, %v537
      %v594 = vpack.c.b16 %v542, %v538
      %v595 = vpack.c.b16 %v543, %v539
      %v596 = vpack.c.b16 %v548, %v544
      %v597 = vpack.c.b16 %v549, %v545
      %v598 = vpack.c.b16 %v550, %v546
      %v599 = vpack.c.b16 %v551, %v547
      %v600 = vpack.c.b16 %v556, %v552
      %v601 = vpack.c.b16 %v557, %v553
      %v602 = vpack.c.b16 %v558, %v554
      %v603 = vpack.c.b16 %v559, %v555
      %v604 = vpack.c.b16 %v564, %v560
      %v605 = vpack.c.b16 %v565, %v561
      %v606 = vpack.c.b16 %v566, %v562
      %v607 = vpack.c.b16 %v567, %v563
      %v608 = vpack.c.b16 %v572, %v568
      %v609 = vpack.c.b16 %v573, %v569
      %v610 = vpack.c.b16 %v574, %v570
      %v611 = vpack.c.b16 %v575, %v571
      %v612 = vpack.c.b16 %v580, %v576
      %v613 = vpack.c.b16 %v581, %v577
      %v614 = vpack.c.b16 %v582, %v578
      %v615 = vpack.c.b16 %v583, %v579
      %648 = vmatprep.subr.bf16.mxu0 %v585
      %649 = vmatpush1.bf16.msra.mxu0 %v584
      %650 = vmatprep.subr.bf16.mxu0 %v589
      %651 = vmatpush1.bf16.msra.mxu0 %v588
      %652 = vmatprep.subr.bf16.mxu0 %v593
      %653 = vmatpush1.bf16.msra.mxu0 %v592
      %654 = vmatprep.subr.bf16.mxu0 %v597
      %655 = vmatpush1.bf16.msra.mxu0 %v596
      %656 = vmatprep.subr.bf16.mxu0 %v601
      %657 = vmatpush1.bf16.msra.mxu0 %v600
      %658 = vmatprep.subr.bf16.mxu0 %v605
      %659 = vmatpush1.bf16.msra.mxu0 %v604
      %660 = vmatprep.subr.bf16.mxu0 %v609
      %661 = vmatpush1.bf16.msra.mxu0 %v608
      %662 = vmatprep.subr.bf16.mxu0 %v613
      %663 = vmatpush1.bf16.msra.mxu0 %v612
      %664 = vmatprep.subr.bf16.mxu0 0
      %665 = vmatpush1.bf16.msra.mxu0 0
      %666 = vmatprep.subr.bf16.mxu0 0
      %667 = vmatpush1.bf16.msra.mxu0 0
      %668 = vmatprep.subr.bf16.mxu0 0
      %669 = vmatpush1.bf16.msra.mxu0 0
      %670 = vmatprep.subr.bf16.mxu0 0
      %671 = vmatpush1.bf16.msra.mxu0 0
      %672 = vmatprep.subr.bf16.mxu0 0
      %673 = vmatpush1.bf16.msra.mxu0 0
      %674 = vmatprep.subr.bf16.mxu0 0
      %675 = vmatpush1.bf16.msra.mxu0 0
      %676 = vmatprep.subr.bf16.mxu0 0
      %677 = vmatpush1.bf16.msra.mxu0 0
      %678 = vmatprep.subr.bf16.mxu0 0
      %679 = vmatpush1.bf16.msra.mxu0 0
      %680 = vmatprep.mubr.bf16.mxu0 0
      %681 = vmatmul.mubr.bf16.gmra.mrb[0].mxu0 %v456
      %v682 = vpop.f32.mrb[0].mxu0
      %v683 = vadd.f32 0.0, %v682
      %v684 = vpop.f32.mrb[0].mxu0
      %v685 = vadd.f32 0.0, %v684
      %v686 = vpop.f32.mrb[0].mxu0
      %v687 = vadd.f32 0.0, %v686
      %v688 = vpop.f32.mrb[0].mxu0
      %v689 = vadd.f32 0.0, %v688
      %690 = vmatprep.mubr.bf16.mxu0 0
      %691 = vmatmul.mubr.bf16.gmra.mrb[0].mxu0 %v457
      %v692 = vpop.f32.mrb[0].mxu0
      %v693 = vadd.f32 0.0, %v692
      %v694 = vpop.f32.mrb[0].mxu0
      %v695 = vadd.f32 0.0, %v694
      %v696 = vpop.f32.mrb[0].mxu0
      %v697 = vadd.f32 0.0, %v696
      %v698 = vpop.f32.mrb[0].mxu0
      %v699 = vadd.f32 0.0, %v698
      %700 = vmatprep.mubr.bf16.mxu0 0
      %701 = vmatmul.mubr.bf16.gmra.mrb[0].mxu0 %v458
      %v702 = vpop.f32.mrb[0].mxu0
      %v703 = vadd.f32 0.0, %v702
      %v704 = vpop.f32.mrb[0].mxu0
      %v705 = vadd.f32 0.0, %v704
      %v706 = vpop.f32.mrb[0].mxu0
      %v707 = vadd.f32 0.0, %v706
      %v708 = vpop.f32.mrb[0].mxu0
      %v709 = vadd.f32 0.0, %v708
      %710 = vmatprep.mubr.bf16.mxu0 0
      %711 = vmatmul.mubr.bf16.gmra.mrb[0].mxu0 %v459
      %v712 = vpop.f32.mrb[0].mxu0
      %v713 = vadd.f32 0.0, %v712
      %v714 = vpop.f32.mrb[0].mxu0
      %v715 = vadd.f32 0.0, %v714
      %v716 = vpop.f32.mrb[0].mxu0
      %v717 = vadd.f32 0.0, %v716
      %v718 = vpop.f32.mrb[0].mxu0
      %v719 = vadd.f32 0.0, %v718
      %720 = vmatprep.mubr.bf16.mxu0 0
      %721 = vmatmul.mubr.bf16.gmra.mrb[0].mxu0 %v460
      %v722 = vpop.f32.mrb[0].mxu0
      %v723 = vadd.f32 0.0, %v722
      %v724 = vpop.f32.mrb[0].mxu0
      %v725 = vadd.f32 0.0, %v724
      %v726 = vpop.f32.mrb[0].mxu0
      %v727 = vadd.f32 0.0, %v726
      %v728 = vpop.f32.mrb[0].mxu0
      %v729 = vadd.f32 0.0, %v728
      %730 = vmatprep.mubr.bf16.mxu0 0
      %731 = vmatmul.mubr.bf16.gmra.mrb[0].mxu0 %v461
      %v732 = vpop.f32.mrb[0].mxu0
      %v733 = vadd.f32 0.0, %v732
      %v734 = vpop.f32.mrb[0].mxu0
      %v735 = vadd.f32 0.0, %v734
      %v736 = vpop.f32.mrb[0].mxu0
      %v737 = vadd.f32 0.0, %v736
      %v738 = vpop.f32.mrb[0].mxu0
      %v739 = vadd.f32 0.0, %v738
      %740 = vmatprep.mubr.bf16.mxu0 0
      %741 = vmatmul.mubr.bf16.gmra.mrb[0].mxu0 %v462
      %v742 = vpop.f32.mrb[0].mxu0
      %v743 = vadd.f32 0.0, %v742
      %v744 = vpop.f32.mrb[0].mxu0
      %v745 = vadd.f32 0.0, %v744
      %v746 = vpop.f32.mrb[0].mxu0
      %v747 = vadd.f32 0.0, %v746
      %v748 = vpop.f32.mrb[0].mxu0
      %v749 = vadd.f32 0.0, %v748
      %750 = vmatprep.mubr.bf16.mxu0 0
      %751 = vmatmul.mubr.bf16.gmra.mrb[0].mxu0 %v463
      %v752 = vpop.f32.mrb[0].mxu0
      %v753 = vadd.f32 0.0, %v752
      %v754 = vpop.f32.mrb[0].mxu0
      %v755 = vadd.f32 0.0, %v754
      %v756 = vpop.f32.mrb[0].mxu0
      %v757 = vadd.f32 0.0, %v756
      %v758 = vpop.f32.mrb[0].mxu0
      %v759 = vadd.f32 0.0, %v758
      %760 = vmatprep.mubr.bf16.mxu0 0
      %761 = vmatmul.mubr.bf16.gmra.mrb[0].mxu0 %v464
      %v762 = vpop.f32.mrb[0].mxu0
      %v763 = vadd.f32 0.0, %v762
      %v764 = vpop.f32.mrb[0].mxu0
      %v765 = vadd.f32 0.0, %v764
      %v766 = vpop.f32.mrb[0].mxu0
      %v767 = vadd.f32 0.0, %v766
      %v768 = vpop.f32.mrb[0].mxu0
      %v769 = vadd.f32 0.0, %v768
      %770 = vmatprep.mubr.bf16.mxu0 0
      %771 = vmatmul.mubr.bf16.gmra.mrb[0].mxu0 %v465
      %v772 = vpop.f32.mrb[0].mxu0
      %v773 = vadd.f32 0.0, %v772
      %v774 = vpop.f32.mrb[0].mxu0
      %v775 = vadd.f32 0.0, %v774
      %v776 = vpop.f32.mrb[0].mxu0
      %v777 = vadd.f32 0.0, %v776
      %v778 = vpop.f32.mrb[0].mxu0
      %v779 = vadd.f32 0.0, %v778
      %780 = vmatprep.mubr.bf16.mxu0 0
      %781 = vmatmul.mubr.bf16.gmra.mrb[0].mxu0 %v466
      %v782 = vpop.f32.mrb[0].mxu0
      %v783 = vadd.f32 0.0, %v782
      %v784 = vpop.f32.mrb[0].mxu0
      %v785 = vadd.f32 0.0, %v784
      %v786 = vpop.f32.mrb[0].mxu0
      %v787 = vadd.f32 0.0, %v786
      %v788 = vpop.f32.mrb[0].mxu0
      %v789 = vadd.f32 0.0, %v788
      %790 = vmatprep.mubr.bf16.mxu0 0
      %791 = vmatmul.mubr.bf16.gmra.mrb[0].mxu0 %v467
      %v792 = vpop.f32.mrb[0].mxu0
      %v793 = vadd.f32 0.0, %v792
      %v794 = vpop.f32.mrb[0].mxu0
      %v795 = vadd.f32 0.0, %v794
      %v796 = vpop.f32.mrb[0].mxu0
      %v797 = vadd.f32 0.0, %v796
      %v798 = vpop.f32.mrb[0].mxu0
      %v799 = vadd.f32 0.0, %v798
      %800 = vmatprep.mubr.bf16.mxu0 0
      %801 = vmatmul.mubr.bf16.gmra.mrb[0].mxu0 %v468
      %v802 = vpop.f32.mrb[0].mxu0
      %v803 = vadd.f32 0.0, %v802
      %v804 = vpop.f32.mrb[0].mxu0
      %v805 = vadd.f32 0.0, %v804
      %v806 = vpop.f32.mrb[0].mxu0
      %v807 = vadd.f32 0.0, %v806
      %v808 = vpop.f32.mrb[0].mxu0
      %v809 = vadd.f32 0.0, %v808
      %810 = vmatprep.mubr.bf16.mxu0 0
      %811 = vmatmul.mubr.bf16.gmra.mrb[0].mxu0 %v469
      %v812 = vpop.f32.mrb[0].mxu0
      %v813 = vadd.f32 0.0, %v812
      %v814 = vpop.f32.mrb[0].mxu0
      %v815 = vadd.f32 0.0, %v814
      %v816 = vpop.f32.mrb[0].mxu0
      %v817 = vadd.f32 0.0, %v816
      %v818 = vpop.f32.mrb[0].mxu0
      %v819 = vadd.f32 0.0, %v818
      %820 = vmatprep.mubr.bf16.mxu0 0
      %821 = vmatmul.mubr.bf16.gmra.mrb[0].mxu0 %v470
      %v822 = vpop.f32.mrb[0].mxu0
      %v823 = vadd.f32 0.0, %v822
      %v824 = vpop.f32.mrb[0].mxu0
      %v825 = vadd.f32 0.0, %v824
      %v826 = vpop.f32.mrb[0].mxu0
      %v827 = vadd.f32 0.0, %v826
      %v828 = vpop.f32.mrb[0].mxu0
      %v829 = vadd.f32 0.0, %v828
      %830 = vmatprep.mubr.bf16.mxu0 0
      %831 = vmatmul.mubr.bf16.gmra.mrb[0].mxu0 %v471
      %v832 = vpop.f32.mrb[0].mxu0
      %v833 = vadd.f32 0.0, %v832
      %v834 = vpop.f32.mrb[0].mxu0
      %v835 = vadd.f32 0.0, %v834
      %v836 = vpop.f32.mrb[0].mxu0
      %v837 = vadd.f32 0.0, %v836
      %v838 = vpop.f32.mrb[0].mxu0
      %v839 = vadd.f32 0.0, %v838
      %840 = vdwg.mxu0
      %841 = vmatprep.subr.bf16.mxu0 %v587
      %842 = vmatpush1.bf16.msra.mxu0 %v586
      %843 = vmatprep.subr.bf16.mxu0 %v591
      %844 = vmatpush1.bf16.msra.mxu0 %v590
      %845 = vmatprep.subr.bf16.mxu0 %v595
      %846 = vmatpush1.bf16.msra.mxu0 %v594
      %847 = vmatprep.subr.bf16.mxu0 %v599
      %848 = vmatpush1.bf16.msra.mxu0 %v598
      %849 = vmatprep.subr.bf16.mxu0 %v603
      %850 = vmatpush1.bf16.msra.mxu0 %v602
      %851 = vmatprep.subr.bf16.mxu0 %v607
      %852 = vmatpush1.bf16.msra.mxu0 %v606
      %853 = vmatprep.subr.bf16.mxu0 %v611
      %854 = vmatpush1.bf16.msra.mxu0 %v610
      %855 = vmatprep.subr.bf16.mxu0 %v615
      %856 = vmatpush1.bf16.msra.mxu0 %v614
      %857 = vmatprep.subr.bf16.mxu0 0
      %858 = vmatpush1.bf16.msra.mxu0 0
      %859 = vmatprep.subr.bf16.mxu0 0
      %860 = vmatpush1.bf16.msra.mxu0 0
      %861 = vmatprep.subr.bf16.mxu0 0
      %862 = vmatpush1.bf16.msra.mxu0 0
      %863 = vmatprep.subr.bf16.mxu0 0
      %864 = vmatpush1.bf16.msra.mxu0 0
      %865 = vmatprep.subr.bf16.mxu0 0
      %866 = vmatpush1.bf16.msra.mxu0 0
      %867 = vmatprep.subr.bf16.mxu0 0
      %868 = vmatpush1.bf16.msra.mxu0 0
      %869 = vmatprep.subr.bf16.mxu0 0
      %870 = vmatpush1.bf16.msra.mxu0 0
      %871 = vmatprep.subr.bf16.mxu0 0
      %872 = vmatpush1.bf16.msra.mxu0 0
      %873 = vmatprep.mubr.bf16.mxu0 0
      %874 = vmatmul.mubr.bf16.gmra.mrb[0].mxu0 %v456
      %v875 = vpop.f32.mrb[0].mxu0
      %v876 = vadd.f32 0.0, %v875
      %v877 = vpop.f32.mrb[0].mxu0
      %v878 = vadd.f32 0.0, %v877
      %v879 = vpop.f32.mrb[0].mxu0
      %v880 = vadd.f32 0.0, %v879
      %v881 = vpop.f32.mrb[0].mxu0
      %v882 = vadd.f32 0.0, %v881
      %883 = vmatprep.mubr.bf16.mxu0 0
      %884 = vmatmul.mubr.bf16.gmra.mrb[0].mxu0 %v457
      %v885 = vpop.f32.mrb[0].mxu0
      %v886 = vadd.f32 0.0, %v885
      %v887 = vpop.f32.mrb[0].mxu0
      %v888 = vadd.f32 0.0, %v887
      %v889 = vpop.f32.mrb[0].mxu0
      %v890 = vadd.f32 0.0, %v889
      %v891 = vpop.f32.mrb[0].mxu0
      %v892 = vadd.f32 0.0, %v891
      %893 = vmatprep.mubr.bf16.mxu0 0
      %894 = vmatmul.mubr.bf16.gmra.mrb[0].mxu0 %v458
      %v895 = vpop.f32.mrb[0].mxu0
      %v896 = vadd.f32 0.0, %v895
      %v897 = vpop.f32.mrb[0].mxu0
      %v898 = vadd.f32 0.0, %v897
      %v899 = vpop.f32.mrb[0].mxu0
      %v900 = vadd.f32 0.0, %v899
      %v901 = vpop.f32.mrb[0].mxu0
      %v902 = vadd.f32 0.0, %v901
      %903 = vmatprep.mubr.bf16.mxu0 0
      %904 = vmatmul.mubr.bf16.gmra.mrb[0].mxu0 %v459
      %v905 = vpop.f32.mrb[0].mxu0
      %v906 = vadd.f32 0.0, %v905
      %v907 = vpop.f32.mrb[0].mxu0
      %v908 = vadd.f32 0.0, %v907
      %v909 = vpop.f32.mrb[0].mxu0
      %v910 = vadd.f32 0.0, %v909
      %v911 = vpop.f32.mrb[0].mxu0
      %v912 = vadd.f32 0.0, %v911
      %913 = vmatprep.mubr.bf16.mxu0 0
      %914 = vmatmul.mubr.bf16.gmra.mrb[0].mxu0 %v460
      %v915 = vpop.f32.mrb[0].mxu0
      %v916 = vadd.f32 0.0, %v915
      %v917 = vpop.f32.mrb[0].mxu0
      %v918 = vadd.f32 0.0, %v917
      %v919 = vpop.f32.mrb[0].mxu0
      %v920 = vadd.f32 0.0, %v919
      %v921 = vpop.f32.mrb[0].mxu0
      %v922 = vadd.f32 0.0, %v921
      %923 = vmatprep.mubr.bf16.mxu0 0
      %924 = vmatmul.mubr.bf16.gmra.mrb[0].mxu0 %v461
      %v925 = vpop.f32.mrb[0].mxu0
      %v926 = vadd.f32 0.0, %v925
      %v927 = vpop.f32.mrb[0].mxu0
      %v928 = vadd.f32 0.0, %v927
      %v929 = vpop.f32.mrb[0].mxu0
      %v930 = vadd.f32 0.0, %v929
      %v931 = vpop.f32.mrb[0].mxu0
      %v932 = vadd.f32 0.0, %v931
      %933 = vmatprep.mubr.bf16.mxu0 0
      %934 = vmatmul.mubr.bf16.gmra.mrb[0].mxu0 %v462
      %v935 = vpop.f32.mrb[0].mxu0
      %v936 = vadd.f32 0.0, %v935
      %v937 = vpop.f32.mrb[0].mxu0
      %v938 = vadd.f32 0.0, %v937
      %v939 = vpop.f32.mrb[0].mxu0
      %v940 = vadd.f32 0.0, %v939
      %v941 = vpop.f32.mrb[0].mxu0
      %v942 = vadd.f32 0.0, %v941
      %943 = vmatprep.mubr.bf16.mxu0 0
      %944 = vmatmul.mubr.bf16.gmra.mrb[0].mxu0 %v463
      %v945 = vpop.f32.mrb[0].mxu0
      %v946 = vadd.f32 0.0, %v945
      %v947 = vpop.f32.mrb[0].mxu0
      %v948 = vadd.f32 0.0, %v947
      %v949 = vpop.f32.mrb[0].mxu0
      %v950 = vadd.f32 0.0, %v949
      %v951 = vpop.f32.mrb[0].mxu0
      %v952 = vadd.f32 0.0, %v951
      %953 = vmatprep.mubr.bf16.mxu0 0
      %954 = vmatmul.mubr.bf16.gmra.mrb[0].mxu0 %v464
      %v955 = vpop.f32.mrb[0].mxu0
      %v956 = vadd.f32 0.0, %v955
      %v957 = vpop.f32.mrb[0].mxu0
      %v958 = vadd.f32 0.0, %v957
      %v959 = vpop.f32.mrb[0].mxu0
      %v960 = vadd.f32 0.0, %v959
      %v961 = vpop.f32.mrb[0].mxu0
      %v962 = vadd.f32 0.0, %v961
      %963 = vmatprep.mubr.bf16.mxu0 0
      %964 = vmatmul.mubr.bf16.gmra.mrb[0].mxu0 %v465
      %v965 = vpop.f32.mrb[0].mxu0
      %v966 = vadd.f32 0.0, %v965
      %v967 = vpop.f32.mrb[0].mxu0
      %v968 = vadd.f32 0.0, %v967
      %v969 = vpop.f32.mrb[0].mxu0
      %v970 = vadd.f32 0.0, %v969
      %v971 = vpop.f32.mrb[0].mxu0
      %v972 = vadd.f32 0.0, %v971
      %973 = vmatprep.mubr.bf16.mxu0 0
      %974 = vmatmul.mubr.bf16.gmra.mrb[0].mxu0 %v466
      %v975 = vpop.f32.mrb[0].mxu0
      %v976 = vadd.f32 0.0, %v975
      %v977 = vpop.f32.mrb[0].mxu0
      %v978 = vadd.f32 0.0, %v977
      %v979 = vpop.f32.mrb[0].mxu0
      %v980 = vadd.f32 0.0, %v979
      %v981 = vpop.f32.mrb[0].mxu0
      %v982 = vadd.f32 0.0, %v981
      %983 = vmatprep.mubr.bf16.mxu0 0
      %984 = vmatmul.mubr.bf16.gmra.mrb[0].mxu0 %v467
      %v985 = vpop.f32.mrb[0].mxu0
      %v986 = vadd.f32 0.0, %v985
      %v987 = vpop.f32.mrb[0].mxu0
      %v988 = vadd.f32 0.0, %v987
      %v989 = vpop.f32.mrb[0].mxu0
      %v990 = vadd.f32 0.0, %v989
      %v991 = vpop.f32.mrb[0].mxu0
      %v992 = vadd.f32 0.0, %v991
      %993 = vmatprep.mubr.bf16.mxu0 0
      %994 = vmatmul.mubr.bf16.gmra.mrb[0].mxu0 %v468
      %v995 = vpop.f32.mrb[0].mxu0
      %v996 = vadd.f32 0.0, %v995
      %v997 = vpop.f32.mrb[0].mxu0
      %v998 = vadd.f32 0.0, %v997
      %v999 = vpop.f32.mrb[0].mxu0
      %v1000 = vadd.f32 0.0, %v999
      %v1001 = vpop.f32.mrb[0].mxu0
      %v1002 = vadd.f32 0.0, %v1001
      %1003 = vmatprep.mubr.bf16.mxu0 0
      %1004 = vmatmul.mubr.bf16.gmra.mrb[0].mxu0 %v469
      %v1005 = vpop.f32.mrb[0].mxu0
      %v1006 = vadd.f32 0.0, %v1005
      %v1007 = vpop.f32.mrb[0].mxu0
      %v1008 = vadd.f32 0.0, %v1007
      %v1009 = vpop.f32.mrb[0].mxu0
      %v1010 = vadd.f32 0.0, %v1009
      %v1011 = vpop.f32.mrb[0].mxu0
      %v1012 = vadd.f32 0.0, %v1011
      %1013 = vmatprep.mubr.bf16.mxu0 0
      %1014 = vmatmul.mubr.bf16.gmra.mrb[0].mxu0 %v470
      %v1015 = vpop.f32.mrb[0].mxu0
      %v1016 = vadd.f32 0.0, %v1015
      %v1017 = vpop.f32.mrb[0].mxu0
      %v1018 = vadd.f32 0.0, %v1017
      %v1019 = vpop.f32.mrb[0].mxu0
      %v1020 = vadd.f32 0.0, %v1019
      %v1021 = vpop.f32.mrb[0].mxu0
      %v1022 = vadd.f32 0.0, %v1021
      %1023 = vmatprep.mubr.bf16.mxu0 0
      %1024 = vmatmul.mubr.bf16.gmra.mrb[0].mxu0 %v471
      %v1025 = vpop.f32.mrb[0].mxu0
      %v1026 = vadd.f32 0.0, %v1025
      %v1027 = vpop.f32.mrb[0].mxu0
      %v1028 = vadd.f32 0.0, %v1027
      %v1029 = vpop.f32.mrb[0].mxu0
      %v1030 = vadd.f32 0.0, %v1029
      %v1031 = vpop.f32.mrb[0].mxu0
      %v1032 = vadd.f32 0.0, %v1031
      %1033 = vdwg.mxu0
      %v1034 = vmul.f32 %v683, 2.0
      %v1035 = vmul.f32 %v685, 2.0
      %v1036 = vmul.f32 %v876, 2.0
      %v1037 = vmul.f32 %v878, 2.0
      %v1038 = vmul.f32 %v687, 2.0
      %v1039 = vmul.f32 %v689, 2.0
      %v1040 = vmul.f32 %v880, 2.0
      %v1041 = vmul.f32 %v882, 2.0
      %v1042 = vmul.f32 %v693, 2.0
      %v1043 = vmul.f32 %v695, 2.0
      %v1044 = vmul.f32 %v886, 2.0
      %v1045 = vmul.f32 %v888, 2.0
      %v1046 = vmul.f32 %v697, 2.0
      %v1047 = vmul.f32 %v699, 2.0
      %v1048 = vmul.f32 %v890, 2.0
      %v1049 = vmul.f32 %v892, 2.0
      %v1050 = vmul.f32 %v703, 2.0
      %v1051 = vmul.f32 %v705, 2.0
      %v1052 = vmul.f32 %v896, 2.0
      %v1053 = vmul.f32 %v898, 2.0
      %v1054 = vmul.f32 %v707, 2.0
      %v1055 = vmul.f32 %v709, 2.0
      %v1056 = vmul.f32 %v900, 2.0
      %v1057 = vmul.f32 %v902, 2.0
      %v1058 = vmul.f32 %v713, 2.0
      %v1059 = vmul.f32 %v715, 2.0
      %v1060 = vmul.f32 %v906, 2.0
      %v1061 = vmul.f32 %v908, 2.0
      %v1062 = vmul.f32 %v717, 2.0
      %v1063 = vmul.f32 %v719, 2.0
      %v1064 = vmul.f32 %v910, 2.0
      %v1065 = vmul.f32 %v912, 2.0
      %v1066 = vmul.f32 %v723, 2.0
      %v1067 = vmul.f32 %v725, 2.0
      %v1068 = vmul.f32 %v916, 2.0
      %v1069 = vmul.f32 %v918, 2.0
      %v1070 = vmul.f32 %v727, 2.0
      %v1071 = vmul.f32 %v729, 2.0
      %v1072 = vmul.f32 %v920, 2.0
      %v1073 = vmul.f32 %v922, 2.0
      %v1074 = vmul.f32 %v733, 2.0
      %v1075 = vmul.f32 %v735, 2.0
      %v1076 = vmul.f32 %v926, 2.0
      %v1077 = vmul.f32 %v928, 2.0
      %v1078 = vmul.f32 %v737, 2.0
      %v1079 = vmul.f32 %v739, 2.0
      %v1080 = vmul.f32 %v930, 2.0
      %v1081 = vmul.f32 %v932, 2.0
      %v1082 = vmul.f32 %v743, 2.0
      %v1083 = vmul.f32 %v745, 2.0
      %v1084 = vmul.f32 %v936, 2.0
      %v1085 = vmul.f32 %v938, 2.0
      %v1086 = vmul.f32 %v747, 2.0
      %v1087 = vmul.f32 %v749, 2.0
      %v1088 = vmul.f32 %v940, 2.0
      %v1089 = vmul.f32 %v942, 2.0
      %v1090 = vmul.f32 %v753, 2.0
      %v1091 = vmul.f32 %v755, 2.0
      %v1092 = vmul.f32 %v946, 2.0
      %v1093 = vmul.f32 %v948, 2.0
      %v1094 = vmul.f32 %v757, 2.0
      %v1095 = vmul.f32 %v759, 2.0
      %v1096 = vmul.f32 %v950, 2.0
      %v1097 = vmul.f32 %v952, 2.0
      %v1098 = vmul.f32 %v763, 2.0
      %v1099 = vmul.f32 %v765, 2.0
      %v1100 = vmul.f32 %v956, 2.0
      %v1101 = vmul.f32 %v958, 2.0
      %v1102 = vmul.f32 %v767, 2.0
      %v1103 = vmul.f32 %v769, 2.0
      %v1104 = vmul.f32 %v960, 2.0
      %v1105 = vmul.f32 %v962, 2.0
      %v1106 = vmul.f32 %v773, 2.0
      %v1107 = vmul.f32 %v775, 2.0
      %v1108 = vmul.f32 %v966, 2.0
      %v1109 = vmul.f32 %v968, 2.0
      %v1110 = vmul.f32 %v777, 2.0
      %v1111 = vmul.f32 %v779, 2.0
      %v1112 = vmul.f32 %v970, 2.0
      %v1113 = vmul.f32 %v972, 2.0
      %v1114 = vmul.f32 %v783, 2.0
      %v1115 = vmul.f32 %v785, 2.0
      %v1116 = vmul.f32 %v976, 2.0
      %v1117 = vmul.f32 %v978, 2.0
      %v1118 = vmul.f32 %v787, 2.0
      %v1119 = vmul.f32 %v789, 2.0
      %v1120 = vmul.f32 %v980, 2.0
      %v1121 = vmul.f32 %v982, 2.0
      %v1122 = vmul.f32 %v793, 2.0
      %v1123 = vmul.f32 %v795, 2.0
      %v1124 = vmul.f32 %v986, 2.0
      %v1125 = vmul.f32 %v988, 2.0
      %v1126 = vmul.f32 %v797, 2.0
      %v1127 = vmul.f32 %v799, 2.0
      %v1128 = vmul.f32 %v990, 2.0
      %v1129 = vmul.f32 %v992, 2.0
      %v1130 = vmul.f32 %v803, 2.0
      %v1131 = vmul.f32 %v805, 2.0
      %v1132 = vmul.f32 %v996, 2.0
      %v1133 = vmul.f32 %v998, 2.0
      %v1134 = vmul.f32 %v807, 2.0
      %v1135 = vmul.f32 %v809, 2.0
      %v1136 = vmul.f32 %v1000, 2.0
      %v1137 = vmul.f32 %v1002, 2.0
      %v1138 = vmul.f32 %v813, 2.0
      %v1139 = vmul.f32 %v815, 2.0
      %v1140 = vmul.f32 %v1006, 2.0
      %v1141 = vmul.f32 %v1008, 2.0
      %v1142 = vmul.f32 %v817, 2.0
      %v1143 = vmul.f32 %v819, 2.0
      %v1144 = vmul.f32 %v1010, 2.0
      %v1145 = vmul.f32 %v1012, 2.0
      %v1146 = vmul.f32 %v823, 2.0
      %v1147 = vmul.f32 %v825, 2.0
      %v1148 = vmul.f32 %v1016, 2.0
      %v1149 = vmul.f32 %v1018, 2.0
      %v1150 = vmul.f32 %v827, 2.0
      %v1151 = vmul.f32 %v829, 2.0
      %v1152 = vmul.f32 %v1020, 2.0
      %v1153 = vmul.f32 %v1022, 2.0
      %v1154 = vmul.f32 %v833, 2.0
      %v1155 = vmul.f32 %v835, 2.0
      %v1156 = vmul.f32 %v1026, 2.0
      %v1157 = vmul.f32 %v1028, 2.0
      %v1158 = vmul.f32 %v837, 2.0
      %v1159 = vmul.f32 %v839, 2.0
      %v1160 = vmul.f32 %v1030, 2.0
      %v1161 = vmul.f32 %v1032, 2.0
      %v1162 = vsub.f32 2.0, %v1034
      %v1163 = vsub.f32 2.0, %v1035
      %v1164 = vsub.f32 2.0, %v1036
      %v1165 = vsub.f32 2.0, %v1037
      %v1166 = vsub.f32 2.0, %v1038
      %v1167 = vsub.f32 2.0, %v1039
      %v1168 = vsub.f32 2.0, %v1040
      %v1169 = vsub.f32 2.0, %v1041
      %v1170 = vsub.f32 2.0, %v1042
      %v1171 = vsub.f32 2.0, %v1043
      %v1172 = vsub.f32 2.0, %v1044
      %v1173 = vsub.f32 2.0, %v1045
      %v1174 = vsub.f32 2.0, %v1046
      %v1175 = vsub.f32 2.0, %v1047
      %v1176 = vsub.f32 2.0, %v1048
      %v1177 = vsub.f32 2.0, %v1049
      %v1178 = vsub.f32 2.0, %v1050
      %v1179 = vsub.f32 2.0, %v1051
      %v1180 = vsub.f32 2.0, %v1052
      %v1181 = vsub.f32 2.0, %v1053
      %v1182 = vsub.f32 2.0, %v1054
      %v1183 = vsub.f32 2.0, %v1055
      %v1184 = vsub.f32 2.0, %v1056
      %v1185 = vsub.f32 2.0, %v1057
      %v1186 = vsub.f32 2.0, %v1058
      %v1187 = vsub.f32 2.0, %v1059
      %v1188 = vsub.f32 2.0, %v1060
      %v1189 = vsub.f32 2.0, %v1061
      %v1190 = vsub.f32 2.0, %v1062
      %v1191 = vsub.f32 2.0, %v1063
      %v1192 = vsub.f32 2.0, %v1064
      %v1193 = vsub.f32 2.0, %v1065
      %v1194 = vsub.f32 2.0, %v1066
      %v1195 = vsub.f32 2.0, %v1067
      %v1196 = vsub.f32 2.0, %v1068
      %v1197 = vsub.f32 2.0, %v1069
      %v1198 = vsub.f32 2.0, %v1070
      %v1199 = vsub.f32 2.0, %v1071
      %v1200 = vsub.f32 2.0, %v1072
      %v1201 = vsub.f32 2.0, %v1073
      %v1202 = vsub.f32 2.0, %v1074
      %v1203 = vsub.f32 2.0, %v1075
      %v1204 = vsub.f32 2.0, %v1076
      %v1205 = vsub.f32 2.0, %v1077
      %v1206 = vsub.f32 2.0, %v1078
      %v1207 = vsub.f32 2.0, %v1079
      %v1208 = vsub.f32 2.0, %v1080
      %v1209 = vsub.f32 2.0, %v1081
      %v1210 = vsub.f32 2.0, %v1082
      %v1211 = vsub.f32 2.0, %v1083
      %v1212 = vsub.f32 2.0, %v1084
      %v1213 = vsub.f32 2.0, %v1085
      %v1214 = vsub.f32 2.0, %v1086
      %v1215 = vsub.f32 2.0, %v1087
      %v1216 = vsub.f32 2.0, %v1088
      %v1217 = vsub.f32 2.0, %v1089
      %v1218 = vsub.f32 2.0, %v1090
      %v1219 = vsub.f32 2.0, %v1091
      %v1220 = vsub.f32 2.0, %v1092
      %v1221 = vsub.f32 2.0, %v1093
      %v1222 = vsub.f32 2.0, %v1094
      %v1223 = vsub.f32 2.0, %v1095
      %v1224 = vsub.f32 2.0, %v1096
      %v1225 = vsub.f32 2.0, %v1097
      %v1226 = vsub.f32 2.0, %v1098
      %v1227 = vsub.f32 2.0, %v1099
      %v1228 = vsub.f32 2.0, %v1100
      %v1229 = vsub.f32 2.0, %v1101
      %v1230 = vsub.f32 2.0, %v1102
      %v1231 = vsub.f32 2.0, %v1103
      %v1232 = vsub.f32 2.0, %v1104
      %v1233 = vsub.f32 2.0, %v1105
      %v1234 = vsub.f32 2.0, %v1106
      %v1235 = vsub.f32 2.0, %v1107
      %v1236 = vsub.f32 2.0, %v1108
      %v1237 = vsub.f32 2.0, %v1109
      %v1238 = vsub.f32 2.0, %v1110
      %v1239 = vsub.f32 2.0, %v1111
      %v1240 = vsub.f32 2.0, %v1112
      %v1241 = vsub.f32 2.0, %v1113
      %v1242 = vsub.f32 2.0, %v1114
      %v1243 = vsub.f32 2.0, %v1115
      %v1244 = vsub.f32 2.0, %v1116
      %v1245 = vsub.f32 2.0, %v1117
      %v1246 = vsub.f32 2.0, %v1118
      %v1247 = vsub.f32 2.0, %v1119
      %v1248 = vsub.f32 2.0, %v1120
      %v1249 = vsub.f32 2.0, %v1121
      %v1250 = vsub.f32 2.0, %v1122
      %v1251 = vsub.f32 2.0, %v1123
      %v1252 = vsub.f32 2.0, %v1124
      %v1253 = vsub.f32 2.0, %v1125
      %v1254 = vsub.f32 2.0, %v1126
      %v1255 = vsub.f32 2.0, %v1127
      %v1256 = vsub.f32 2.0, %v1128
      %v1257 = vsub.f32 2.0, %v1129
      %v1258 = vsub.f32 2.0, %v1130
      %v1259 = vsub.f32 2.0, %v1131
      %v1260 = vsub.f32 2.0, %v1132
      %v1261 = vsub.f32 2.0, %v1133
      %v1262 = vsub.f32 2.0, %v1134
      %v1263 = vsub.f32 2.0, %v1135
      %v1264 = vsub.f32 2.0, %v1136
      %v1265 = vsub.f32 2.0, %v1137
      %v1266 = vsub.f32 2.0, %v1138
      %v1267 = vsub.f32 2.0, %v1139
      %v1268 = vsub.f32 2.0, %v1140
      %v1269 = vsub.f32 2.0, %v1141
      %v1270 = vsub.f32 2.0, %v1142
      %v1271 = vsub.f32 2.0, %v1143
      %v1272 = vsub.f32 2.0, %v1144
      %v1273 = vsub.f32 2.0, %v1145
      %v1274 = vsub.f32 2.0, %v1146
      %v1275 = vsub.f32 2.0, %v1147
      %v1276 = vsub.f32 2.0, %v1148
      %v1277 = vsub.f32 2.0, %v1149
      %v1278 = vsub.f32 2.0, %v1150
      %v1279 = vsub.f32 2.0, %v1151
      %v1280 = vsub.f32 2.0, %v1152
      %v1281 = vsub.f32 2.0, %v1153
      %v1282 = vsub.f32 2.0, %v1154
      %v1283 = vsub.f32 2.0, %v1155
      %v1284 = vsub.f32 2.0, %v1156
      %v1285 = vsub.f32 2.0, %v1157
      %v1286 = vsub.f32 2.0, %v1158
      %v1287 = vsub.f32 2.0, %v1159
      %v1288 = vsub.f32 2.0, %v1160
      %v1289 = vsub.f32 2.0, %v1161
      %v1290 = vmax.f32 %v1162, 0.0
      %v1291 = vmax.f32 %v1163, 0.0
      %v1292 = vmax.f32 %v1164, 0.0
      %v1293 = vmax.f32 %v1165, 0.0
      %v1294 = vmax.f32 %v1166, 0.0
      %v1295 = vmax.f32 %v1167, 0.0
      %v1296 = vmax.f32 %v1168, 0.0
      %v1297 = vmax.f32 %v1169, 0.0
      %v1298 = vmax.f32 %v1170, 0.0
      %v1299 = vmax.f32 %v1171, 0.0
      %v1300 = vmax.f32 %v1172, 0.0
      %v1301 = vmax.f32 %v1173, 0.0
      %v1302 = vmax.f32 %v1174, 0.0
      %v1303 = vmax.f32 %v1175, 0.0
      %v1304 = vmax.f32 %v1176, 0.0
      %v1305 = vmax.f32 %v1177, 0.0
      %v1306 = vmax.f32 %v1178, 0.0
      %v1307 = vmax.f32 %v1179, 0.0
      %v1308 = vmax.f32 %v1180, 0.0
      %v1309 = vmax.f32 %v1181, 0.0
      %v1310 = vmax.f32 %v1182, 0.0
      %v1311 = vmax.f32 %v1183, 0.0
      %v1312 = vmax.f32 %v1184, 0.0
      %v1313 = vmax.f32 %v1185, 0.0
      %v1314 = vmax.f32 %v1186, 0.0
      %v1315 = vmax.f32 %v1187, 0.0
      %v1316 = vmax.f32 %v1188, 0.0
      %v1317 = vmax.f32 %v1189, 0.0
      %v1318 = vmax.f32 %v1190, 0.0
      %v1319 = vmax.f32 %v1191, 0.0
      %v1320 = vmax.f32 %v1192, 0.0
      %v1321 = vmax.f32 %v1193, 0.0
      %v1322 = vmax.f32 %v1194, 0.0
      %v1323 = vmax.f32 %v1195, 0.0
      %v1324 = vmax.f32 %v1196, 0.0
      %v1325 = vmax.f32 %v1197, 0.0
      %v1326 = vmax.f32 %v1198, 0.0
      %v1327 = vmax.f32 %v1199, 0.0
      %v1328 = vmax.f32 %v1200, 0.0
      %v1329 = vmax.f32 %v1201, 0.0
      %v1330 = vmax.f32 %v1202, 0.0
      %v1331 = vmax.f32 %v1203, 0.0
      %v1332 = vmax.f32 %v1204, 0.0
      %v1333 = vmax.f32 %v1205, 0.0
      %v1334 = vmax.f32 %v1206, 0.0
      %v1335 = vmax.f32 %v1207, 0.0
      %v1336 = vmax.f32 %v1208, 0.0
      %v1337 = vmax.f32 %v1209, 0.0
      %v1338 = vmax.f32 %v1210, 0.0
      %v1339 = vmax.f32 %v1211, 0.0
      %v1340 = vmax.f32 %v1212, 0.0
      %v1341 = vmax.f32 %v1213, 0.0
      %v1342 = vmax.f32 %v1214, 0.0
      %v1343 = vmax.f32 %v1215, 0.0
      %v1344 = vmax.f32 %v1216, 0.0
      %v1345 = vmax.f32 %v1217, 0.0
      %v1346 = vmax.f32 %v1218, 0.0
      %v1347 = vmax.f32 %v1219, 0.0
      %v1348 = vmax.f32 %v1220, 0.0
      %v1349 = vmax.f32 %v1221, 0.0
      %v1350 = vmax.f32 %v1222, 0.0
      %v1351 = vmax.f32 %v1223, 0.0
      %v1352 = vmax.f32 %v1224, 0.0
      %v1353 = vmax.f32 %v1225, 0.0
      %v1354 = vmax.f32 %v1226, 0.0
      %v1355 = vmax.f32 %v1227, 0.0
      %v1356 = vmax.f32 %v1228, 0.0
      %v1357 = vmax.f32 %v1229, 0.0
      %v1358 = vmax.f32 %v1230, 0.0
      %v1359 = vmax.f32 %v1231, 0.0
      %v1360 = vmax.f32 %v1232, 0.0
      %v1361 = vmax.f32 %v1233, 0.0
      %v1362 = vmax.f32 %v1234, 0.0
      %v1363 = vmax.f32 %v1235, 0.0
      %v1364 = vmax.f32 %v1236, 0.0
      %v1365 = vmax.f32 %v1237, 0.0
      %v1366 = vmax.f32 %v1238, 0.0
      %v1367 = vmax.f32 %v1239, 0.0
      %v1368 = vmax.f32 %v1240, 0.0
      %v1369 = vmax.f32 %v1241, 0.0
      %v1370 = vmax.f32 %v1242, 0.0
      %v1371 = vmax.f32 %v1243, 0.0
      %v1372 = vmax.f32 %v1244, 0.0
      %v1373 = vmax.f32 %v1245, 0.0
      %v1374 = vmax.f32 %v1246, 0.0
      %v1375 = vmax.f32 %v1247, 0.0
      %v1376 = vmax.f32 %v1248, 0.0
      %v1377 = vmax.f32 %v1249, 0.0
      %v1378 = vmax.f32 %v1250, 0.0
      %v1379 = vmax.f32 %v1251, 0.0
      %v1380 = vmax.f32 %v1252, 0.0
      %v1381 = vmax.f32 %v1253, 0.0
      %v1382 = vmax.f32 %v1254, 0.0
      %v1383 = vmax.f32 %v1255, 0.0
      %v1384 = vmax.f32 %v1256, 0.0
      %v1385 = vmax.f32 %v1257, 0.0
      %v1386 = vmax.f32 %v1258, 0.0
      %v1387 = vmax.f32 %v1259, 0.0
      %v1388 = vmax.f32 %v1260, 0.0
      %v1389 = vmax.f32 %v1261, 0.0
      %v1390 = vmax.f32 %v1262, 0.0
      %v1391 = vmax.f32 %v1263, 0.0
      %v1392 = vmax.f32 %v1264, 0.0
      %v1393 = vmax.f32 %v1265, 0.0
      %v1394 = vmax.f32 %v1266, 0.0
      %v1395 = vmax.f32 %v1267, 0.0
      %v1396 = vmax.f32 %v1268, 0.0
      %v1397 = vmax.f32 %v1269, 0.0
      %v1398 = vmax.f32 %v1270, 0.0
      %v1399 = vmax.f32 %v1271, 0.0
      %v1400 = vmax.f32 %v1272, 0.0
      %v1401 = vmax.f32 %v1273, 0.0
      %v1402 = vmax.f32 %v1274, 0.0
      %v1403 = vmax.f32 %v1275, 0.0
      %v1404 = vmax.f32 %v1276, 0.0
      %v1405 = vmax.f32 %v1277, 0.0
      %v1406 = vmax.f32 %v1278, 0.0
      %v1407 = vmax.f32 %v1279, 0.0
      %v1408 = vmax.f32 %v1280, 0.0
      %v1409 = vmax.f32 %v1281, 0.0
      %v1410 = vmax.f32 %v1282, 0.0
      %v1411 = vmax.f32 %v1283, 0.0
      %v1412 = vmax.f32 %v1284, 0.0
      %v1413 = vmax.f32 %v1285, 0.0
      %v1414 = vmax.f32 %v1286, 0.0
      %v1415 = vmax.f32 %v1287, 0.0
      %v1416 = vmax.f32 %v1288, 0.0
      %v1417 = vmax.f32 %v1289, 0.0
      %v1418 = vrsqrt.pop %v1290
      %v1419 = vmul.f32 %v1290, %v1418
      %vm1420 = vcmp.eq.f32.partialorder %v1290, inf
      %v1421 = vsel %vm1420, %v1290, %v1419
      %vm1422 = vcmp.eq.f32.partialorder %v1290, 0.0
      %v1423 = vand.u32 %v1290, 2147483648
      %v1424 = vsel %vm1422, %v1423, %v1421
      %v1425 = vrsqrt.pop %v1291
      %v1426 = vmul.f32 %v1291, %v1425
      %vm1427 = vcmp.eq.f32.partialorder %v1291, inf
      %v1428 = vsel %vm1427, %v1291, %v1426
      %vm1429 = vcmp.eq.f32.partialorder %v1291, 0.0
      %v1430 = vand.u32 %v1291, 2147483648
      %v1431 = vsel %vm1429, %v1430, %v1428
      %v1432 = vrsqrt.pop %v1292
      %v1433 = vmul.f32 %v1292, %v1432
      %vm1434 = vcmp.eq.f32.partialorder %v1292, inf
      %v1435 = vsel %vm1434, %v1292, %v1433
      %vm1436 = vcmp.eq.f32.partialorder %v1292, 0.0
      %v1437 = vand.u32 %v1292, 2147483648
      %v1438 = vsel %vm1436, %v1437, %v1435
      %v1439 = vrsqrt.pop %v1293
      %v1440 = vmul.f32 %v1293, %v1439
      %vm1441 = vcmp.eq.f32.partialorder %v1293, inf
      %v1442 = vsel %vm1441, %v1293, %v1440
      %vm1443 = vcmp.eq.f32.partialorder %v1293, 0.0
      %v1444 = vand.u32 %v1293, 2147483648
      %v1445 = vsel %vm1443, %v1444, %v1442
      %v1446 = vrsqrt.pop %v1294
      %v1447 = vmul.f32 %v1294, %v1446
      %vm1448 = vcmp.eq.f32.partialorder %v1294, inf
      %v1449 = vsel %vm1448, %v1294, %v1447
      %vm1450 = vcmp.eq.f32.partialorder %v1294, 0.0
      %v1451 = vand.u32 %v1294, 2147483648
      %v1452 = vsel %vm1450, %v1451, %v1449
      %v1453 = vrsqrt.pop %v1295
      %v1454 = vmul.f32 %v1295, %v1453
      %vm1455 = vcmp.eq.f32.partialorder %v1295, inf
      %v1456 = vsel %vm1455, %v1295, %v1454
      %vm1457 = vcmp.eq.f32.partialorder %v1295, 0.0
      %v1458 = vand.u32 %v1295, 2147483648
      %v1459 = vsel %vm1457, %v1458, %v1456
      %v1460 = vrsqrt.pop %v1296
      %v1461 = vmul.f32 %v1296, %v1460
      %vm1462 = vcmp.eq.f32.partialorder %v1296, inf
      %v1463 = vsel %vm1462, %v1296, %v1461
      %vm1464 = vcmp.eq.f32.partialorder %v1296, 0.0
      %v1465 = vand.u32 %v1296, 2147483648
      %v1466 = vsel %vm1464, %v1465, %v1463
      %v1467 = vrsqrt.pop %v1297
      %v1468 = vmul.f32 %v1297, %v1467
      %vm1469 = vcmp.eq.f32.partialorder %v1297, inf
      %v1470 = vsel %vm1469, %v1297, %v1468
      %vm1471 = vcmp.eq.f32.partialorder %v1297, 0.0
      %v1472 = vand.u32 %v1297, 2147483648
      %v1473 = vsel %vm1471, %v1472, %v1470
      %v1474 = vrsqrt.pop %v1298
      %v1475 = vmul.f32 %v1298, %v1474
      %vm1476 = vcmp.eq.f32.partialorder %v1298, inf
      %v1477 = vsel %vm1476, %v1298, %v1475
      %vm1478 = vcmp.eq.f32.partialorder %v1298, 0.0
      %v1479 = vand.u32 %v1298, 2147483648
      %v1480 = vsel %vm1478, %v1479, %v1477
      %v1481 = vrsqrt.pop %v1299
      %v1482 = vmul.f32 %v1299, %v1481
      %vm1483 = vcmp.eq.f32.partialorder %v1299, inf
      %v1484 = vsel %vm1483, %v1299, %v1482
      %vm1485 = vcmp.eq.f32.partialorder %v1299, 0.0
      %v1486 = vand.u32 %v1299, 2147483648
      %v1487 = vsel %vm1485, %v1486, %v1484
      %v1488 = vrsqrt.pop %v1300
      %v1489 = vmul.f32 %v1300, %v1488
      %vm1490 = vcmp.eq.f32.partialorder %v1300, inf
      %v1491 = vsel %vm1490, %v1300, %v1489
      %vm1492 = vcmp.eq.f32.partialorder %v1300, 0.0
      %v1493 = vand.u32 %v1300, 2147483648
      %v1494 = vsel %vm1492, %v1493, %v1491
      %v1495 = vrsqrt.pop %v1301
      %v1496 = vmul.f32 %v1301, %v1495
      %vm1497 = vcmp.eq.f32.partialorder %v1301, inf
      %v1498 = vsel %vm1497, %v1301, %v1496
      %vm1499 = vcmp.eq.f32.partialorder %v1301, 0.0
      %v1500 = vand.u32 %v1301, 2147483648
      %v1501 = vsel %vm1499, %v1500, %v1498
      %v1502 = vrsqrt.pop %v1302
      %v1503 = vmul.f32 %v1302, %v1502
      %vm1504 = vcmp.eq.f32.partialorder %v1302, inf
      %v1505 = vsel %vm1504, %v1302, %v1503
      %vm1506 = vcmp.eq.f32.partialorder %v1302, 0.0
      %v1507 = vand.u32 %v1302, 2147483648
      %v1508 = vsel %vm1506, %v1507, %v1505
      %v1509 = vrsqrt.pop %v1303
      %v1510 = vmul.f32 %v1303, %v1509
      %vm1511 = vcmp.eq.f32.partialorder %v1303, inf
      %v1512 = vsel %vm1511, %v1303, %v1510
      %vm1513 = vcmp.eq.f32.partialorder %v1303, 0.0
      %v1514 = vand.u32 %v1303, 2147483648
      %v1515 = vsel %vm1513, %v1514, %v1512
      %v1516 = vrsqrt.pop %v1304
      %v1517 = vmul.f32 %v1304, %v1516
      %vm1518 = vcmp.eq.f32.partialorder %v1304, inf
      %v1519 = vsel %vm1518, %v1304, %v1517
      %vm1520 = vcmp.eq.f32.partialorder %v1304, 0.0
      %v1521 = vand.u32 %v1304, 2147483648
      %v1522 = vsel %vm1520, %v1521, %v1519
      %v1523 = vrsqrt.pop %v1305
      %v1524 = vmul.f32 %v1305, %v1523
      %vm1525 = vcmp.eq.f32.partialorder %v1305, inf
      %v1526 = vsel %vm1525, %v1305, %v1524
      %vm1527 = vcmp.eq.f32.partialorder %v1305, 0.0
      %v1528 = vand.u32 %v1305, 2147483648
      %v1529 = vsel %vm1527, %v1528, %v1526
      %v1530 = vrsqrt.pop %v1306
      %v1531 = vmul.f32 %v1306, %v1530
      %vm1532 = vcmp.eq.f32.partialorder %v1306, inf
      %v1533 = vsel %vm1532, %v1306, %v1531
      %vm1534 = vcmp.eq.f32.partialorder %v1306, 0.0
      %v1535 = vand.u32 %v1306, 2147483648
      %v1536 = vsel %vm1534, %v1535, %v1533
      %v1537 = vrsqrt.pop %v1307
      %v1538 = vmul.f32 %v1307, %v1537
      %vm1539 = vcmp.eq.f32.partialorder %v1307, inf
      %v1540 = vsel %vm1539, %v1307, %v1538
      %vm1541 = vcmp.eq.f32.partialorder %v1307, 0.0
      %v1542 = vand.u32 %v1307, 2147483648
      %v1543 = vsel %vm1541, %v1542, %v1540
      %v1544 = vrsqrt.pop %v1308
      %v1545 = vmul.f32 %v1308, %v1544
      %vm1546 = vcmp.eq.f32.partialorder %v1308, inf
      %v1547 = vsel %vm1546, %v1308, %v1545
      %vm1548 = vcmp.eq.f32.partialorder %v1308, 0.0
      %v1549 = vand.u32 %v1308, 2147483648
      %v1550 = vsel %vm1548, %v1549, %v1547
      %v1551 = vrsqrt.pop %v1309
      %v1552 = vmul.f32 %v1309, %v1551
      %vm1553 = vcmp.eq.f32.partialorder %v1309, inf
      %v1554 = vsel %vm1553, %v1309, %v1552
      %vm1555 = vcmp.eq.f32.partialorder %v1309, 0.0
      %v1556 = vand.u32 %v1309, 2147483648
      %v1557 = vsel %vm1555, %v1556, %v1554
      %v1558 = vrsqrt.pop %v1310
      %v1559 = vmul.f32 %v1310, %v1558
      %vm1560 = vcmp.eq.f32.partialorder %v1310, inf
      %v1561 = vsel %vm1560, %v1310, %v1559
      %vm1562 = vcmp.eq.f32.partialorder %v1310, 0.0
      %v1563 = vand.u32 %v1310, 2147483648
      %v1564 = vsel %vm1562, %v1563, %v1561
      %v1565 = vrsqrt.pop %v1311
      %v1566 = vmul.f32 %v1311, %v1565
      %vm1567 = vcmp.eq.f32.partialorder %v1311, inf
      %v1568 = vsel %vm1567, %v1311, %v1566
      %vm1569 = vcmp.eq.f32.partialorder %v1311, 0.0
      %v1570 = vand.u32 %v1311, 2147483648
      %v1571 = vsel %vm1569, %v1570, %v1568
      %v1572 = vrsqrt.pop %v1312
      %v1573 = vmul.f32 %v1312, %v1572
      %vm1574 = vcmp.eq.f32.partialorder %v1312, inf
      %v1575 = vsel %vm1574, %v1312, %v1573
      %vm1576 = vcmp.eq.f32.partialorder %v1312, 0.0
      %v1577 = vand.u32 %v1312, 2147483648
      %v1578 = vsel %vm1576, %v1577, %v1575
      %v1579 = vrsqrt.pop %v1313
      %v1580 = vmul.f32 %v1313, %v1579
      %vm1581 = vcmp.eq.f32.partialorder %v1313, inf
      %v1582 = vsel %vm1581, %v1313, %v1580
      %vm1583 = vcmp.eq.f32.partialorder %v1313, 0.0
      %v1584 = vand.u32 %v1313, 2147483648
      %v1585 = vsel %vm1583, %v1584, %v1582
      %v1586 = vrsqrt.pop %v1314
      %v1587 = vmul.f32 %v1314, %v1586
      %vm1588 = vcmp.eq.f32.partialorder %v1314, inf
      %v1589 = vsel %vm1588, %v1314, %v1587
      %vm1590 = vcmp.eq.f32.partialorder %v1314, 0.0
      %v1591 = vand.u32 %v1314, 2147483648
      %v1592 = vsel %vm1590, %v1591, %v1589
      %v1593 = vrsqrt.pop %v1315
      %v1594 = vmul.f32 %v1315, %v1593
      %vm1595 = vcmp.eq.f32.partialorder %v1315, inf
      %v1596 = vsel %vm1595, %v1315, %v1594
      %vm1597 = vcmp.eq.f32.partialorder %v1315, 0.0
      %v1598 = vand.u32 %v1315, 2147483648
      %v1599 = vsel %vm1597, %v1598, %v1596
      %v1600 = vrsqrt.pop %v1316
      %v1601 = vmul.f32 %v1316, %v1600
      %vm1602 = vcmp.eq.f32.partialorder %v1316, inf
      %v1603 = vsel %vm1602, %v1316, %v1601
      %vm1604 = vcmp.eq.f32.partialorder %v1316, 0.0
      %v1605 = vand.u32 %v1316, 2147483648
      %v1606 = vsel %vm1604, %v1605, %v1603
      %v1607 = vrsqrt.pop %v1317
      %v1608 = vmul.f32 %v1317, %v1607
      %vm1609 = vcmp.eq.f32.partialorder %v1317, inf
      %v1610 = vsel %vm1609, %v1317, %v1608
      %vm1611 = vcmp.eq.f32.partialorder %v1317, 0.0
      %v1612 = vand.u32 %v1317, 2147483648
      %v1613 = vsel %vm1611, %v1612, %v1610
      %v1614 = vrsqrt.pop %v1318
      %v1615 = vmul.f32 %v1318, %v1614
      %vm1616 = vcmp.eq.f32.partialorder %v1318, inf
      %v1617 = vsel %vm1616, %v1318, %v1615
      %vm1618 = vcmp.eq.f32.partialorder %v1318, 0.0
      %v1619 = vand.u32 %v1318, 2147483648
      %v1620 = vsel %vm1618, %v1619, %v1617
      %v1621 = vrsqrt.pop %v1319
      %v1622 = vmul.f32 %v1319, %v1621
      %vm1623 = vcmp.eq.f32.partialorder %v1319, inf
      %v1624 = vsel %vm1623, %v1319, %v1622
      %vm1625 = vcmp.eq.f32.partialorder %v1319, 0.0
      %v1626 = vand.u32 %v1319, 2147483648
      %v1627 = vsel %vm1625, %v1626, %v1624
      %v1628 = vrsqrt.pop %v1320
      %v1629 = vmul.f32 %v1320, %v1628
      %vm1630 = vcmp.eq.f32.partialorder %v1320, inf
      %v1631 = vsel %vm1630, %v1320, %v1629
      %vm1632 = vcmp.eq.f32.partialorder %v1320, 0.0
      %v1633 = vand.u32 %v1320, 2147483648
      %v1634 = vsel %vm1632, %v1633, %v1631
      %v1635 = vrsqrt.pop %v1321
      %v1636 = vmul.f32 %v1321, %v1635
      %vm1637 = vcmp.eq.f32.partialorder %v1321, inf
      %v1638 = vsel %vm1637, %v1321, %v1636
      %vm1639 = vcmp.eq.f32.partialorder %v1321, 0.0
      %v1640 = vand.u32 %v1321, 2147483648
      %v1641 = vsel %vm1639, %v1640, %v1638
      %v1642 = vrsqrt.pop %v1322
      %v1643 = vmul.f32 %v1322, %v1642
      %vm1644 = vcmp.eq.f32.partialorder %v1322, inf
      %v1645 = vsel %vm1644, %v1322, %v1643
      %vm1646 = vcmp.eq.f32.partialorder %v1322, 0.0
      %v1647 = vand.u32 %v1322, 2147483648
      %v1648 = vsel %vm1646, %v1647, %v1645
      %v1649 = vrsqrt.pop %v1323
      %v1650 = vmul.f32 %v1323, %v1649
      %vm1651 = vcmp.eq.f32.partialorder %v1323, inf
      %v1652 = vsel %vm1651, %v1323, %v1650
      %vm1653 = vcmp.eq.f32.partialorder %v1323, 0.0
      %v1654 = vand.u32 %v1323, 2147483648
      %v1655 = vsel %vm1653, %v1654, %v1652
      %v1656 = vrsqrt.pop %v1324
      %v1657 = vmul.f32 %v1324, %v1656
      %vm1658 = vcmp.eq.f32.partialorder %v1324, inf
      %v1659 = vsel %vm1658, %v1324, %v1657
      %vm1660 = vcmp.eq.f32.partialorder %v1324, 0.0
      %v1661 = vand.u32 %v1324, 2147483648
      %v1662 = vsel %vm1660, %v1661, %v1659
      %v1663 = vrsqrt.pop %v1325
      %v1664 = vmul.f32 %v1325, %v1663
      %vm1665 = vcmp.eq.f32.partialorder %v1325, inf
      %v1666 = vsel %vm1665, %v1325, %v1664
      %vm1667 = vcmp.eq.f32.partialorder %v1325, 0.0
      %v1668 = vand.u32 %v1325, 2147483648
      %v1669 = vsel %vm1667, %v1668, %v1666
      %v1670 = vrsqrt.pop %v1326
      %v1671 = vmul.f32 %v1326, %v1670
      %vm1672 = vcmp.eq.f32.partialorder %v1326, inf
      %v1673 = vsel %vm1672, %v1326, %v1671
      %vm1674 = vcmp.eq.f32.partialorder %v1326, 0.0
      %v1675 = vand.u32 %v1326, 2147483648
      %v1676 = vsel %vm1674, %v1675, %v1673
      %v1677 = vrsqrt.pop %v1327
      %v1678 = vmul.f32 %v1327, %v1677
      %vm1679 = vcmp.eq.f32.partialorder %v1327, inf
      %v1680 = vsel %vm1679, %v1327, %v1678
      %vm1681 = vcmp.eq.f32.partialorder %v1327, 0.0
      %v1682 = vand.u32 %v1327, 2147483648
      %v1683 = vsel %vm1681, %v1682, %v1680
      %v1684 = vrsqrt.pop %v1328
      %v1685 = vmul.f32 %v1328, %v1684
      %vm1686 = vcmp.eq.f32.partialorder %v1328, inf
      %v1687 = vsel %vm1686, %v1328, %v1685
      %vm1688 = vcmp.eq.f32.partialorder %v1328, 0.0
      %v1689 = vand.u32 %v1328, 2147483648
      %v1690 = vsel %vm1688, %v1689, %v1687
      %v1691 = vrsqrt.pop %v1329
      %v1692 = vmul.f32 %v1329, %v1691
      %vm1693 = vcmp.eq.f32.partialorder %v1329, inf
      %v1694 = vsel %vm1693, %v1329, %v1692
      %vm1695 = vcmp.eq.f32.partialorder %v1329, 0.0
      %v1696 = vand.u32 %v1329, 2147483648
      %v1697 = vsel %vm1695, %v1696, %v1694
      %v1698 = vrsqrt.pop %v1330
      %v1699 = vmul.f32 %v1330, %v1698
      %vm1700 = vcmp.eq.f32.partialorder %v1330, inf
      %v1701 = vsel %vm1700, %v1330, %v1699
      %vm1702 = vcmp.eq.f32.partialorder %v1330, 0.0
      %v1703 = vand.u32 %v1330, 2147483648
      %v1704 = vsel %vm1702, %v1703, %v1701
      %v1705 = vrsqrt.pop %v1331
      %v1706 = vmul.f32 %v1331, %v1705
      %vm1707 = vcmp.eq.f32.partialorder %v1331, inf
      %v1708 = vsel %vm1707, %v1331, %v1706
      %vm1709 = vcmp.eq.f32.partialorder %v1331, 0.0
      %v1710 = vand.u32 %v1331, 2147483648
      %v1711 = vsel %vm1709, %v1710, %v1708
      %v1712 = vrsqrt.pop %v1332
      %v1713 = vmul.f32 %v1332, %v1712
      %vm1714 = vcmp.eq.f32.partialorder %v1332, inf
      %v1715 = vsel %vm1714, %v1332, %v1713
      %vm1716 = vcmp.eq.f32.partialorder %v1332, 0.0
      %v1717 = vand.u32 %v1332, 2147483648
      %v1718 = vsel %vm1716, %v1717, %v1715
      %v1719 = vrsqrt.pop %v1333
      %v1720 = vmul.f32 %v1333, %v1719
      %vm1721 = vcmp.eq.f32.partialorder %v1333, inf
      %v1722 = vsel %vm1721, %v1333, %v1720
      %vm1723 = vcmp.eq.f32.partialorder %v1333, 0.0
      %v1724 = vand.u32 %v1333, 2147483648
      %v1725 = vsel %vm1723, %v1724, %v1722
      %v1726 = vrsqrt.pop %v1334
      %v1727 = vmul.f32 %v1334, %v1726
      %vm1728 = vcmp.eq.f32.partialorder %v1334, inf
      %v1729 = vsel %vm1728, %v1334, %v1727
      %vm1730 = vcmp.eq.f32.partialorder %v1334, 0.0
      %v1731 = vand.u32 %v1334, 2147483648
      %v1732 = vsel %vm1730, %v1731, %v1729
      %v1733 = vrsqrt.pop %v1335
      %v1734 = vmul.f32 %v1335, %v1733
      %vm1735 = vcmp.eq.f32.partialorder %v1335, inf
      %v1736 = vsel %vm1735, %v1335, %v1734
      %vm1737 = vcmp.eq.f32.partialorder %v1335, 0.0
      %v1738 = vand.u32 %v1335, 2147483648
      %v1739 = vsel %vm1737, %v1738, %v1736
      %v1740 = vrsqrt.pop %v1336
      %v1741 = vmul.f32 %v1336, %v1740
      %vm1742 = vcmp.eq.f32.partialorder %v1336, inf
      %v1743 = vsel %vm1742, %v1336, %v1741
      %vm1744 = vcmp.eq.f32.partialorder %v1336, 0.0
      %v1745 = vand.u32 %v1336, 2147483648
      %v1746 = vsel %vm1744, %v1745, %v1743
      %v1747 = vrsqrt.pop %v1337
      %v1748 = vmul.f32 %v1337, %v1747
      %vm1749 = vcmp.eq.f32.partialorder %v1337, inf
      %v1750 = vsel %vm1749, %v1337, %v1748
      %vm1751 = vcmp.eq.f32.partialorder %v1337, 0.0
      %v1752 = vand.u32 %v1337, 2147483648
      %v1753 = vsel %vm1751, %v1752, %v1750
      %v1754 = vrsqrt.pop %v1338
      %v1755 = vmul.f32 %v1338, %v1754
      %vm1756 = vcmp.eq.f32.partialorder %v1338, inf
      %v1757 = vsel %vm1756, %v1338, %v1755
      %vm1758 = vcmp.eq.f32.partialorder %v1338, 0.0
      %v1759 = vand.u32 %v1338, 2147483648
      %v1760 = vsel %vm1758, %v1759, %v1757
      %v1761 = vrsqrt.pop %v1339
      %v1762 = vmul.f32 %v1339, %v1761
      %vm1763 = vcmp.eq.f32.partialorder %v1339, inf
      %v1764 = vsel %vm1763, %v1339, %v1762
      %vm1765 = vcmp.eq.f32.partialorder %v1339, 0.0
      %v1766 = vand.u32 %v1339, 2147483648
      %v1767 = vsel %vm1765, %v1766, %v1764
      %v1768 = vrsqrt.pop %v1340
      %v1769 = vmul.f32 %v1340, %v1768
      %vm1770 = vcmp.eq.f32.partialorder %v1340, inf
      %v1771 = vsel %vm1770, %v1340, %v1769
      %vm1772 = vcmp.eq.f32.partialorder %v1340, 0.0
      %v1773 = vand.u32 %v1340, 2147483648
      %v1774 = vsel %vm1772, %v1773, %v1771
      %v1775 = vrsqrt.pop %v1341
      %v1776 = vmul.f32 %v1341, %v1775
      %vm1777 = vcmp.eq.f32.partialorder %v1341, inf
      %v1778 = vsel %vm1777, %v1341, %v1776
      %vm1779 = vcmp.eq.f32.partialorder %v1341, 0.0
      %v1780 = vand.u32 %v1341, 2147483648
      %v1781 = vsel %vm1779, %v1780, %v1778
      %v1782 = vrsqrt.pop %v1342
      %v1783 = vmul.f32 %v1342, %v1782
      %vm1784 = vcmp.eq.f32.partialorder %v1342, inf
      %v1785 = vsel %vm1784, %v1342, %v1783
      %vm1786 = vcmp.eq.f32.partialorder %v1342, 0.0
      %v1787 = vand.u32 %v1342, 2147483648
      %v1788 = vsel %vm1786, %v1787, %v1785
      %v1789 = vrsqrt.pop %v1343
      %v1790 = vmul.f32 %v1343, %v1789
      %vm1791 = vcmp.eq.f32.partialorder %v1343, inf
      %v1792 = vsel %vm1791, %v1343, %v1790
      %vm1793 = vcmp.eq.f32.partialorder %v1343, 0.0
      %v1794 = vand.u32 %v1343, 2147483648
      %v1795 = vsel %vm1793, %v1794, %v1792
      %v1796 = vrsqrt.pop %v1344
      %v1797 = vmul.f32 %v1344, %v1796
      %vm1798 = vcmp.eq.f32.partialorder %v1344, inf
      %v1799 = vsel %vm1798, %v1344, %v1797
      %vm1800 = vcmp.eq.f32.partialorder %v1344, 0.0
      %v1801 = vand.u32 %v1344, 2147483648
      %v1802 = vsel %vm1800, %v1801, %v1799
      %v1803 = vrsqrt.pop %v1345
      %v1804 = vmul.f32 %v1345, %v1803
      %vm1805 = vcmp.eq.f32.partialorder %v1345, inf
      %v1806 = vsel %vm1805, %v1345, %v1804
      %vm1807 = vcmp.eq.f32.partialorder %v1345, 0.0
      %v1808 = vand.u32 %v1345, 2147483648
      %v1809 = vsel %vm1807, %v1808, %v1806
      %v1810 = vrsqrt.pop %v1346
      %v1811 = vmul.f32 %v1346, %v1810
      %vm1812 = vcmp.eq.f32.partialorder %v1346, inf
      %v1813 = vsel %vm1812, %v1346, %v1811
      %vm1814 = vcmp.eq.f32.partialorder %v1346, 0.0
      %v1815 = vand.u32 %v1346, 2147483648
      %v1816 = vsel %vm1814, %v1815, %v1813
      %v1817 = vrsqrt.pop %v1347
      %v1818 = vmul.f32 %v1347, %v1817
      %vm1819 = vcmp.eq.f32.partialorder %v1347, inf
      %v1820 = vsel %vm1819, %v1347, %v1818
      %vm1821 = vcmp.eq.f32.partialorder %v1347, 0.0
      %v1822 = vand.u32 %v1347, 2147483648
      %v1823 = vsel %vm1821, %v1822, %v1820
      %v1824 = vrsqrt.pop %v1348
      %v1825 = vmul.f32 %v1348, %v1824
      %vm1826 = vcmp.eq.f32.partialorder %v1348, inf
      %v1827 = vsel %vm1826, %v1348, %v1825
      %vm1828 = vcmp.eq.f32.partialorder %v1348, 0.0
      %v1829 = vand.u32 %v1348, 2147483648
      %v1830 = vsel %vm1828, %v1829, %v1827
      %v1831 = vrsqrt.pop %v1349
      %v1832 = vmul.f32 %v1349, %v1831
      %vm1833 = vcmp.eq.f32.partialorder %v1349, inf
      %v1834 = vsel %vm1833, %v1349, %v1832
      %vm1835 = vcmp.eq.f32.partialorder %v1349, 0.0
      %v1836 = vand.u32 %v1349, 2147483648
      %v1837 = vsel %vm1835, %v1836, %v1834
      %v1838 = vrsqrt.pop %v1350
      %v1839 = vmul.f32 %v1350, %v1838
      %vm1840 = vcmp.eq.f32.partialorder %v1350, inf
      %v1841 = vsel %vm1840, %v1350, %v1839
      %vm1842 = vcmp.eq.f32.partialorder %v1350, 0.0
      %v1843 = vand.u32 %v1350, 2147483648
      %v1844 = vsel %vm1842, %v1843, %v1841
      %v1845 = vrsqrt.pop %v1351
      %v1846 = vmul.f32 %v1351, %v1845
      %vm1847 = vcmp.eq.f32.partialorder %v1351, inf
      %v1848 = vsel %vm1847, %v1351, %v1846
      %vm1849 = vcmp.eq.f32.partialorder %v1351, 0.0
      %v1850 = vand.u32 %v1351, 2147483648
      %v1851 = vsel %vm1849, %v1850, %v1848
      %v1852 = vrsqrt.pop %v1352
      %v1853 = vmul.f32 %v1352, %v1852
      %vm1854 = vcmp.eq.f32.partialorder %v1352, inf
      %v1855 = vsel %vm1854, %v1352, %v1853
      %vm1856 = vcmp.eq.f32.partialorder %v1352, 0.0
      %v1857 = vand.u32 %v1352, 2147483648
      %v1858 = vsel %vm1856, %v1857, %v1855
      %v1859 = vrsqrt.pop %v1353
      %v1860 = vmul.f32 %v1353, %v1859
      %vm1861 = vcmp.eq.f32.partialorder %v1353, inf
      %v1862 = vsel %vm1861, %v1353, %v1860
      %vm1863 = vcmp.eq.f32.partialorder %v1353, 0.0
      %v1864 = vand.u32 %v1353, 2147483648
      %v1865 = vsel %vm1863, %v1864, %v1862
      %v1866 = vrsqrt.pop %v1354
      %v1867 = vmul.f32 %v1354, %v1866
      %vm1868 = vcmp.eq.f32.partialorder %v1354, inf
      %v1869 = vsel %vm1868, %v1354, %v1867
      %vm1870 = vcmp.eq.f32.partialorder %v1354, 0.0
      %v1871 = vand.u32 %v1354, 2147483648
      %v1872 = vsel %vm1870, %v1871, %v1869
      %v1873 = vrsqrt.pop %v1355
      %v1874 = vmul.f32 %v1355, %v1873
      %vm1875 = vcmp.eq.f32.partialorder %v1355, inf
      %v1876 = vsel %vm1875, %v1355, %v1874
      %vm1877 = vcmp.eq.f32.partialorder %v1355, 0.0
      %v1878 = vand.u32 %v1355, 2147483648
      %v1879 = vsel %vm1877, %v1878, %v1876
      %v1880 = vrsqrt.pop %v1356
      %v1881 = vmul.f32 %v1356, %v1880
      %vm1882 = vcmp.eq.f32.partialorder %v1356, inf
      %v1883 = vsel %vm1882, %v1356, %v1881
      %vm1884 = vcmp.eq.f32.partialorder %v1356, 0.0
      %v1885 = vand.u32 %v1356, 2147483648
      %v1886 = vsel %vm1884, %v1885, %v1883
      %v1887 = vrsqrt.pop %v1357
      %v1888 = vmul.f32 %v1357, %v1887
      %vm1889 = vcmp.eq.f32.partialorder %v1357, inf
      %v1890 = vsel %vm1889, %v1357, %v1888
      %vm1891 = vcmp.eq.f32.partialorder %v1357, 0.0
      %v1892 = vand.u32 %v1357, 2147483648
      %v1893 = vsel %vm1891, %v1892, %v1890
      %v1894 = vrsqrt.pop %v1358
      %v1895 = vmul.f32 %v1358, %v1894
      %vm1896 = vcmp.eq.f32.partialorder %v1358, inf
      %v1897 = vsel %vm1896, %v1358, %v1895
      %vm1898 = vcmp.eq.f32.partialorder %v1358, 0.0
      %v1899 = vand.u32 %v1358, 2147483648
      %v1900 = vsel %vm1898, %v1899, %v1897
      %v1901 = vrsqrt.pop %v1359
      %v1902 = vmul.f32 %v1359, %v1901
      %vm1903 = vcmp.eq.f32.partialorder %v1359, inf
      %v1904 = vsel %vm1903, %v1359, %v1902
      %vm1905 = vcmp.eq.f32.partialorder %v1359, 0.0
      %v1906 = vand.u32 %v1359, 2147483648
      %v1907 = vsel %vm1905, %v1906, %v1904
      %v1908 = vrsqrt.pop %v1360
      %v1909 = vmul.f32 %v1360, %v1908
      %vm1910 = vcmp.eq.f32.partialorder %v1360, inf
      %v1911 = vsel %vm1910, %v1360, %v1909
      %vm1912 = vcmp.eq.f32.partialorder %v1360, 0.0
      %v1913 = vand.u32 %v1360, 2147483648
      %v1914 = vsel %vm1912, %v1913, %v1911
      %v1915 = vrsqrt.pop %v1361
      %v1916 = vmul.f32 %v1361, %v1915
      %vm1917 = vcmp.eq.f32.partialorder %v1361, inf
      %v1918 = vsel %vm1917, %v1361, %v1916
      %vm1919 = vcmp.eq.f32.partialorder %v1361, 0.0
      %v1920 = vand.u32 %v1361, 2147483648
      %v1921 = vsel %vm1919, %v1920, %v1918
      %v1922 = vrsqrt.pop %v1362
      %v1923 = vmul.f32 %v1362, %v1922
      %vm1924 = vcmp.eq.f32.partialorder %v1362, inf
      %v1925 = vsel %vm1924, %v1362, %v1923
      %vm1926 = vcmp.eq.f32.partialorder %v1362, 0.0
      %v1927 = vand.u32 %v1362, 2147483648
      %v1928 = vsel %vm1926, %v1927, %v1925
      %v1929 = vrsqrt.pop %v1363
      %v1930 = vmul.f32 %v1363, %v1929
      %vm1931 = vcmp.eq.f32.partialorder %v1363, inf
      %v1932 = vsel %vm1931, %v1363, %v1930
      %vm1933 = vcmp.eq.f32.partialorder %v1363, 0.0
      %v1934 = vand.u32 %v1363, 2147483648
      %v1935 = vsel %vm1933, %v1934, %v1932
      %v1936 = vrsqrt.pop %v1364
      %v1937 = vmul.f32 %v1364, %v1936
      %vm1938 = vcmp.eq.f32.partialorder %v1364, inf
      %v1939 = vsel %vm1938, %v1364, %v1937
      %vm1940 = vcmp.eq.f32.partialorder %v1364, 0.0
      %v1941 = vand.u32 %v1364, 2147483648
      %v1942 = vsel %vm1940, %v1941, %v1939
      %v1943 = vrsqrt.pop %v1365
      %v1944 = vmul.f32 %v1365, %v1943
      %vm1945 = vcmp.eq.f32.partialorder %v1365, inf
      %v1946 = vsel %vm1945, %v1365, %v1944
      %vm1947 = vcmp.eq.f32.partialorder %v1365, 0.0
      %v1948 = vand.u32 %v1365, 2147483648
      %v1949 = vsel %vm1947, %v1948, %v1946
      %v1950 = vrsqrt.pop %v1366
      %v1951 = vmul.f32 %v1366, %v1950
      %vm1952 = vcmp.eq.f32.partialorder %v1366, inf
      %v1953 = vsel %vm1952, %v1366, %v1951
      %vm1954 = vcmp.eq.f32.partialorder %v1366, 0.0
      %v1955 = vand.u32 %v1366, 2147483648
      %v1956 = vsel %vm1954, %v1955, %v1953
      %v1957 = vrsqrt.pop %v1367
      %v1958 = vmul.f32 %v1367, %v1957
      %vm1959 = vcmp.eq.f32.partialorder %v1367, inf
      %v1960 = vsel %vm1959, %v1367, %v1958
      %vm1961 = vcmp.eq.f32.partialorder %v1367, 0.0
      %v1962 = vand.u32 %v1367, 2147483648
      %v1963 = vsel %vm1961, %v1962, %v1960
      %v1964 = vrsqrt.pop %v1368
      %v1965 = vmul.f32 %v1368, %v1964
      %vm1966 = vcmp.eq.f32.partialorder %v1368, inf
      %v1967 = vsel %vm1966, %v1368, %v1965
      %vm1968 = vcmp.eq.f32.partialorder %v1368, 0.0
      %v1969 = vand.u32 %v1368, 2147483648
      %v1970 = vsel %vm1968, %v1969, %v1967
      %v1971 = vrsqrt.pop %v1369
      %v1972 = vmul.f32 %v1369, %v1971
      %vm1973 = vcmp.eq.f32.partialorder %v1369, inf
      %v1974 = vsel %vm1973, %v1369, %v1972
      %vm1975 = vcmp.eq.f32.partialorder %v1369, 0.0
      %v1976 = vand.u32 %v1369, 2147483648
      %v1977 = vsel %vm1975, %v1976, %v1974
      %v1978 = vrsqrt.pop %v1370
      %v1979 = vmul.f32 %v1370, %v1978
      %vm1980 = vcmp.eq.f32.partialorder %v1370, inf
      %v1981 = vsel %vm1980, %v1370, %v1979
      %vm1982 = vcmp.eq.f32.partialorder %v1370, 0.0
      %v1983 = vand.u32 %v1370, 2147483648
      %v1984 = vsel %vm1982, %v1983, %v1981
      %v1985 = vrsqrt.pop %v1371
      %v1986 = vmul.f32 %v1371, %v1985
      %vm1987 = vcmp.eq.f32.partialorder %v1371, inf
      %v1988 = vsel %vm1987, %v1371, %v1986
      %vm1989 = vcmp.eq.f32.partialorder %v1371, 0.0
      %v1990 = vand.u32 %v1371, 2147483648
      %v1991 = vsel %vm1989, %v1990, %v1988
      %v1992 = vrsqrt.pop %v1372
      %v1993 = vmul.f32 %v1372, %v1992
      %vm1994 = vcmp.eq.f32.partialorder %v1372, inf
      %v1995 = vsel %vm1994, %v1372, %v1993
      %vm1996 = vcmp.eq.f32.partialorder %v1372, 0.0
      %v1997 = vand.u32 %v1372, 2147483648
      %v1998 = vsel %vm1996, %v1997, %v1995
      %v1999 = vrsqrt.pop %v1373
      %v2000 = vmul.f32 %v1373, %v1999
      %vm2001 = vcmp.eq.f32.partialorder %v1373, inf
      %v2002 = vsel %vm2001, %v1373, %v2000
      %vm2003 = vcmp.eq.f32.partialorder %v1373, 0.0
      %v2004 = vand.u32 %v1373, 2147483648
      %v2005 = vsel %vm2003, %v2004, %v2002
      %v2006 = vrsqrt.pop %v1374
      %v2007 = vmul.f32 %v1374, %v2006
      %vm2008 = vcmp.eq.f32.partialorder %v1374, inf
      %v2009 = vsel %vm2008, %v1374, %v2007
      %vm2010 = vcmp.eq.f32.partialorder %v1374, 0.0
      %v2011 = vand.u32 %v1374, 2147483648
      %v2012 = vsel %vm2010, %v2011, %v2009
      %v2013 = vrsqrt.pop %v1375
      %v2014 = vmul.f32 %v1375, %v2013
      %vm2015 = vcmp.eq.f32.partialorder %v1375, inf
      %v2016 = vsel %vm2015, %v1375, %v2014
      %vm2017 = vcmp.eq.f32.partialorder %v1375, 0.0
      %v2018 = vand.u32 %v1375, 2147483648
      %v2019 = vsel %vm2017, %v2018, %v2016
      %v2020 = vrsqrt.pop %v1376
      %v2021 = vmul.f32 %v1376, %v2020
      %vm2022 = vcmp.eq.f32.partialorder %v1376, inf
      %v2023 = vsel %vm2022, %v1376, %v2021
      %vm2024 = vcmp.eq.f32.partialorder %v1376, 0.0
      %v2025 = vand.u32 %v1376, 2147483648
      %v2026 = vsel %vm2024, %v2025, %v2023
      %v2027 = vrsqrt.pop %v1377
      %v2028 = vmul.f32 %v1377, %v2027
      %vm2029 = vcmp.eq.f32.partialorder %v1377, inf
      %v2030 = vsel %vm2029, %v1377, %v2028
      %vm2031 = vcmp.eq.f32.partialorder %v1377, 0.0
      %v2032 = vand.u32 %v1377, 2147483648
      %v2033 = vsel %vm2031, %v2032, %v2030
      %v2034 = vrsqrt.pop %v1378
      %v2035 = vmul.f32 %v1378, %v2034
      %vm2036 = vcmp.eq.f32.partialorder %v1378, inf
      %v2037 = vsel %vm2036, %v1378, %v2035
      %vm2038 = vcmp.eq.f32.partialorder %v1378, 0.0
      %v2039 = vand.u32 %v1378, 2147483648
      %v2040 = vsel %vm2038, %v2039, %v2037
      %v2041 = vrsqrt.pop %v1379
      %v2042 = vmul.f32 %v1379, %v2041
      %vm2043 = vcmp.eq.f32.partialorder %v1379, inf
      %v2044 = vsel %vm2043, %v1379, %v2042
      %vm2045 = vcmp.eq.f32.partialorder %v1379, 0.0
      %v2046 = vand.u32 %v1379, 2147483648
      %v2047 = vsel %vm2045, %v2046, %v2044
      %v2048 = vrsqrt.pop %v1380
      %v2049 = vmul.f32 %v1380, %v2048
      %vm2050 = vcmp.eq.f32.partialorder %v1380, inf
      %v2051 = vsel %vm2050, %v1380, %v2049
      %vm2052 = vcmp.eq.f32.partialorder %v1380, 0.0
      %v2053 = vand.u32 %v1380, 2147483648
      %v2054 = vsel %vm2052, %v2053, %v2051
      %v2055 = vrsqrt.pop %v1381
      %v2056 = vmul.f32 %v1381, %v2055
      %vm2057 = vcmp.eq.f32.partialorder %v1381, inf
      %v2058 = vsel %vm2057, %v1381, %v2056
      %vm2059 = vcmp.eq.f32.partialorder %v1381, 0.0
      %v2060 = vand.u32 %v1381, 2147483648
      %v2061 = vsel %vm2059, %v2060, %v2058
      %v2062 = vrsqrt.pop %v1382
      %v2063 = vmul.f32 %v1382, %v2062
      %vm2064 = vcmp.eq.f32.partialorder %v1382, inf
      %v2065 = vsel %vm2064, %v1382, %v2063
      %vm2066 = vcmp.eq.f32.partialorder %v1382, 0.0
      %v2067 = vand.u32 %v1382, 2147483648
      %v2068 = vsel %vm2066, %v2067, %v2065
      %v2069 = vrsqrt.pop %v1383
      %v2070 = vmul.f32 %v1383, %v2069
      %vm2071 = vcmp.eq.f32.partialorder %v1383, inf
      %v2072 = vsel %vm2071, %v1383, %v2070
      %vm2073 = vcmp.eq.f32.partialorder %v1383, 0.0
      %v2074 = vand.u32 %v1383, 2147483648
      %v2075 = vsel %vm2073, %v2074, %v2072
      %v2076 = vrsqrt.pop %v1384
      %v2077 = vmul.f32 %v1384, %v2076
      %vm2078 = vcmp.eq.f32.partialorder %v1384, inf
      %v2079 = vsel %vm2078, %v1384, %v2077
      %vm2080 = vcmp.eq.f32.partialorder %v1384, 0.0
      %v2081 = vand.u32 %v1384, 2147483648
      %v2082 = vsel %vm2080, %v2081, %v2079
      %v2083 = vrsqrt.pop %v1385
      %v2084 = vmul.f32 %v1385, %v2083
      %vm2085 = vcmp.eq.f32.partialorder %v1385, inf
      %v2086 = vsel %vm2085, %v1385, %v2084
      %vm2087 = vcmp.eq.f32.partialorder %v1385, 0.0
      %v2088 = vand.u32 %v1385, 2147483648
      %v2089 = vsel %vm2087, %v2088, %v2086
      %v2090 = vrsqrt.pop %v1386
      %v2091 = vmul.f32 %v1386, %v2090
      %vm2092 = vcmp.eq.f32.partialorder %v1386, inf
      %v2093 = vsel %vm2092, %v1386, %v2091
      %vm2094 = vcmp.eq.f32.partialorder %v1386, 0.0
      %v2095 = vand.u32 %v1386, 2147483648
      %v2096 = vsel %vm2094, %v2095, %v2093
      %v2097 = vrsqrt.pop %v1387
      %v2098 = vmul.f32 %v1387, %v2097
      %vm2099 = vcmp.eq.f32.partialorder %v1387, inf
      %v2100 = vsel %vm2099, %v1387, %v2098
      %vm2101 = vcmp.eq.f32.partialorder %v1387, 0.0
      %v2102 = vand.u32 %v1387, 2147483648
      %v2103 = vsel %vm2101, %v2102, %v2100
      %v2104 = vrsqrt.pop %v1388
      %v2105 = vmul.f32 %v1388, %v2104
      %vm2106 = vcmp.eq.f32.partialorder %v1388, inf
      %v2107 = vsel %vm2106, %v1388, %v2105
      %vm2108 = vcmp.eq.f32.partialorder %v1388, 0.0
      %v2109 = vand.u32 %v1388, 2147483648
      %v2110 = vsel %vm2108, %v2109, %v2107
      %v2111 = vrsqrt.pop %v1389
      %v2112 = vmul.f32 %v1389, %v2111
      %vm2113 = vcmp.eq.f32.partialorder %v1389, inf
      %v2114 = vsel %vm2113, %v1389, %v2112
      %vm2115 = vcmp.eq.f32.partialorder %v1389, 0.0
      %v2116 = vand.u32 %v1389, 2147483648
      %v2117 = vsel %vm2115, %v2116, %v2114
      %v2118 = vrsqrt.pop %v1390
      %v2119 = vmul.f32 %v1390, %v2118
      %vm2120 = vcmp.eq.f32.partialorder %v1390, inf
      %v2121 = vsel %vm2120, %v1390, %v2119
      %vm2122 = vcmp.eq.f32.partialorder %v1390, 0.0
      %v2123 = vand.u32 %v1390, 2147483648
      %v2124 = vsel %vm2122, %v2123, %v2121
      %v2125 = vrsqrt.pop %v1391
      %v2126 = vmul.f32 %v1391, %v2125
      %vm2127 = vcmp.eq.f32.partialorder %v1391, inf
      %v2128 = vsel %vm2127, %v1391, %v2126
      %vm2129 = vcmp.eq.f32.partialorder %v1391, 0.0
      %v2130 = vand.u32 %v1391, 2147483648
      %v2131 = vsel %vm2129, %v2130, %v2128
      %v2132 = vrsqrt.pop %v1392
      %v2133 = vmul.f32 %v1392, %v2132
      %vm2134 = vcmp.eq.f32.partialorder %v1392, inf
      %v2135 = vsel %vm2134, %v1392, %v2133
      %vm2136 = vcmp.eq.f32.partialorder %v1392, 0.0
      %v2137 = vand.u32 %v1392, 2147483648
      %v2138 = vsel %vm2136, %v2137, %v2135
      %v2139 = vrsqrt.pop %v1393
      %v2140 = vmul.f32 %v1393, %v2139
      %vm2141 = vcmp.eq.f32.partialorder %v1393, inf
      %v2142 = vsel %vm2141, %v1393, %v2140
      %vm2143 = vcmp.eq.f32.partialorder %v1393, 0.0
      %v2144 = vand.u32 %v1393, 2147483648
      %v2145 = vsel %vm2143, %v2144, %v2142
      %v2146 = vrsqrt.pop %v1394
      %v2147 = vmul.f32 %v1394, %v2146
      %vm2148 = vcmp.eq.f32.partialorder %v1394, inf
      %v2149 = vsel %vm2148, %v1394, %v2147
      %vm2150 = vcmp.eq.f32.partialorder %v1394, 0.0
      %v2151 = vand.u32 %v1394, 2147483648
      %v2152 = vsel %vm2150, %v2151, %v2149
      %v2153 = vrsqrt.pop %v1395
      %v2154 = vmul.f32 %v1395, %v2153
      %vm2155 = vcmp.eq.f32.partialorder %v1395, inf
      %v2156 = vsel %vm2155, %v1395, %v2154
      %vm2157 = vcmp.eq.f32.partialorder %v1395, 0.0
      %v2158 = vand.u32 %v1395, 2147483648
      %v2159 = vsel %vm2157, %v2158, %v2156
      %v2160 = vrsqrt.pop %v1396
      %v2161 = vmul.f32 %v1396, %v2160
      %vm2162 = vcmp.eq.f32.partialorder %v1396, inf
      %v2163 = vsel %vm2162, %v1396, %v2161
      %vm2164 = vcmp.eq.f32.partialorder %v1396, 0.0
      %v2165 = vand.u32 %v1396, 2147483648
      %v2166 = vsel %vm2164, %v2165, %v2163
      %v2167 = vrsqrt.pop %v1397
      %v2168 = vmul.f32 %v1397, %v2167
      %vm2169 = vcmp.eq.f32.partialorder %v1397, inf
      %v2170 = vsel %vm2169, %v1397, %v2168
      %vm2171 = vcmp.eq.f32.partialorder %v1397, 0.0
      %v2172 = vand.u32 %v1397, 2147483648
      %v2173 = vsel %vm2171, %v2172, %v2170
      %v2174 = vrsqrt.pop %v1398
      %v2175 = vmul.f32 %v1398, %v2174
      %vm2176 = vcmp.eq.f32.partialorder %v1398, inf
      %v2177 = vsel %vm2176, %v1398, %v2175
      %vm2178 = vcmp.eq.f32.partialorder %v1398, 0.0
      %v2179 = vand.u32 %v1398, 2147483648
      %v2180 = vsel %vm2178, %v2179, %v2177
      %v2181 = vrsqrt.pop %v1399
      %v2182 = vmul.f32 %v1399, %v2181
      %vm2183 = vcmp.eq.f32.partialorder %v1399, inf
      %v2184 = vsel %vm2183, %v1399, %v2182
      %vm2185 = vcmp.eq.f32.partialorder %v1399, 0.0
      %v2186 = vand.u32 %v1399, 2147483648
      %v2187 = vsel %vm2185, %v2186, %v2184
      %v2188 = vrsqrt.pop %v1400
      %v2189 = vmul.f32 %v1400, %v2188
      %vm2190 = vcmp.eq.f32.partialorder %v1400, inf
      %v2191 = vsel %vm2190, %v1400, %v2189
      %vm2192 = vcmp.eq.f32.partialorder %v1400, 0.0
      %v2193 = vand.u32 %v1400, 2147483648
      %v2194 = vsel %vm2192, %v2193, %v2191
      %v2195 = vrsqrt.pop %v1401
      %v2196 = vmul.f32 %v1401, %v2195
      %vm2197 = vcmp.eq.f32.partialorder %v1401, inf
      %v2198 = vsel %vm2197, %v1401, %v2196
      %vm2199 = vcmp.eq.f32.partialorder %v1401, 0.0
      %v2200 = vand.u32 %v1401, 2147483648
      %v2201 = vsel %vm2199, %v2200, %v2198
      %v2202 = vrsqrt.pop %v1402
      %v2203 = vmul.f32 %v1402, %v2202
      %vm2204 = vcmp.eq.f32.partialorder %v1402, inf
      %v2205 = vsel %vm2204, %v1402, %v2203
      %vm2206 = vcmp.eq.f32.partialorder %v1402, 0.0
      %v2207 = vand.u32 %v1402, 2147483648
      %v2208 = vsel %vm2206, %v2207, %v2205
      %v2209 = vrsqrt.pop %v1403
      %v2210 = vmul.f32 %v1403, %v2209
      %vm2211 = vcmp.eq.f32.partialorder %v1403, inf
      %v2212 = vsel %vm2211, %v1403, %v2210
      %vm2213 = vcmp.eq.f32.partialorder %v1403, 0.0
      %v2214 = vand.u32 %v1403, 2147483648
      %v2215 = vsel %vm2213, %v2214, %v2212
      %v2216 = vrsqrt.pop %v1404
      %v2217 = vmul.f32 %v1404, %v2216
      %vm2218 = vcmp.eq.f32.partialorder %v1404, inf
      %v2219 = vsel %vm2218, %v1404, %v2217
      %vm2220 = vcmp.eq.f32.partialorder %v1404, 0.0
      %v2221 = vand.u32 %v1404, 2147483648
      %v2222 = vsel %vm2220, %v2221, %v2219
      %v2223 = vrsqrt.pop %v1405
      %v2224 = vmul.f32 %v1405, %v2223
      %vm2225 = vcmp.eq.f32.partialorder %v1405, inf
      %v2226 = vsel %vm2225, %v1405, %v2224
      %vm2227 = vcmp.eq.f32.partialorder %v1405, 0.0
      %v2228 = vand.u32 %v1405, 2147483648
      %v2229 = vsel %vm2227, %v2228, %v2226
      %v2230 = vrsqrt.pop %v1406
      %v2231 = vmul.f32 %v1406, %v2230
      %vm2232 = vcmp.eq.f32.partialorder %v1406, inf
      %v2233 = vsel %vm2232, %v1406, %v2231
      %vm2234 = vcmp.eq.f32.partialorder %v1406, 0.0
      %v2235 = vand.u32 %v1406, 2147483648
      %v2236 = vsel %vm2234, %v2235, %v2233
      %v2237 = vrsqrt.pop %v1407
      %v2238 = vmul.f32 %v1407, %v2237
      %vm2239 = vcmp.eq.f32.partialorder %v1407, inf
      %v2240 = vsel %vm2239, %v1407, %v2238
      %vm2241 = vcmp.eq.f32.partialorder %v1407, 0.0
      %v2242 = vand.u32 %v1407, 2147483648
      %v2243 = vsel %vm2241, %v2242, %v2240
      %v2244 = vrsqrt.pop %v1408
      %v2245 = vmul.f32 %v1408, %v2244
      %vm2246 = vcmp.eq.f32.partialorder %v1408, inf
      %v2247 = vsel %vm2246, %v1408, %v2245
      %vm2248 = vcmp.eq.f32.partialorder %v1408, 0.0
      %v2249 = vand.u32 %v1408, 2147483648
      %v2250 = vsel %vm2248, %v2249, %v2247
      %v2251 = vrsqrt.pop %v1409
      %v2252 = vmul.f32 %v1409, %v2251
      %vm2253 = vcmp.eq.f32.partialorder %v1409, inf
      %v2254 = vsel %vm2253, %v1409, %v2252
      %vm2255 = vcmp.eq.f32.partialorder %v1409, 0.0
      %v2256 = vand.u32 %v1409, 2147483648
      %v2257 = vsel %vm2255, %v2256, %v2254
      %v2258 = vrsqrt.pop %v1410
      %v2259 = vmul.f32 %v1410, %v2258
      %vm2260 = vcmp.eq.f32.partialorder %v1410, inf
      %v2261 = vsel %vm2260, %v1410, %v2259
      %vm2262 = vcmp.eq.f32.partialorder %v1410, 0.0
      %v2263 = vand.u32 %v1410, 2147483648
      %v2264 = vsel %vm2262, %v2263, %v2261
      %v2265 = vrsqrt.pop %v1411
      %v2266 = vmul.f32 %v1411, %v2265
      %vm2267 = vcmp.eq.f32.partialorder %v1411, inf
      %v2268 = vsel %vm2267, %v1411, %v2266
      %vm2269 = vcmp.eq.f32.partialorder %v1411, 0.0
      %v2270 = vand.u32 %v1411, 2147483648
      %v2271 = vsel %vm2269, %v2270, %v2268
      %v2272 = vrsqrt.pop %v1412
      %v2273 = vmul.f32 %v1412, %v2272
      %vm2274 = vcmp.eq.f32.partialorder %v1412, inf
      %v2275 = vsel %vm2274, %v1412, %v2273
      %vm2276 = vcmp.eq.f32.partialorder %v1412, 0.0
      %v2277 = vand.u32 %v1412, 2147483648
      %v2278 = vsel %vm2276, %v2277, %v2275
      %v2279 = vrsqrt.pop %v1413
      %v2280 = vmul.f32 %v1413, %v2279
      %vm2281 = vcmp.eq.f32.partialorder %v1413, inf
      %v2282 = vsel %vm2281, %v1413, %v2280
      %vm2283 = vcmp.eq.f32.partialorder %v1413, 0.0
      %v2284 = vand.u32 %v1413, 2147483648
      %v2285 = vsel %vm2283, %v2284, %v2282
      %v2286 = vrsqrt.pop %v1414
      %v2287 = vmul.f32 %v1414, %v2286
      %vm2288 = vcmp.eq.f32.partialorder %v1414, inf
      %v2289 = vsel %vm2288, %v1414, %v2287
      %vm2290 = vcmp.eq.f32.partialorder %v1414, 0.0
      %v2291 = vand.u32 %v1414, 2147483648
      %v2292 = vsel %vm2290, %v2291, %v2289
      %v2293 = vrsqrt.pop %v1415
      %v2294 = vmul.f32 %v1415, %v2293
      %vm2295 = vcmp.eq.f32.partialorder %v1415, inf
      %v2296 = vsel %vm2295, %v1415, %v2294
      %vm2297 = vcmp.eq.f32.partialorder %v1415, 0.0
      %v2298 = vand.u32 %v1415, 2147483648
      %v2299 = vsel %vm2297, %v2298, %v2296
      %v2300 = vrsqrt.pop %v1416
      %v2301 = vmul.f32 %v1416, %v2300
      %vm2302 = vcmp.eq.f32.partialorder %v1416, inf
      %v2303 = vsel %vm2302, %v1416, %v2301
      %vm2304 = vcmp.eq.f32.partialorder %v1416, 0.0
      %v2305 = vand.u32 %v1416, 2147483648
      %v2306 = vsel %vm2304, %v2305, %v2303
      %v2307 = vrsqrt.pop %v1417
      %v2308 = vmul.f32 %v1417, %v2307
      %vm2309 = vcmp.eq.f32.partialorder %v1417, inf
      %v2310 = vsel %vm2309, %v1417, %v2308
      %vm2311 = vcmp.eq.f32.partialorder %v1417, 0.0
      %v2312 = vand.u32 %v1417, 2147483648
      %v2313 = vsel %vm2311, %v2312, %v2310
      %v2314 = vld [vmem:[%s298] sm:$0xff]
      %v2315 = vld [vmem:[%s298 + $0x8] sm:$0xff]
      %v2316 = vld [vmem:[%s298 + $0x10] sm:$0xff]
      %v2317 = vld [vmem:[%s298 + $0x18] sm:$0xff]
      %v2318 = vld [vmem:[%s298 + $0x20] sm:$0xff]
      %v2319 = vld [vmem:[%s298 + $0x28] sm:$0xff]
      %v2320 = vld [vmem:[%s298 + $0x30] sm:$0xff]
      %v2321 = vld [vmem:[%s298 + $0x38] sm:$0xff]
      %v2322 = vld [vmem:[%s298 + $0x40] sm:$0xff]
      %v2323 = vld [vmem:[%s298 + $0x48] sm:$0xff]
      %v2324 = vld [vmem:[%s298 + $0x50] sm:$0xff]
      %v2325 = vld [vmem:[%s298 + $0x58] sm:$0xff]
      %v2326 = vld [vmem:[%s298 + $0x60] sm:$0xff]
      %v2327 = vld [vmem:[%s298 + $0x68] sm:$0xff]
      %v2328 = vld [vmem:[%s298 + $0x70] sm:$0xff]
      %v2329 = vld [vmem:[%s298 + $0x78] sm:$0xff]
      %v2330 = vld [vmem:[%s298 + $0x80] sm:$0xff]
      %v2331 = vld [vmem:[%s298 + $0x88] sm:$0xff]
      %v2332 = vld [vmem:[%s298 + $0x90] sm:$0xff]
      %v2333 = vld [vmem:[%s298 + $0x98] sm:$0xff]
      %v2334 = vld [vmem:[%s298 + $0xa0] sm:$0xff]
      %v2335 = vld [vmem:[%s298 + $0xa8] sm:$0xff]
      %v2336 = vld [vmem:[%s298 + $0xb0] sm:$0xff]
      %v2337 = vld [vmem:[%s298 + $0xb8] sm:$0xff]
      %v2338 = vld [vmem:[%s298 + $0xc0] sm:$0xff]
      %v2339 = vld [vmem:[%s298 + $0xc8] sm:$0xff]
      %v2340 = vld [vmem:[%s298 + $0xd0] sm:$0xff]
      %v2341 = vld [vmem:[%s298 + $0xd8] sm:$0xff]
      %v2342 = vld [vmem:[%s298 + $0xe0] sm:$0xff]
      %v2343 = vld [vmem:[%s298 + $0xe8] sm:$0xff]
      %v2344 = vld [vmem:[%s298 + $0xf0] sm:$0xff]
      %v2345 = vld [vmem:[%s298 + $0xf8] sm:$0xff]
      %v2346 = vld [vmem:[%s303] sm:$0xf]
      %2348 = vset.pattern.permute.xlu0 0
      %2349 = vperm.xlu0 %2348, %v2314
      %v2350 = vpop.permute.xlu0 %2349
      %2353 = vset.pattern.permute.xlu0 0
      %2354 = vperm.xlu0 %2353, %v2315
      %v2355 = vpop.permute.xlu0 %2354
      %2358 = vset.pattern.permute.xlu0 0
      %2359 = vperm.xlu0 %2358, %v2316
      %v2360 = vpop.permute.xlu0 %2359
      %2363 = vset.pattern.permute.xlu0 0
      %2364 = vperm.xlu0 %2363, %v2317
      %v2365 = vpop.permute.xlu0 %2364
      %2368 = vset.pattern.permute.xlu0 0
      %2369 = vperm.xlu0 %2368, %v2318
      %v2370 = vpop.permute.xlu0 %2369
      %2373 = vset.pattern.permute.xlu0 0
      %2374 = vperm.xlu0 %2373, %v2319
      %v2375 = vpop.permute.xlu0 %2374
      %2378 = vset.pattern.permute.xlu0 0
      %2379 = vperm.xlu0 %2378, %v2320
      %v2380 = vpop.permute.xlu0 %2379
      %2383 = vset.pattern.permute.xlu0 0
      %2384 = vperm.xlu0 %2383, %v2321
      %v2385 = vpop.permute.xlu0 %2384
      %2388 = vset.pattern.permute.xlu0 0
      %2389 = vperm.xlu0 %2388, %v2322
      %v2390 = vpop.permute.xlu0 %2389
      %2393 = vset.pattern.permute.xlu0 0
      %2394 = vperm.xlu0 %2393, %v2323
      %v2395 = vpop.permute.xlu0 %2394
      %2398 = vset.pattern.permute.xlu0 0
      %2399 = vperm.xlu0 %2398, %v2324
      %v2400 = vpop.permute.xlu0 %2399
      %2403 = vset.pattern.permute.xlu0 0
      %2404 = vperm.xlu0 %2403, %v2325
      %v2405 = vpop.permute.xlu0 %2404
      %2408 = vset.pattern.permute.xlu0 0
      %2409 = vperm.xlu0 %2408, %v2326
      %v2410 = vpop.permute.xlu0 %2409
      %2413 = vset.pattern.permute.xlu0 0
      %2414 = vperm.xlu0 %2413, %v2327
      %v2415 = vpop.permute.xlu0 %2414
      %2418 = vset.pattern.permute.xlu0 0
      %2419 = vperm.xlu0 %2418, %v2328
      %v2420 = vpop.permute.xlu0 %2419
      %2423 = vset.pattern.permute.xlu0 0
      %2424 = vperm.xlu0 %2423, %v2329
      %v2425 = vpop.permute.xlu0 %2424
      %2428 = vset.pattern.permute.xlu0 0
      %2429 = vperm.xlu0 %2428, %v2330
      %v2430 = vpop.permute.xlu0 %2429
      %2433 = vset.pattern.permute.xlu0 0
      %2434 = vperm.xlu0 %2433, %v2331
      %v2435 = vpop.permute.xlu0 %2434
      %2438 = vset.pattern.permute.xlu0 0
      %2439 = vperm.xlu0 %2438, %v2332
      %v2440 = vpop.permute.xlu0 %2439
      %2443 = vset.pattern.permute.xlu0 0
      %2444 = vperm.xlu0 %2443, %v2333
      %v2445 = vpop.permute.xlu0 %2444
      %2448 = vset.pattern.permute.xlu0 0
      %2449 = vperm.xlu0 %2448, %v2334
      %v2450 = vpop.permute.xlu0 %2449
      %2453 = vset.pattern.permute.xlu0 0
      %2454 = vperm.xlu0 %2453, %v2335
      %v2455 = vpop.permute.xlu0 %2454
      %2458 = vset.pattern.permute.xlu0 0
      %2459 = vperm.xlu0 %2458, %v2336
      %v2460 = vpop.permute.xlu0 %2459
      %2463 = vset.pattern.permute.xlu0 0
      %2464 = vperm.xlu0 %2463, %v2337
      %v2465 = vpop.permute.xlu0 %2464
      %2468 = vset.pattern.permute.xlu0 0
      %2469 = vperm.xlu0 %2468, %v2338
      %v2470 = vpop.permute.xlu0 %2469
      %2473 = vset.pattern.permute.xlu0 0
      %2474 = vperm.xlu0 %2473, %v2339
      %v2475 = vpop.permute.xlu0 %2474
      %2478 = vset.pattern.permute.xlu0 0
      %2479 = vperm.xlu0 %2478, %v2340
      %v2480 = vpop.permute.xlu0 %2479
      %2483 = vset.pattern.permute.xlu0 0
      %2484 = vperm.xlu0 %2483, %v2341
      %v2485 = vpop.permute.xlu0 %2484
      %2488 = vset.pattern.permute.xlu0 0
      %2489 = vperm.xlu0 %2488, %v2342
      %v2490 = vpop.permute.xlu0 %2489
      %2493 = vset.pattern.permute.xlu0 0
      %2494 = vperm.xlu0 %2493, %v2343
      %v2495 = vpop.permute.xlu0 %2494
      %2498 = vset.pattern.permute.xlu0 0
      %2499 = vperm.xlu0 %2498, %v2344
      %v2500 = vpop.permute.xlu0 %2499
      %2503 = vset.pattern.permute.xlu0 0
      %2504 = vperm.xlu0 %2503, %v2345
      %v2505 = vpop.permute.xlu0 %2504
      %v2508 = vlaneseq
      %v2509 = vshrl.u32 %v2508, 7
      %v2510 = vsub.s32 0, %v2509
      %v2511 = vrot.slane %v2346, %v2510
      %v2512 = vlaneseq
      %v2513 = vshrl.u32 %v2512, 7
      %v2514 = vsub.s32 1, %v2513
      %v2515 = vrot.slane %v2346, %v2514
      %v2516 = vlaneseq
      %v2517 = vshrl.u32 %v2516, 7
      %v2518 = vsub.s32 2, %v2517
      %v2519 = vrot.slane %v2346, %v2518
      %v2520 = vlaneseq
      %v2521 = vshrl.u32 %v2520, 7
      %v2522 = vsub.s32 3, %v2521
      %v2523 = vrot.slane %v2346, %v2522
      %v2528 = vsub.f32 %v2350, %v2511
      %v2529 = vsub.f32 %v2350, %v2515
      %v2530 = vsub.f32 %v2350, %v2519
      %v2531 = vsub.f32 %v2350, %v2523
      %v2532 = vsub.f32 %v2355, %v2511
      %v2533 = vsub.f32 %v2355, %v2515
      %v2534 = vsub.f32 %v2355, %v2519
      %v2535 = vsub.f32 %v2355, %v2523
      %v2536 = vsub.f32 %v2360, %v2511
      %v2537 = vsub.f32 %v2360, %v2515
      %v2538 = vsub.f32 %v2360, %v2519
      %v2539 = vsub.f32 %v2360, %v2523
      %v2540 = vsub.f32 %v2365, %v2511
      %v2541 = vsub.f32 %v2365, %v2515
      %v2542 = vsub.f32 %v2365, %v2519
      %v2543 = vsub.f32 %v2365, %v2523
      %v2544 = vsub.f32 %v2370, %v2511
      %v2545 = vsub.f32 %v2370, %v2515
      %v2546 = vsub.f32 %v2370, %v2519
      %v2547 = vsub.f32 %v2370, %v2523
      %v2548 = vsub.f32 %v2375, %v2511
      %v2549 = vsub.f32 %v2375, %v2515
      %v2550 = vsub.f32 %v2375, %v2519
      %v2551 = vsub.f32 %v2375, %v2523
      %v2552 = vsub.f32 %v2380, %v2511
      %v2553 = vsub.f32 %v2380, %v2515
      %v2554 = vsub.f32 %v2380, %v2519
      %v2555 = vsub.f32 %v2380, %v2523
      %v2556 = vsub.f32 %v2385, %v2511
      %v2557 = vsub.f32 %v2385, %v2515
      %v2558 = vsub.f32 %v2385, %v2519
      %v2559 = vsub.f32 %v2385, %v2523
      %v2560 = vsub.f32 %v2390, %v2511
      %v2561 = vsub.f32 %v2390, %v2515
      %v2562 = vsub.f32 %v2390, %v2519
      %v2563 = vsub.f32 %v2390, %v2523
      %v2564 = vsub.f32 %v2395, %v2511
      %v2565 = vsub.f32 %v2395, %v2515
      %v2566 = vsub.f32 %v2395, %v2519
      %v2567 = vsub.f32 %v2395, %v2523
      %v2568 = vsub.f32 %v2400, %v2511
      %v2569 = vsub.f32 %v2400, %v2515
      %v2570 = vsub.f32 %v2400, %v2519
      %v2571 = vsub.f32 %v2400, %v2523
      %v2572 = vsub.f32 %v2405, %v2511
      %v2573 = vsub.f32 %v2405, %v2515
      %v2574 = vsub.f32 %v2405, %v2519
      %v2575 = vsub.f32 %v2405, %v2523
      %v2576 = vsub.f32 %v2410, %v2511
      %v2577 = vsub.f32 %v2410, %v2515
      %v2578 = vsub.f32 %v2410, %v2519
      %v2579 = vsub.f32 %v2410, %v2523
      %v2580 = vsub.f32 %v2415, %v2511
      %v2581 = vsub.f32 %v2415, %v2515
      %v2582 = vsub.f32 %v2415, %v2519
      %v2583 = vsub.f32 %v2415, %v2523
      %v2584 = vsub.f32 %v2420, %v2511
      %v2585 = vsub.f32 %v2420, %v2515
      %v2586 = vsub.f32 %v2420, %v2519
      %v2587 = vsub.f32 %v2420, %v2523
      %v2588 = vsub.f32 %v2425, %v2511
      %v2589 = vsub.f32 %v2425, %v2515
      %v2590 = vsub.f32 %v2425, %v2519
      %v2591 = vsub.f32 %v2425, %v2523
      %v2592 = vsub.f32 %v2430, %v2511
      %v2593 = vsub.f32 %v2430, %v2515
      %v2594 = vsub.f32 %v2430, %v2519
      %v2595 = vsub.f32 %v2430, %v2523
      %v2596 = vsub.f32 %v2435, %v2511
      %v2597 = vsub.f32 %v2435, %v2515
      %v2598 = vsub.f32 %v2435, %v2519
      %v2599 = vsub.f32 %v2435, %v2523
      %v2600 = vsub.f32 %v2440, %v2511
      %v2601 = vsub.f32 %v2440, %v2515
      %v2602 = vsub.f32 %v2440, %v2519
      %v2603 = vsub.f32 %v2440, %v2523
      %v2604 = vsub.f32 %v2445, %v2511
      %v2605 = vsub.f32 %v2445, %v2515
      %v2606 = vsub.f32 %v2445, %v2519
      %v2607 = vsub.f32 %v2445, %v2523
      %v2608 = vsub.f32 %v2450, %v2511
      %v2609 = vsub.f32 %v2450, %v2515
      %v2610 = vsub.f32 %v2450, %v2519
      %v2611 = vsub.f32 %v2450, %v2523
      %v2612 = vsub.f32 %v2455, %v2511
      %v2613 = vsub.f32 %v2455, %v2515
      %v2614 = vsub.f32 %v2455, %v2519
      %v2615 = vsub.f32 %v2455, %v2523
      %v2616 = vsub.f32 %v2460, %v2511
      %v2617 = vsub.f32 %v2460, %v2515
      %v2618 = vsub.f32 %v2460, %v2519
      %v2619 = vsub.f32 %v2460, %v2523
      %v2620 = vsub.f32 %v2465, %v2511
      %v2621 = vsub.f32 %v2465, %v2515
      %v2622 = vsub.f32 %v2465, %v2519
      %v2623 = vsub.f32 %v2465, %v2523
      %v2624 = vsub.f32 %v2470, %v2511
      %v2625 = vsub.f32 %v2470, %v2515
      %v2626 = vsub.f32 %v2470, %v2519
      %v2627 = vsub.f32 %v2470, %v2523
      %v2628 = vsub.f32 %v2475, %v2511
      %v2629 = vsub.f32 %v2475, %v2515
      %v2630 = vsub.f32 %v2475, %v2519
      %v2631 = vsub.f32 %v2475, %v2523
      %v2632 = vsub.f32 %v2480, %v2511
      %v2633 = vsub.f32 %v2480, %v2515
      %v2634 = vsub.f32 %v2480, %v2519
      %v2635 = vsub.f32 %v2480, %v2523
      %v2636 = vsub.f32 %v2485, %v2511
      %v2637 = vsub.f32 %v2485, %v2515
      %v2638 = vsub.f32 %v2485, %v2519
      %v2639 = vsub.f32 %v2485, %v2523
      %v2640 = vsub.f32 %v2490, %v2511
      %v2641 = vsub.f32 %v2490, %v2515
      %v2642 = vsub.f32 %v2490, %v2519
      %v2643 = vsub.f32 %v2490, %v2523
      %v2644 = vsub.f32 %v2495, %v2511
      %v2645 = vsub.f32 %v2495, %v2515
      %v2646 = vsub.f32 %v2495, %v2519
      %v2647 = vsub.f32 %v2495, %v2523
      %v2648 = vsub.f32 %v2500, %v2511
      %v2649 = vsub.f32 %v2500, %v2515
      %v2650 = vsub.f32 %v2500, %v2519
      %v2651 = vsub.f32 %v2500, %v2523
      %v2652 = vsub.f32 %v2505, %v2511
      %v2653 = vsub.f32 %v2505, %v2515
      %v2654 = vsub.f32 %v2505, %v2519
      %v2655 = vsub.f32 %v2505, %v2523
      %v2656 = vand.u32 2147483647, %v2528
      %v2657 = vand.u32 2147483647, %v2529
      %v2658 = vand.u32 2147483647, %v2530
      %v2659 = vand.u32 2147483647, %v2531
      %v2660 = vand.u32 2147483647, %v2532
      %v2661 = vand.u32 2147483647, %v2533
      %v2662 = vand.u32 2147483647, %v2534
      %v2663 = vand.u32 2147483647, %v2535
      %v2664 = vand.u32 2147483647, %v2536
      %v2665 = vand.u32 2147483647, %v2537
      %v2666 = vand.u32 2147483647, %v2538
      %v2667 = vand.u32 2147483647, %v2539
      %v2668 = vand.u32 2147483647, %v2540
      %v2669 = vand.u32 2147483647, %v2541
      %v2670 = vand.u32 2147483647, %v2542
      %v2671 = vand.u32 2147483647, %v2543
      %v2672 = vand.u32 2147483647, %v2544
      %v2673 = vand.u32 2147483647, %v2545
      %v2674 = vand.u32 2147483647, %v2546
      %v2675 = vand.u32 2147483647, %v2547
      %v2676 = vand.u32 2147483647, %v2548
      %v2677 = vand.u32 2147483647, %v2549
      %v2678 = vand.u32 2147483647, %v2550
      %v2679 = vand.u32 2147483647, %v2551
      %v2680 = vand.u32 2147483647, %v2552
      %v2681 = vand.u32 2147483647, %v2553
      %v2682 = vand.u32 2147483647, %v2554
      %v2683 = vand.u32 2147483647, %v2555
      %v2684 = vand.u32 2147483647, %v2556
      %v2685 = vand.u32 2147483647, %v2557
      %v2686 = vand.u32 2147483647, %v2558
      %v2687 = vand.u32 2147483647, %v2559
      %v2688 = vand.u32 2147483647, %v2560
      %v2689 = vand.u32 2147483647, %v2561
      %v2690 = vand.u32 2147483647, %v2562
      %v2691 = vand.u32 2147483647, %v2563
      %v2692 = vand.u32 2147483647, %v2564
      %v2693 = vand.u32 2147483647, %v2565
      %v2694 = vand.u32 2147483647, %v2566
      %v2695 = vand.u32 2147483647, %v2567
      %v2696 = vand.u32 2147483647, %v2568
      %v2697 = vand.u32 2147483647, %v2569
      %v2698 = vand.u32 2147483647, %v2570
      %v2699 = vand.u32 2147483647, %v2571
      %v2700 = vand.u32 2147483647, %v2572
      %v2701 = vand.u32 2147483647, %v2573
      %v2702 = vand.u32 2147483647, %v2574
      %v2703 = vand.u32 2147483647, %v2575
      %v2704 = vand.u32 2147483647, %v2576
      %v2705 = vand.u32 2147483647, %v2577
      %v2706 = vand.u32 2147483647, %v2578
      %v2707 = vand.u32 2147483647, %v2579
      %v2708 = vand.u32 2147483647, %v2580
      %v2709 = vand.u32 2147483647, %v2581
      %v2710 = vand.u32 2147483647, %v2582
      %v2711 = vand.u32 2147483647, %v2583
      %v2712 = vand.u32 2147483647, %v2584
      %v2713 = vand.u32 2147483647, %v2585
      %v2714 = vand.u32 2147483647, %v2586
      %v2715 = vand.u32 2147483647, %v2587
      %v2716 = vand.u32 2147483647, %v2588
      %v2717 = vand.u32 2147483647, %v2589
      %v2718 = vand.u32 2147483647, %v2590
      %v2719 = vand.u32 2147483647, %v2591
      %v2720 = vand.u32 2147483647, %v2592
      %v2721 = vand.u32 2147483647, %v2593
      %v2722 = vand.u32 2147483647, %v2594
      %v2723 = vand.u32 2147483647, %v2595
      %v2724 = vand.u32 2147483647, %v2596
      %v2725 = vand.u32 2147483647, %v2597
      %v2726 = vand.u32 2147483647, %v2598
      %v2727 = vand.u32 2147483647, %v2599
      %v2728 = vand.u32 2147483647, %v2600
      %v2729 = vand.u32 2147483647, %v2601
      %v2730 = vand.u32 2147483647, %v2602
      %v2731 = vand.u32 2147483647, %v2603
      %v2732 = vand.u32 2147483647, %v2604
      %v2733 = vand.u32 2147483647, %v2605
      %v2734 = vand.u32 2147483647, %v2606
      %v2735 = vand.u32 2147483647, %v2607
      %v2736 = vand.u32 2147483647, %v2608
      %v2737 = vand.u32 2147483647, %v2609
      %v2738 = vand.u32 2147483647, %v2610
      %v2739 = vand.u32 2147483647, %v2611
      %v2740 = vand.u32 2147483647, %v2612
      %v2741 = vand.u32 2147483647, %v2613
      %v2742 = vand.u32 2147483647, %v2614
      %v2743 = vand.u32 2147483647, %v2615
      %v2744 = vand.u32 2147483647, %v2616
      %v2745 = vand.u32 2147483647, %v2617
      %v2746 = vand.u32 2147483647, %v2618
      %v2747 = vand.u32 2147483647, %v2619
      %v2748 = vand.u32 2147483647, %v2620
      %v2749 = vand.u32 2147483647, %v2621
      %v2750 = vand.u32 2147483647, %v2622
      %v2751 = vand.u32 2147483647, %v2623
      %v2752 = vand.u32 2147483647, %v2624
      %v2753 = vand.u32 2147483647, %v2625
      %v2754 = vand.u32 2147483647, %v2626
      %v2755 = vand.u32 2147483647, %v2627
      %v2756 = vand.u32 2147483647, %v2628
      %v2757 = vand.u32 2147483647, %v2629
      %v2758 = vand.u32 2147483647, %v2630
      %v2759 = vand.u32 2147483647, %v2631
      %v2760 = vand.u32 2147483647, %v2632
      %v2761 = vand.u32 2147483647, %v2633
      %v2762 = vand.u32 2147483647, %v2634
      %v2763 = vand.u32 2147483647, %v2635
      %v2764 = vand.u32 2147483647, %v2636
      %v2765 = vand.u32 2147483647, %v2637
      %v2766 = vand.u32 2147483647, %v2638
      %v2767 = vand.u32 2147483647, %v2639
      %v2768 = vand.u32 2147483647, %v2640
      %v2769 = vand.u32 2147483647, %v2641
      %v2770 = vand.u32 2147483647, %v2642
      %v2771 = vand.u32 2147483647, %v2643
      %v2772 = vand.u32 2147483647, %v2644
      %v2773 = vand.u32 2147483647, %v2645
      %v2774 = vand.u32 2147483647, %v2646
      %v2775 = vand.u32 2147483647, %v2647
      %v2776 = vand.u32 2147483647, %v2648
      %v2777 = vand.u32 2147483647, %v2649
      %v2778 = vand.u32 2147483647, %v2650
      %v2779 = vand.u32 2147483647, %v2651
      %v2780 = vand.u32 2147483647, %v2652
      %v2781 = vand.u32 2147483647, %v2653
      %v2782 = vand.u32 2147483647, %v2654
      %v2783 = vand.u32 2147483647, %v2655
      %v2784 = vld [vmem:[%s309] sm:$0xff]
      %v2785 = vld [vmem:[%s309 + $0x8] sm:$0xff]
      %v2786 = vld [vmem:[%s309 + $0x10] sm:$0xff]
      %v2787 = vld [vmem:[%s309 + $0x18] sm:$0xff]
      %v2788 = vmul.f32 %v2656, %v1424
      %v2789 = vmul.f32 %v2657, %v1431
      %v2790 = vmul.f32 %v2658, %v1438
      %v2791 = vmul.f32 %v2659, %v1445
      %v2792 = vmul.f32 %v2660, %v1452
      %v2793 = vmul.f32 %v2661, %v1459
      %v2794 = vmul.f32 %v2662, %v1466
      %v2795 = vmul.f32 %v2663, %v1473
      %v2796 = vmul.f32 %v2664, %v1480
      %v2797 = vmul.f32 %v2665, %v1487
      %v2798 = vmul.f32 %v2666, %v1494
      %v2799 = vmul.f32 %v2667, %v1501
      %v2800 = vmul.f32 %v2668, %v1508
      %v2801 = vmul.f32 %v2669, %v1515
      %v2802 = vmul.f32 %v2670, %v1522
      %v2803 = vmul.f32 %v2671, %v1529
      %v2804 = vmul.f32 %v2672, %v1536
      %v2805 = vmul.f32 %v2673, %v1543
      %v2806 = vmul.f32 %v2674, %v1550
      %v2807 = vmul.f32 %v2675, %v1557
      %v2808 = vmul.f32 %v2676, %v1564
      %v2809 = vmul.f32 %v2677, %v1571
      %v2810 = vmul.f32 %v2678, %v1578
      %v2811 = vmul.f32 %v2679, %v1585
      %v2812 = vmul.f32 %v2680, %v1592
      %v2813 = vmul.f32 %v2681, %v1599
      %v2814 = vmul.f32 %v2682, %v1606
      %v2815 = vmul.f32 %v2683, %v1613
      %v2816 = vmul.f32 %v2684, %v1620
      %v2817 = vmul.f32 %v2685, %v1627
      %v2818 = vmul.f32 %v2686, %v1634
      %v2819 = vmul.f32 %v2687, %v1641
      %v2820 = vmul.f32 %v2688, %v1648
      %v2821 = vmul.f32 %v2689, %v1655
      %v2822 = vmul.f32 %v2690, %v1662
      %v2823 = vmul.f32 %v2691, %v1669
      %v2824 = vmul.f32 %v2692, %v1676
      %v2825 = vmul.f32 %v2693, %v1683
      %v2826 = vmul.f32 %v2694, %v1690
      %v2827 = vmul.f32 %v2695, %v1697
      %v2828 = vmul.f32 %v2696, %v1704
      %v2829 = vmul.f32 %v2697, %v1711
      %v2830 = vmul.f32 %v2698, %v1718
      %v2831 = vmul.f32 %v2699, %v1725
      %v2832 = vmul.f32 %v2700, %v1732
      %v2833 = vmul.f32 %v2701, %v1739
      %v2834 = vmul.f32 %v2702, %v1746
      %v2835 = vmul.f32 %v2703, %v1753
      %v2836 = vmul.f32 %v2704, %v1760
      %v2837 = vmul.f32 %v2705, %v1767
      %v2838 = vmul.f32 %v2706, %v1774
      %v2839 = vmul.f32 %v2707, %v1781
      %v2840 = vmul.f32 %v2708, %v1788
      %v2841 = vmul.f32 %v2709, %v1795
      %v2842 = vmul.f32 %v2710, %v1802
      %v2843 = vmul.f32 %v2711, %v1809
      %v2844 = vmul.f32 %v2712, %v1816
      %v2845 = vmul.f32 %v2713, %v1823
      %v2846 = vmul.f32 %v2714, %v1830
      %v2847 = vmul.f32 %v2715, %v1837
      %v2848 = vmul.f32 %v2716, %v1844
      %v2849 = vmul.f32 %v2717, %v1851
      %v2850 = vmul.f32 %v2718, %v1858
      %v2851 = vmul.f32 %v2719, %v1865
      %v2852 = vmul.f32 %v2720, %v1872
      %v2853 = vmul.f32 %v2721, %v1879
      %v2854 = vmul.f32 %v2722, %v1886
      %v2855 = vmul.f32 %v2723, %v1893
      %v2856 = vmul.f32 %v2724, %v1900
      %v2857 = vmul.f32 %v2725, %v1907
      %v2858 = vmul.f32 %v2726, %v1914
      %v2859 = vmul.f32 %v2727, %v1921
      %v2860 = vmul.f32 %v2728, %v1928
      %v2861 = vmul.f32 %v2729, %v1935
      %v2862 = vmul.f32 %v2730, %v1942
      %v2863 = vmul.f32 %v2731, %v1949
      %v2864 = vmul.f32 %v2732, %v1956
      %v2865 = vmul.f32 %v2733, %v1963
      %v2866 = vmul.f32 %v2734, %v1970
      %v2867 = vmul.f32 %v2735, %v1977
      %v2868 = vmul.f32 %v2736, %v1984
      %v2869 = vmul.f32 %v2737, %v1991
      %v2870 = vmul.f32 %v2738, %v1998
      %v2871 = vmul.f32 %v2739, %v2005
      %v2872 = vmul.f32 %v2740, %v2012
      %v2873 = vmul.f32 %v2741, %v2019
      %v2874 = vmul.f32 %v2742, %v2026
      %v2875 = vmul.f32 %v2743, %v2033
      %v2876 = vmul.f32 %v2744, %v2040
      %v2877 = vmul.f32 %v2745, %v2047
      %v2878 = vmul.f32 %v2746, %v2054
      %v2879 = vmul.f32 %v2747, %v2061
      %v2880 = vmul.f32 %v2748, %v2068
      %v2881 = vmul.f32 %v2749, %v2075
      %v2882 = vmul.f32 %v2750, %v2082
      %v2883 = vmul.f32 %v2751, %v2089
      %v2884 = vmul.f32 %v2752, %v2096
      %v2885 = vmul.f32 %v2753, %v2103
      %v2886 = vmul.f32 %v2754, %v2110
      %v2887 = vmul.f32 %v2755, %v2117
      %v2888 = vmul.f32 %v2756, %v2124
      %v2889 = vmul.f32 %v2757, %v2131
      %v2890 = vmul.f32 %v2758, %v2138
      %v2891 = vmul.f32 %v2759, %v2145
      %v2892 = vmul.f32 %v2760, %v2152
      %v2893 = vmul.f32 %v2761, %v2159
      %v2894 = vmul.f32 %v2762, %v2166
      %v2895 = vmul.f32 %v2763, %v2173
      %v2896 = vmul.f32 %v2764, %v2180
      %v2897 = vmul.f32 %v2765, %v2187
      %v2898 = vmul.f32 %v2766, %v2194
      %v2899 = vmul.f32 %v2767, %v2201
      %v2900 = vmul.f32 %v2768, %v2208
      %v2901 = vmul.f32 %v2769, %v2215
      %v2902 = vmul.f32 %v2770, %v2222
      %v2903 = vmul.f32 %v2771, %v2229
      %v2904 = vmul.f32 %v2772, %v2236
      %v2905 = vmul.f32 %v2773, %v2243
      %v2906 = vmul.f32 %v2774, %v2250
      %v2907 = vmul.f32 %v2775, %v2257
      %v2908 = vmul.f32 %v2776, %v2264
      %v2909 = vmul.f32 %v2777, %v2271
      %v2910 = vmul.f32 %v2778, %v2278
      %v2911 = vmul.f32 %v2779, %v2285
      %v2912 = vmul.f32 %v2780, %v2292
      %v2913 = vmul.f32 %v2781, %v2299
      %v2914 = vmul.f32 %v2782, %v2306
      %v2915 = vmul.f32 %v2783, %v2313
      %v2916 = vadd.f32 %v2788, %v2792
      %v2917 = vadd.f32 %v2916, %v2796
      %v2918 = vadd.f32 %v2917, %v2800
      %v2919 = vadd.f32 %v2918, %v2804
      %v2920 = vadd.f32 %v2919, %v2808
      %v2921 = vadd.f32 %v2920, %v2812
      %v2922 = vadd.f32 %v2921, %v2816
      %v2923 = vadd.f32 %v2922, %v2820
      %v2924 = vadd.f32 %v2923, %v2824
      %v2925 = vadd.f32 %v2924, %v2828
      %v2926 = vadd.f32 %v2925, %v2832
      %v2927 = vadd.f32 %v2926, %v2836
      %v2928 = vadd.f32 %v2927, %v2840
      %v2929 = vadd.f32 %v2928, %v2844
      %v2930 = vadd.f32 %v2929, %v2848
      %v2931 = vadd.f32 %v2930, %v2852
      %v2932 = vadd.f32 %v2931, %v2856
      %v2933 = vadd.f32 %v2932, %v2860
      %v2934 = vadd.f32 %v2933, %v2864
      %v2935 = vadd.f32 %v2934, %v2868
      %v2936 = vadd.f32 %v2935, %v2872
      %v2937 = vadd.f32 %v2936, %v2876
      %v2938 = vadd.f32 %v2937, %v2880
      %v2939 = vadd.f32 %v2938, %v2884
      %v2940 = vadd.f32 %v2939, %v2888
      %v2941 = vadd.f32 %v2940, %v2892
      %v2942 = vadd.f32 %v2941, %v2896
      %v2943 = vadd.f32 %v2942, %v2900
      %v2944 = vadd.f32 %v2943, %v2904
      %v2945 = vadd.f32 %v2944, %v2908
      %v2946 = vadd.f32 %v2945, %v2912
      %v2947 = vadd.f32 %v2789, %v2793
      %v2948 = vadd.f32 %v2947, %v2797
      %v2949 = vadd.f32 %v2948, %v2801
      %v2950 = vadd.f32 %v2949, %v2805
      %v2951 = vadd.f32 %v2950, %v2809
      %v2952 = vadd.f32 %v2951, %v2813
      %v2953 = vadd.f32 %v2952, %v2817
      %v2954 = vadd.f32 %v2953, %v2821
      %v2955 = vadd.f32 %v2954, %v2825
      %v2956 = vadd.f32 %v2955, %v2829
      %v2957 = vadd.f32 %v2956, %v2833
      %v2958 = vadd.f32 %v2957, %v2837
      %v2959 = vadd.f32 %v2958, %v2841
      %v2960 = vadd.f32 %v2959, %v2845
      %v2961 = vadd.f32 %v2960, %v2849
      %v2962 = vadd.f32 %v2961, %v2853
      %v2963 = vadd.f32 %v2962, %v2857
      %v2964 = vadd.f32 %v2963, %v2861
      %v2965 = vadd.f32 %v2964, %v2865
      %v2966 = vadd.f32 %v2965, %v2869
      %v2967 = vadd.f32 %v2966, %v2873
      %v2968 = vadd.f32 %v2967, %v2877
      %v2969 = vadd.f32 %v2968, %v2881
      %v2970 = vadd.f32 %v2969, %v2885
      %v2971 = vadd.f32 %v2970, %v2889
      %v2972 = vadd.f32 %v2971, %v2893
      %v2973 = vadd.f32 %v2972, %v2897
      %v2974 = vadd.f32 %v2973, %v2901
      %v2975 = vadd.f32 %v2974, %v2905
      %v2976 = vadd.f32 %v2975, %v2909
      %v2977 = vadd.f32 %v2976, %v2913
      %v2978 = vadd.f32 %v2790, %v2794
      %v2979 = vadd.f32 %v2978, %v2798
      %v2980 = vadd.f32 %v2979, %v2802
      %v2981 = vadd.f32 %v2980, %v2806
      %v2982 = vadd.f32 %v2981, %v2810
      %v2983 = vadd.f32 %v2982, %v2814
      %v2984 = vadd.f32 %v2983, %v2818
      %v2985 = vadd.f32 %v2984, %v2822
      %v2986 = vadd.f32 %v2985, %v2826
      %v2987 = vadd.f32 %v2986, %v2830
      %v2988 = vadd.f32 %v2987, %v2834
      %v2989 = vadd.f32 %v2988, %v2838
      %v2990 = vadd.f32 %v2989, %v2842
      %v2991 = vadd.f32 %v2990, %v2846
      %v2992 = vadd.f32 %v2991, %v2850
      %v2993 = vadd.f32 %v2992, %v2854
      %v2994 = vadd.f32 %v2993, %v2858
      %v2995 = vadd.f32 %v2994, %v2862
      %v2996 = vadd.f32 %v2995, %v2866
      %v2997 = vadd.f32 %v2996, %v2870
      %v2998 = vadd.f32 %v2997, %v2874
      %v2999 = vadd.f32 %v2998, %v2878
      %v3000 = vadd.f32 %v2999, %v2882
      %v3001 = vadd.f32 %v3000, %v2886
      %v3002 = vadd.f32 %v3001, %v2890
      %v3003 = vadd.f32 %v3002, %v2894
      %v3004 = vadd.f32 %v3003, %v2898
      %v3005 = vadd.f32 %v3004, %v2902
      %v3006 = vadd.f32 %v3005, %v2906
      %v3007 = vadd.f32 %v3006, %v2910
      %v3008 = vadd.f32 %v3007, %v2914
      %v3009 = vadd.f32 %v2791, %v2795
      %v3010 = vadd.f32 %v3009, %v2799
      %v3011 = vadd.f32 %v3010, %v2803
      %v3012 = vadd.f32 %v3011, %v2807
      %v3013 = vadd.f32 %v3012, %v2811
      %v3014 = vadd.f32 %v3013, %v2815
      %v3015 = vadd.f32 %v3014, %v2819
      %v3016 = vadd.f32 %v3015, %v2823
      %v3017 = vadd.f32 %v3016, %v2827
      %v3018 = vadd.f32 %v3017, %v2831
      %v3019 = vadd.f32 %v3018, %v2835
      %v3020 = vadd.f32 %v3019, %v2839
      %v3021 = vadd.f32 %v3020, %v2843
      %v3022 = vadd.f32 %v3021, %v2847
      %v3023 = vadd.f32 %v3022, %v2851
      %v3024 = vadd.f32 %v3023, %v2855
      %v3025 = vadd.f32 %v3024, %v2859
      %v3026 = vadd.f32 %v3025, %v2863
      %v3027 = vadd.f32 %v3026, %v2867
      %v3028 = vadd.f32 %v3027, %v2871
      %v3029 = vadd.f32 %v3028, %v2875
      %v3030 = vadd.f32 %v3029, %v2879
      %v3031 = vadd.f32 %v3030, %v2883
      %v3032 = vadd.f32 %v3031, %v2887
      %v3033 = vadd.f32 %v3032, %v2891
      %v3034 = vadd.f32 %v3033, %v2895
      %v3035 = vadd.f32 %v3034, %v2899
      %v3036 = vadd.f32 %v3035, %v2903
      %v3037 = vadd.f32 %v3036, %v2907
      %v3038 = vadd.f32 %v3037, %v2911
      %v3039 = vadd.f32 %v3038, %v2915
      %v3040 = vadd.f32 %v2784, %v2946
      %v3041 = vadd.f32 %v2785, %v2977
      %v3042 = vadd.f32 %v2786, %v3008
      %v3043 = vadd.f32 %v2787, %v3039
      %3044 = vst [vmem:[%s309] sm:$0xff] %v3040
      %3045 = vst [vmem:[%s309 + $0x8] sm:$0xff] %v3041
      %3046 = vst [vmem:[%s309 + $0x10] sm:$0xff] %v3042
      %3047 = vst [vmem:[%s309 + $0x18] sm:$0xff] %v3043
      %v3048 = vld [vmem:[%s314] sm:$0xff]
      %v3049 = vld [vmem:[%s314 + $0x8] sm:$0xff]
      %v3050 = vld [vmem:[%s314 + $0x10] sm:$0xff]
      %v3051 = vld [vmem:[%s314 + $0x18] sm:$0xff]
      %v3052 = vadd.f32 %v1424, %v1452
      %v3053 = vadd.f32 %v3052, %v1480
      %v3054 = vadd.f32 %v3053, %v1508
      %v3055 = vadd.f32 %v3054, %v1536
      %v3056 = vadd.f32 %v3055, %v1564
      %v3057 = vadd.f32 %v3056, %v1592
      %v3058 = vadd.f32 %v3057, %v1620
      %v3059 = vadd.f32 %v3058, %v1648
      %v3060 = vadd.f32 %v3059, %v1676
      %v3061 = vadd.f32 %v3060, %v1704
      %v3062 = vadd.f32 %v3061, %v1732
      %v3063 = vadd.f32 %v3062, %v1760
      %v3064 = vadd.f32 %v3063, %v1788
      %v3065 = vadd.f32 %v3064, %v1816
      %v3066 = vadd.f32 %v3065, %v1844
      %v3067 = vadd.f32 %v3066, %v1872
      %v3068 = vadd.f32 %v3067, %v1900
      %v3069 = vadd.f32 %v3068, %v1928
      %v3070 = vadd.f32 %v3069, %v1956
      %v3071 = vadd.f32 %v3070, %v1984
      %v3072 = vadd.f32 %v3071, %v2012
      %v3073 = vadd.f32 %v3072, %v2040
      %v3074 = vadd.f32 %v3073, %v2068
      %v3075 = vadd.f32 %v3074, %v2096
      %v3076 = vadd.f32 %v3075, %v2124
      %v3077 = vadd.f32 %v3076, %v2152
      %v3078 = vadd.f32 %v3077, %v2180
      %v3079 = vadd.f32 %v3078, %v2208
      %v3080 = vadd.f32 %v3079, %v2236
      %v3081 = vadd.f32 %v3080, %v2264
      %v3082 = vadd.f32 %v3081, %v2292
      %v3083 = vadd.f32 %v1431, %v1459
      %v3084 = vadd.f32 %v3083, %v1487
      %v3085 = vadd.f32 %v3084, %v1515
      %v3086 = vadd.f32 %v3085, %v1543
      %v3087 = vadd.f32 %v3086, %v1571
      %v3088 = vadd.f32 %v3087, %v1599
      %v3089 = vadd.f32 %v3088, %v1627
      %v3090 = vadd.f32 %v3089, %v1655
      %v3091 = vadd.f32 %v3090, %v1683
      %v3092 = vadd.f32 %v3091, %v1711
      %v3093 = vadd.f32 %v3092, %v1739
      %v3094 = vadd.f32 %v3093, %v1767
      %v3095 = vadd.f32 %v3094, %v1795
      %v3096 = vadd.f32 %v3095, %v1823
      %v3097 = vadd.f32 %v3096, %v1851
      %v3098 = vadd.f32 %v3097, %v1879
      %v3099 = vadd.f32 %v3098, %v1907
      %v3100 = vadd.f32 %v3099, %v1935
      %v3101 = vadd.f32 %v3100, %v1963
      %v3102 = vadd.f32 %v3101, %v1991
      %v3103 = vadd.f32 %v3102, %v2019
      %v3104 = vadd.f32 %v3103, %v2047
      %v3105 = vadd.f32 %v3104, %v2075
      %v3106 = vadd.f32 %v3105, %v2103
      %v3107 = vadd.f32 %v3106, %v2131
      %v3108 = vadd.f32 %v3107, %v2159
      %v3109 = vadd.f32 %v3108, %v2187
      %v3110 = vadd.f32 %v3109, %v2215
      %v3111 = vadd.f32 %v3110, %v2243
      %v3112 = vadd.f32 %v3111, %v2271
      %v3113 = vadd.f32 %v3112, %v2299
      %v3114 = vadd.f32 %v1438, %v1466
      %v3115 = vadd.f32 %v3114, %v1494
      %v3116 = vadd.f32 %v3115, %v1522
      %v3117 = vadd.f32 %v3116, %v1550
      %v3118 = vadd.f32 %v3117, %v1578
      %v3119 = vadd.f32 %v3118, %v1606
      %v3120 = vadd.f32 %v3119, %v1634
      %v3121 = vadd.f32 %v3120, %v1662
      %v3122 = vadd.f32 %v3121, %v1690
      %v3123 = vadd.f32 %v3122, %v1718
      %v3124 = vadd.f32 %v3123, %v1746
      %v3125 = vadd.f32 %v3124, %v1774
      %v3126 = vadd.f32 %v3125, %v1802
      %v3127 = vadd.f32 %v3126, %v1830
      %v3128 = vadd.f32 %v3127, %v1858
      %v3129 = vadd.f32 %v3128, %v1886
      %v3130 = vadd.f32 %v3129, %v1914
      %v3131 = vadd.f32 %v3130, %v1942
      %v3132 = vadd.f32 %v3131, %v1970
      %v3133 = vadd.f32 %v3132, %v1998
      %v3134 = vadd.f32 %v3133, %v2026
      %v3135 = vadd.f32 %v3134, %v2054
      %v3136 = vadd.f32 %v3135, %v2082
      %v3137 = vadd.f32 %v3136, %v2110
      %v3138 = vadd.f32 %v3137, %v2138
      %v3139 = vadd.f32 %v3138, %v2166
      %v3140 = vadd.f32 %v3139, %v2194
      %v3141 = vadd.f32 %v3140, %v2222
      %v3142 = vadd.f32 %v3141, %v2250
      %v3143 = vadd.f32 %v3142, %v2278
      %v3144 = vadd.f32 %v3143, %v2306
      %v3145 = vadd.f32 %v1445, %v1473
      %v3146 = vadd.f32 %v3145, %v1501
      %v3147 = vadd.f32 %v3146, %v1529
      %v3148 = vadd.f32 %v3147, %v1557
      %v3149 = vadd.f32 %v3148, %v1585
      %v3150 = vadd.f32 %v3149, %v1613
      %v3151 = vadd.f32 %v3150, %v1641
      %v3152 = vadd.f32 %v3151, %v1669
      %v3153 = vadd.f32 %v3152, %v1697
      %v3154 = vadd.f32 %v3153, %v1725
      %v3155 = vadd.f32 %v3154, %v1753
      %v3156 = vadd.f32 %v3155, %v1781
      %v3157 = vadd.f32 %v3156, %v1809
      %v3158 = vadd.f32 %v3157, %v1837
      %v3159 = vadd.f32 %v3158, %v1865
      %v3160 = vadd.f32 %v3159, %v1893
      %v3161 = vadd.f32 %v3160, %v1921
      %v3162 = vadd.f32 %v3161, %v1949
      %v3163 = vadd.f32 %v3162, %v1977
      %v3164 = vadd.f32 %v3163, %v2005
      %v3165 = vadd.f32 %v3164, %v2033
      %v3166 = vadd.f32 %v3165, %v2061
      %v3167 = vadd.f32 %v3166, %v2089
      %v3168 = vadd.f32 %v3167, %v2117
      %v3169 = vadd.f32 %v3168, %v2145
      %v3170 = vadd.f32 %v3169, %v2173
      %v3171 = vadd.f32 %v3170, %v2201
      %v3172 = vadd.f32 %v3171, %v2229
      %v3173 = vadd.f32 %v3172, %v2257
      %v3174 = vadd.f32 %v3173, %v2285
      %v3175 = vadd.f32 %v3174, %v2313
      %v3176 = vadd.f32 %v3048, %v3082
      %v3177 = vadd.f32 %v3049, %v3113
      %v3178 = vadd.f32 %v3050, %v3144
      %v3179 = vadd.f32 %v3051, %v3175
      %3180 = vst [vmem:[%s314] sm:$0xff] %v3176
      %3181 = vst [vmem:[%s314 + $0x8] sm:$0xff] %v3177
      %3182 = vst [vmem:[%s314 + $0x10] sm:$0xff] %v3178
      %3183 = vst [vmem:[%s314 + $0x18] sm:$0xff] %v3179
      %p3184 = scmp.lt.s32.totalorder %s21, 1
      %s3185 = scalar_select %p3184, %s21, 1
      %s3186 = smul.addr %s3185, 4
      %s3187 = smul.addr %s3186, 8
      %s3188 = scalar_lea.vmem %s4, %s3187
      %p3189 = scmp.lt.s32.totalorder %s21, 1
      %s3190 = scalar_select %p3189, %s21, 1
      %s3191 = smul.addr %s3190, 4
      %s3192 = smul.addr %s3191, 8
      %s3193 = scalar_lea.vmem %s5, %s3192
      // Predicated region
      $region41: #{jvp__.3} parent=35 // pred_check
        %p3194 = pneg %p151
      $region42: #{jvp__.3} parent=35 // pred_check_branch
        %3196 = sbr.rel (%p3194) target = $region44
      $region43: #{jvp__.3} parent=35 // pred_region
        _
      $region44: #{jvp__.3} parent=35 // pred_fallthru
        _
      // Predicated region
      $region45: #{jvp__.3} parent=35 // pred_check
        %p3197 = pneg %p177
      $region46: #{jvp__.3} parent=35 // pred_check_branch
        %3199 = sbr.rel (%p3197) target = $region48
      $region47: #{jvp__.3} parent=35 // pred_region
        _
      $region48: #{jvp__.3} parent=35 // pred_fallthru
        _
    $region36: #{jvp__.3} parent=5 // pred_fallthru
      _
    %p3200 = scmp.le.s32.totalorder 2, %s12
    // Predicated region
    $region49: #{jvp__.3} parent=5 // pred_check
      %p3201 = pneg %p3200
    $region50: #{jvp__.3} parent=5 // pred_check_branch
      %3203 = sbr.rel (%p3201) target = $region52
    $region51: #{jvp__.3} parent=5 // pred_region
      %s3204 = ssub.s32 %s12, 2
      // Predicated region
      $region53: #{jvp__.3} parent=51 // pred_check
        %p3205 = pneg %p157
      $region54: #{jvp__.3} parent=51 // pred_check_branch
        %3207 = sbr.rel (%p3205) target = $region56
      $region55: #{jvp__.3} parent=51 // pred_region
        %p3208 = scmp.lt.s32.totalorder %s23, 1
        %s3209 = scalar_select %p3208, %s23, 1
        %s3210 = smul.addr %s3209, 4
        %s3211 = smul.addr %s3210, 8
        %s3212 = scalar_lea.vmem %s4, %s3211
      $region56: #{jvp__.3} parent=51 // pred_fallthru
        _
      // Predicated region
      $region57: #{jvp__.3} parent=51 // pred_check
        %p3213 = pneg %p183
      $region58: #{jvp__.3} parent=51 // pred_check_branch
        %3215 = sbr.rel (%p3213) target = $region60
      $region59: #{jvp__.3} parent=51 // pred_region
        %p3216 = scmp.lt.s32.totalorder %s23, 1
        %s3217 = scalar_select %p3216, %s23, 1
        %s3218 = smul.addr %s3217, 4
        %s3219 = smul.addr %s3218, 8
        %s3220 = scalar_lea.vmem %s5, %s3219
      $region60: #{jvp__.3} parent=51 // pred_fallthru
        _
    $region52: #{jvp__.3} parent=5 // pred_fallthru
      _
  $region6: #{jvp__.3} parent=0 // loop_footer
    %s16 = sadd.s32 1, %s12
  $region7: #{jvp__.3} parent=0 // loop_footer_branch
    %11 = sbr.rel target = $region3
  $region8: #{jvp__.3} parent=0 // loop_exit
    _

</llo_original>
